<compile_context>
chip_gen: v5e
topology: v5e:2x2
jax: 0.10.0
libtpu: 0.0.40
codegen_flags: <defaults>
</compile_context>

<pallas_src>
import math

import jax
import jax.numpy as jnp
from jax.experimental import pallas as pl
from jax.experimental.pallas import tpu as pltpu

LN_EPS = 1e-5
NEG_INF = -1e20


# ----------------------------------------------------------------------------
# In-kernel helpers (traced inside the Pallas kernels)
# ----------------------------------------------------------------------------

def _layer_norm(x, g, b):
    mu = jnp.mean(x, axis=-1, keepdims=True)
    var = jnp.mean(jnp.square(x - mu), axis=-1, keepdims=True)
    return (x - mu) * jax.lax.rsqrt(var + LN_EPS) * g + b


def _attend(q, k, v, bias, wo_ref, bo, heads, head_dim):
    """Per-head attention with the output projection folded into the head loop.

    q: (Lq, E) f32 (the 1/sqrt(E) score scale is already folded into Wq),
    k/v: (Lk, E) f32, bias broadcastable to (Lq, Lk), wo_ref: (H, D, E) bf16.
    Each head contributes softmax(q_h k_h^T + bias) v_h @ Wo[h] straight into
    the (Lq, E) accumulator — no concatenate, no (Lq, E) attn intermediate.
    """
    out = None
    for h in range(heads):
        sl = slice(h * head_dim, (h + 1) * head_dim)
        qh = q[:, sl].astype(jnp.bfloat16)
        kh = k[:, sl].astype(jnp.bfloat16)
        vh = v[:, sl].astype(jnp.bfloat16)
        s = jax.lax.dot_general(qh, kh, (((1,), (1,)), ((), ())),
                                preferred_element_type=jnp.float32)   # (Lq, Lk)
        s = s + bias
        s = s - jnp.max(s, axis=-1, keepdims=True)
        p = jnp.exp(s)
        p = p * pl.reciprocal(jnp.sum(p, axis=-1, keepdims=True), approx=True)
        ctx = jnp.dot(p.astype(jnp.bfloat16), vh,
                      preferred_element_type=jnp.float32)             # (Lq, D)
        contrib = jnp.dot(ctx.astype(jnp.bfloat16), wo_ref[h],
                          preferred_element_type=jnp.float32)         # (Lq, E)
        out = contrib if out is None else out + contrib
    return out + bo


def _ffn(x, w1_ref, b1, w2_ref, b2):
    h1 = jnp.dot(x.astype(jnp.bfloat16), w1_ref[...],
                 preferred_element_type=jnp.float32) + b1
    h1 = jnp.maximum(h1, 0.0)
    return jnp.dot(h1.astype(jnp.bfloat16), w2_ref[...],
                   preferred_element_type=jnp.float32) + b2


# ----------------------------------------------------------------------------
# Fused Pallas layer kernels
# ----------------------------------------------------------------------------

def encoder_layer(x, keep, p, *, heads):
    """One fused pallas_call per encoder layer: self-attn + LN + FF + LN.

    x: (N, L, E) f32; keep: (N, 1, L) f32 with 0.0 => masked key.
    """
    N, L, E = x.shape
    D = E // heads
    F = p["W1"].shape[1]
    a = p["attn"]

    def kernel(x_ref, keep_ref, wqkv_ref, wo_ref, bo_ref, g1_ref, b1_ref,
               w1_ref, bff1_ref, w2_ref, bff2_ref, g2_ref, b2_ref, o_ref):
        xb = x_ref[0]                                               # (L, E) f32
        # Fused block-diagonal per-head Q/K/V projection (single MXU pass).
        qkv = jnp.dot(xb.astype(jnp.bfloat16), wqkv_ref[...],
                      preferred_element_type=jnp.float32)           # (L, 3E)
        # Additive key-padding bias built in-kernel (no (N*H,Lq,Lk) HBM mask).
        bias = jnp.where(keep_ref[0] == 0.0, jnp.float32(NEG_INF),
                         jnp.float32(0.0))                          # (1, L)
        attn = _attend(qkv[:, :E], qkv[:, E:2 * E], qkv[:, 2 * E:], bias,
                       wo_ref, bo_ref[...], heads, D)
        h = _layer_norm(attn + xb, g1_ref[...], b1_ref[...])
        ff = _ffn(h, w1_ref, bff1_ref[...], w2_ref, bff2_ref[...])
        o_ref[0] = _layer_norm(ff + h, g2_ref[...], b2_ref[...]).astype(o_ref.dtype)

    rep2 = lambda shape: pl.BlockSpec(shape, lambda n: (0, 0))
    rep3 = lambda shape: pl.BlockSpec(shape, lambda n: (0, 0, 0))

    return pl.pallas_call(
        kernel,
        out_shape=jax.ShapeDtypeStruct((N, L, E), x.dtype),
        grid=(N,),
        in_specs=[
            pl.BlockSpec((1, L, E), lambda n: (n, 0, 0)),
            pl.BlockSpec((1, 1, L), lambda n: (n, 0, 0)),
            rep2((E, 3 * E)), rep3((heads, D, E)), rep2((1, E)),
            rep2((1, E)), rep2((1, E)),
            rep2((E, F)), rep2((1, F)), rep2((F, E)), rep2((1, E)),
            rep2((1, E)), rep2((1, E)),
        ],
        out_specs=pl.BlockSpec((1, L, E), lambda n: (n, 0, 0)),
        compiler_params=pltpu.CompilerParams(dimension_semantics=("parallel",)),
    )(x, keep, a["Wqkv"], a["Wo"], a["bo"], p["g1"], p["b1"],
      p["W1"], p["bff1"], p["W2"], p["bff2"], p["g2"], p["b2"])


def decoder_layer(y, enc_out, src_keep, p, *, heads):
    """One fused pallas_call per decoder layer:
    causal self-attn + LN -> cross-attn (enc_out K/V, src mask) + LN -> FF + LN.
    """
    N, Lt, E = y.shape
    Ls = enc_out.shape[1]
    D = E // heads
    F = p["W1"].shape[1]
    sa = p["self_attn"]
    ca = p["cross_attn"]

    def kernel(y_ref, enc_ref, keep_ref,
               wqkv_s_ref, wo_s_ref, bo_s_ref, gs_ref, bs_ref,
               wq_c_ref, wkv_c_ref, wo_c_ref, bo_c_ref, gc_ref, bc_ref,
               w1_ref, bff1_ref, w2_ref, bff2_ref, g2_ref, b2_ref, o_ref):
        yb = y_ref[0]                                               # (Lt, E)
        eb = enc_ref[0]                                             # (Ls, E)

        # --- causal self-attention + residual + LayerNorm -------------------
        qkv = jnp.dot(yb.astype(jnp.bfloat16), wqkv_s_ref[...],
                      preferred_element_type=jnp.float32)           # (Lt, 3E)
        row = jax.lax.broadcasted_iota(jnp.int32, (Lt, Lt), 0)
        col = jax.lax.broadcasted_iota(jnp.int32, (Lt, Lt), 1)
        causal = jnp.where(col > row, jnp.float32(NEG_INF), jnp.float32(0.0))
        satt = _attend(qkv[:, :E], qkv[:, E:2 * E], qkv[:, 2 * E:], causal,
                       wo_s_ref, bo_s_ref[...], heads, D)
        query = _layer_norm(satt + yb, gs_ref[...], bs_ref[...])

        # --- cross-attention (keys/values from enc_out, src padding mask) ---
        q = jnp.dot(query.astype(jnp.bfloat16), wq_c_ref[...],
                    preferred_element_type=jnp.float32)             # (Lt, E)
        kv = jnp.dot(eb.astype(jnp.bfloat16), wkv_c_ref[...],
                     preferred_element_type=jnp.float32)            # (Ls, 2E)
        bias = jnp.where(keep_ref[0] == 0.0, jnp.float32(NEG_INF),
                         jnp.float32(0.0))                          # (1, Ls)
        catt = _attend(q, kv[:, :E], kv[:, E:], bias,
                       wo_c_ref, bo_c_ref[...], heads, D)
        h = _layer_norm(catt + query, gc_ref[...], bc_ref[...])

        # --- feed-forward + residual + LayerNorm -----------------------------
        ff = _ffn(h, w1_ref, bff1_ref[...], w2_ref, bff2_ref[...])
        o_ref[0] = _layer_norm(ff + h, g2_ref[...], b2_ref[...]).astype(o_ref.dtype)

    rep2 = lambda shape: pl.BlockSpec(shape, lambda n: (0, 0))
    rep3 = lambda shape: pl.BlockSpec(shape, lambda n: (0, 0, 0))

    return pl.pallas_call(
        kernel,
        out_shape=jax.ShapeDtypeStruct((N, Lt, E), y.dtype),
        grid=(N,),
        in_specs=[
            pl.BlockSpec((1, Lt, E), lambda n: (n, 0, 0)),
            pl.BlockSpec((1, Ls, E), lambda n: (n, 0, 0)),
            pl.BlockSpec((1, 1, Ls), lambda n: (n, 0, 0)),
            rep2((E, 3 * E)), rep3((heads, D, E)), rep2((1, E)),
            rep2((1, E)), rep2((1, E)),
            rep2((E, E)), rep2((E, 2 * E)), rep3((heads, D, E)), rep2((1, E)),
            rep2((1, E)), rep2((1, E)),
            rep2((E, F)), rep2((1, F)), rep2((F, E)), rep2((1, E)),
            rep2((1, E)), rep2((1, E)),
        ],
        out_specs=pl.BlockSpec((1, Lt, E), lambda n: (n, 0, 0)),
        compiler_params=pltpu.CompilerParams(dimension_semantics=("parallel",)),
    )(y, enc_out, src_keep,
      sa["Wqkv"], sa["Wo"], sa["bo"], p["g_sa"], p["b_sa"],
      ca["Wq"], ca["Wkv"], ca["Wo"], ca["bo"], p["g_ca"], p["b_ca"],
      p["W1"], p["bff1"], p["W2"], p["bff2"], p["g2"], p["b2"])


def vocab_head(x2d, w_bf16, b_row):
    """Row-tiled Linear(E, Vp); weight/bias already padded lane-dense at init."""
    M, K = x2d.shape
    Vp = w_bf16.shape[1]
    TM = M
    for cand in (256, 128, 64, 32, 16, 8):
        if M % cand == 0:
            TM = cand
            break
    # TODO(synk): at real vocab sizes add a second grid axis over Vp (TN~1024-2048)
    # so the (E, V) weight streams through VMEM instead of loading whole.

    def kernel(x_ref, w_ref, b_ref, o_ref):
        o_ref[...] = (jnp.dot(x_ref[...].astype(jnp.bfloat16), w_ref[...],
                              preferred_element_type=jnp.float32)
                      + b_ref[...]).astype(o_ref.dtype)

    return pl.pallas_call(
        kernel,
        out_shape=jax.ShapeDtypeStruct((M, Vp), jnp.float32),
        grid=(M // TM,),
        in_specs=[pl.BlockSpec((TM, K), lambda i: (i, 0)),
                  pl.BlockSpec((K, Vp), lambda i: (0, 0)),
                  pl.BlockSpec((1, Vp), lambda i: (0, 0))],
        out_specs=pl.BlockSpec((TM, Vp), lambda i: (i, 0)),
        compiler_params=pltpu.CompilerParams(dimension_semantics=("parallel",)),
    )(x2d, w_bf16, b_row)


# ----------------------------------------------------------------------------
# Model glue (plain JAX orchestration around the fused Pallas kernels)
# ----------------------------------------------------------------------------

def transformer_forward(params, src, trg, src_pad_idx, embed_size, heads, trg_vocab):
    N, Ls = src.shape
    _, Lt = trg.shape

    # Per-batch key keep vectors (0.0 => masked). Causal bias is built in-kernel.
    # Reference: trg mask is causal-only (no trg padding mask) — kept faithful.
    src_keep = (src != src_pad_idx).astype(jnp.float32).reshape(N, 1, Ls)

    # TODO(synk): nn.Embedding token/position gathers remain plain-JAX glue.
    x = params["enc"]["tok_emb"][src] + params["enc"]["pos_emb"][:Ls][None]
    for layer in params["enc"]["layers"]:
        x = encoder_layer(x, src_keep, layer, heads=heads)
    enc_out = x

    y = params["dec"]["tok_emb"][trg] + params["dec"]["pos_emb"][:Lt][None]
    for layer in params["dec"]["layers"]:
        y = decoder_layer(y, enc_out, src_keep, layer, heads=heads)

    logits = vocab_head(y.reshape(N * Lt, embed_size),
                        params["dec"]["Wout"], params["dec"]["bout"])
    return logits[:, :trg_vocab].reshape(N, Lt, trg_vocab)


# ----------------------------------------------------------------------------
# Deterministic parameter init (weights bf16 in HBM, biases/LN params f32)
# ----------------------------------------------------------------------------

def _init_params(key, src_vocab, trg_vocab, embed_size, num_layers,
                 forward_expansion, heads, max_len):
    E = embed_size
    D = E // heads
    F = forward_expansion * E
    # Reference divides scores by sqrt(embed_size) (not head_dim) — folded into Wq.
    scale = 1.0 / math.sqrt(E)
    keys = iter(jax.random.split(key, 4096))
    eye_h = jnp.eye(heads, dtype=jnp.float32)

    def mat(shape, s=0.02):
        return (s * jax.random.normal(next(keys), shape)).astype(jnp.float32)

    def bdiag(w):   # same (D, D) Linear applied to every head == kron(I_H, w)
        return jnp.kron(eye_h, w)

    def self_attn_params():
        Wq, Wk, Wv, Wo = mat((D, D)), mat((D, D)), mat((D, D)), mat((E, E))
        wqkv = jnp.concatenate([bdiag(Wq) * scale, bdiag(Wk), bdiag(Wv)], axis=1)
        return {"Wqkv": wqkv.astype(jnp.bfloat16),                   # (E, 3E)
                "Wo": Wo.reshape(heads, D, E).astype(jnp.bfloat16),  # (H, D, E)
                "bo": jnp.zeros((1, E), jnp.float32)}

    def cross_attn_params():
        Wq, Wk, Wv, Wo = mat((D, D)), mat((D, D)), mat((D, D)), mat((E, E))
        return {"Wq": (bdiag(Wq) * scale).astype(jnp.bfloat16),      # (E, E)
                "Wkv": jnp.concatenate([bdiag(Wk), bdiag(Wv)],
                                       axis=1).astype(jnp.bfloat16),  # (E, 2E)
                "Wo": Wo.reshape(heads, D, E).astype(jnp.bfloat16),
                "bo": jnp.zeros((1, E), jnp.float32)}

    def ff_and_norm2():
        return {"W1": mat((E, F)).astype(jnp.bfloat16),
                "bff1": jnp.zeros((1, F), jnp.float32),
                "W2": mat((F, E)).astype(jnp.bfloat16),
                "bff2": jnp.zeros((1, E), jnp.float32),
                "g2": jnp.ones((1, E), jnp.float32),
                "b2": jnp.zeros((1, E), jnp.float32)}

    def enc_layer_params():
        d = {"attn": self_attn_params(),
             "g1": jnp.ones((1, E), jnp.float32),
             "b1": jnp.zeros((1, E), jnp.float32)}
        d.update(ff_and_norm2())
        return d

    def dec_layer_params():
        d = {"self_attn": self_attn_params(),
             "g_sa": jnp.ones((1, E), jnp.float32),
             "b_sa": jnp.zeros((1, E), jnp.float32),
             "cross_attn": cross_attn_params(),
             "g_ca": jnp.ones((1, E), jnp.float32),
             "b_ca": jnp.zeros((1, E), jnp.float32)}
        d.update(ff_and_norm2())
        return d

    # Pad the vocab head to a lane-dense multiple of 128 ONCE at init.
    Vp = ((trg_vocab + 127) // 128) * 128
    Wout = jnp.pad(mat((E, trg_vocab)), ((0, 0), (0, Vp - trg_vocab)))
    bout = jnp.zeros((1, Vp), jnp.float32)

    return {
        "enc": {"tok_emb": mat((src_vocab, E)),
                "pos_emb": mat((max_len, E)),
                "layers": [enc_layer_params() for _ in range(num_layers)]},
        "dec": {"tok_emb": mat((trg_vocab, E)),
                "pos_emb": mat((max_len, E)),
                "layers": [dec_layer_params() for _ in range(num_layers)],
                "Wout": Wout.astype(jnp.bfloat16),
                "bout": bout},
    }


# ----------------------------------------------------------------------------
# Driver
# ----------------------------------------------------------------------------

if __name__ == "__main__":
    SRC_VOCAB = 50
    TRG_VOCAB = 40
    SRC_PAD_IDX = 0
    TRG_PAD_IDX = 0            # unused: reference trg mask is causal-only
    EMBED_SIZE = 32
    NUM_LAYERS = 2
    FORWARD_EXPANSION = 4
    HEADS = 4
    MAX_LEN = 64
    N, LS, LT = 2, 8, 8

    root = jax.random.PRNGKey(0)
    k_param, k_src, k_trg = jax.random.split(root, 3)

    params = _init_params(k_param, SRC_VOCAB, TRG_VOCAB, EMBED_SIZE, NUM_LAYERS,
                          FORWARD_EXPANSION, HEADS, MAX_LEN)

    src = jax.random.randint(k_src, (N, LS), 1, SRC_VOCAB, dtype=jnp.int32)
    trg = jax.random.randint(k_trg, (N, LT), 1, TRG_VOCAB, dtype=jnp.int32)
    # add some padding tokens in src so the src mask is exercised
    src = src.at[1, LS - 2:].set(SRC_PAD_IDX)

    fwd = jax.jit(lambda p, s, t: transformer_forward(
        p, s, t, SRC_PAD_IDX, EMBED_SIZE, HEADS, TRG_VOCAB))
    out = jax.block_until_ready(fwd(params, src, trg))

    assert out.shape == (N, LT, TRG_VOCAB), out.shape
    assert bool(jnp.all(jnp.isfinite(out)))
    print("KERNEL_OK")
</pallas_src>

<mosaic_0001>
module attributes {stable_mosaic.version = 11 : i64} {
  func.func @kernel(%arg0: i32, %arg1: memref<16x32xf32, #tpu.memory_space<vmem>>, %arg2: memref<32x128xbf16, #tpu.memory_space<vmem>>, %arg3: memref<1x128xf32, #tpu.memory_space<vmem>>, %arg4: memref<16x128xf32, #tpu.memory_space<vmem>>) attributes {dimension_semantics = [#tpu.dimension_semantics<parallel>], iteration_bounds = array<i64: 1>, scalar_prefetch = 0 : i64, scratch_operands = 0 : i64, tpu.core_type = #tpu.core_type<tc>, window_params = [{transform_indices = @transform_0, window_bounds = array<i64: 16, 32>}, {pipeline_mode = #tpu.pipeline_mode<synchronous>, transform_indices = @transform_1, window_bounds = array<i64: 32, 128>}, {pipeline_mode = #tpu.pipeline_mode<synchronous>, transform_indices = @transform_2, window_bounds = array<i64: 1, 128>}, {transform_indices = @transform_3, window_bounds = array<i64: 16, 128>}]} {
    %c0 = arith.constant 0 : index
    %c0_0 = arith.constant 0 : index
    %0 = vector.load %arg1[%c0, %c0_0] : memref<16x32xf32, #tpu.memory_space<vmem>>, vector<16x32xf32>
    %1 = arith.truncf %0 : vector<16x32xf32> to vector<16x32xbf16>
    %c0_1 = arith.constant 0 : index
    %c0_2 = arith.constant 0 : index
    %2 = vector.load %arg2[%c0_1, %c0_2] : memref<32x128xbf16, #tpu.memory_space<vmem>>, vector<32x128xbf16>
    %cst = arith.constant dense<0.000000e+00> : vector<16x128xf32>
    %3 = tpu.matmul %1, %2, %cst {dimension_numbers = #tpu.dot_dimension_numbers<[1], [0], [0], [1], [0, 0, 1, 1], [], []>} : vector<16x32xbf16>, vector<32x128xbf16>, vector<16x128xf32> -> vector<16x128xf32>
    %c0_3 = arith.constant 0 : index
    %c0_4 = arith.constant 0 : index
    %4 = vector.load %arg3[%c0_3, %c0_4] : memref<1x128xf32, #tpu.memory_space<vmem>>, vector<1x128xf32>
    %5 = vector.broadcast %4 : vector<1x128xf32> to vector<16x128xf32>
    %6 = arith.addf %3, %5 : vector<16x128xf32>
    %c0_5 = arith.constant 0 : index
    %c0_6 = arith.constant 0 : index
    %7 = vector.load %arg4[%c0_5, %c0_6] : memref<16x128xf32, #tpu.memory_space<vmem>>, vector<16x128xf32>
    tpu.vector_store %arg4[%c0_5, %c0_6], %6 {strides = array<i32>} : memref<16x128xf32, #tpu.memory_space<vmem>>, vector<16x128xf32>,
    return
  }
  func.func @transform_0(%arg0: i32) -> (i32, i32) {
    %c0_i32 = arith.constant 0 : i32
    %c0_i32_0 = arith.constant 0 : i32
    return %arg0, %c0_i32 : i32, i32
  }
  func.func @transform_1(%arg0: i32) -> (i32, i32) {
    %c0_i32 = arith.constant 0 : i32
    %c0_i32_0 = arith.constant 0 : i32
    %c0_i32_1 = arith.constant 0 : i32
    return %c0_i32, %c0_i32_0 : i32, i32
  }
  func.func @transform_2(%arg0: i32) -> (i32, i32) {
    %c0_i32 = arith.constant 0 : i32
    %c0_i32_0 = arith.constant 0 : i32
    %c0_i32_1 = arith.constant 0 : i32
    return %c0_i32, %c0_i32_0 : i32, i32
  }
  func.func @transform_3(%arg0: i32) -> (i32, i32) {
    %c0_i32 = arith.constant 0 : i32
    %c0_i32_0 = arith.constant 0 : i32
    return %arg0, %c0_i32 : i32, i32
  }
}

module attributes {stable_mosaic.version = 11 : i64} {
  func.func @kernel(%arg0: i32, %arg1: memref<1x8x32xf32, #tpu.memory_space<vmem>>, %arg2: memref<1x1x8xf32, #tpu.memory_space<vmem>>, %arg3: memref<32x96xbf16, #tpu.memory_space<vmem>>, %arg4: memref<4x8x32xbf16, #tpu.memory_space<vmem>>, %arg5: memref<1x32xf32, #tpu.memory_space<vmem>>, %arg6: memref<1x32xf32, #tpu.memory_space<vmem>>, %arg7: memref<1x32xf32, #tpu.memory_space<vmem>>, %arg8: memref<32x128xbf16, #tpu.memory_space<vmem>>, %arg9: memref<1x128xf32, #tpu.memory_space<vmem>>, %arg10: memref<128x32xbf16, #tpu.memory_space<vmem>>, %arg11: memref<1x32xf32, #tpu.memory_space<vmem>>, %arg12: memref<1x32xf32, #tpu.memory_space<vmem>>, %arg13: memref<1x32xf32, #tpu.memory_space<vmem>>, %arg14: memref<1x8x32xf32, #tpu.memory_space<vmem>>) attributes {dimension_semantics = [#tpu.dimension_semantics<parallel>], iteration_bounds = array<i64: 2>, scalar_prefetch = 0 : i64, scratch_operands = 0 : i64, tpu.core_type = #tpu.core_type<tc>, window_params = [{transform_indices = @transform_0, window_bounds = array<i64: 1, 8, 32>}, {transform_indices = @transform_1, window_bounds = array<i64: 1, 1, 8>}, {pipeline_mode = #tpu.pipeline_mode<synchronous>, transform_indices = @transform_2, window_bounds = array<i64: 32, 96>}, {pipeline_mode = #tpu.pipeline_mode<synchronous>, transform_indices = @transform_3, window_bounds = array<i64: 4, 8, 32>}, {pipeline_mode = #tpu.pipeline_mode<synchronous>, transform_indices = @transform_4, window_bounds = array<i64: 1, 32>}, {pipeline_mode = #tpu.pipeline_mode<synchronous>, transform_indices = @transform_5, window_bounds = array<i64: 1, 32>}, {pipeline_mode = #tpu.pipeline_mode<synchronous>, transform_indices = @transform_6, window_bounds = array<i64: 1, 32>}, {pipeline_mode = #tpu.pipeline_mode<synchronous>, transform_indices = @transform_7, window_bounds = array<i64: 32, 128>}, {pipeline_mode = #tpu.pipeline_mode<synchronous>, transform_indices = @transform_8, window_bounds = array<i64: 1, 128>}, {pipeline_mode = #tpu.pipeline_mode<synchronous>, transform_indices = @transform_9, window_bounds = array<i64: 128, 32>}, {pipeline_mode = #tpu.pipeline_mode<synchronous>, transform_indices = @transform_10, window_bounds = array<i64: 1, 32>}, {pipeline_mode = #tpu.pipeline_mode<synchronous>, transform_indices = @transform_11, window_bounds = array<i64: 1, 32>}, {pipeline_mode = #tpu.pipeline_mode<synchronous>, transform_indices = @transform_12, window_bounds = array<i64: 1, 32>}, {transform_indices = @transform_13, window_bounds = array<i64: 1, 8, 32>}]} {
    %c0 = arith.constant 0 : index
    %c0_0 = arith.constant 0 : index
    %c0_1 = arith.constant 0 : index
    %0 = vector.load %arg1[%c0, %c0_0, %c0_1] : memref<1x8x32xf32, #tpu.memory_space<vmem>>, vector<1x8x32xf32>
    %1 = vector.shape_cast %0 : vector<1x8x32xf32> to vector<8x32xf32>
    %2 = arith.truncf %1 : vector<8x32xf32> to vector<8x32xbf16>
    %c0_2 = arith.constant 0 : index
    %c0_3 = arith.constant 0 : index
    %3 = vector.load %arg3[%c0_2, %c0_3] : memref<32x96xbf16, #tpu.memory_space<vmem>>, vector<32x96xbf16>
    %cst = arith.constant dense<0.000000e+00> : vector<8x96xf32>
    %4 = tpu.matmul %2, %3, %cst {dimension_numbers = #tpu.dot_dimension_numbers<[1], [0], [0], [1], [0, 0, 1, 1], [], []>} : vector<8x32xbf16>, vector<32x96xbf16>, vector<8x96xf32> -> vector<8x96xf32>
    %c0_4 = arith.constant 0 : index
    %c0_5 = arith.constant 0 : index
    %c0_6 = arith.constant 0 : index
    %5 = vector.load %arg2[%c0_4, %c0_5, %c0_6] : memref<1x1x8xf32, #tpu.memory_space<vmem>>, vector<1x1x8xf32>
    %6 = vector.shape_cast %5 : vector<1x1x8xf32> to vector<1x8xf32>
    %cst_7 = arith.constant 0.000000e+00 : f32
    %7 = vector.broadcast %cst_7 : f32 to vector<1x8xf32>
    %8 = arith.cmpf oeq, %6, %7 : vector<1x8xf32>
    %cst_8 = arith.constant -1.000000e+20 : f32
    %cst_9 = arith.constant 0.000000e+00 : f32
    %9 = vector.broadcast %cst_8 : f32 to vector<1x8xf32>
    %10 = vector.broadcast %cst_9 : f32 to vector<1x8xf32>
    %11 = arith.select %8, %9, %10 : vector<1x8xi1>, vector<1x8xf32>
    %12 = vector.extract_strided_slice %4 {offsets = [0, 0], sizes = [8, 32], strides = [1, 1]} : vector<8x96xf32> to vector<8x32xf32>
    %13 = vector.extract_strided_slice %4 {offsets = [0, 32], sizes = [8, 32], strides = [1, 1]} : vector<8x96xf32> to vector<8x32xf32>
    %14 = vector.extract_strided_slice %4 {offsets = [0, 64], sizes = [8, 32], strides = [1, 1]} : vector<8x96xf32> to vector<8x32xf32>
    %c0_10 = arith.constant 0 : index
    %c0_11 = arith.constant 0 : index
    %15 = vector.load %arg5[%c0_10, %c0_11] : memref<1x32xf32, #tpu.memory_space<vmem>>, vector<1x32xf32>
    %16 = vector.extract_strided_slice %12 {offsets = [0, 0], sizes = [8, 8], strides = [1, 1]} : vector<8x32xf32> to vector<8x8xf32>
    %17 = arith.truncf %16 : vector<8x8xf32> to vector<8x8xbf16>
    %18 = vector.extract_strided_slice %13 {offsets = [0, 0], sizes = [8, 8], strides = [1, 1]} : vector<8x32xf32> to vector<8x8xf32>
    %19 = arith.truncf %18 : vector<8x8xf32> to vector<8x8xbf16>
    %20 = vector.extract_strided_slice %14 {offsets = [0, 0], sizes = [8, 8], strides = [1, 1]} : vector<8x32xf32> to vector<8x8xf32>
    %21 = arith.truncf %20 : vector<8x8xf32> to vector<8x8xbf16>
    %cst_12 = arith.constant dense<0.000000e+00> : vector<8x8xf32>
    %22 = tpu.matmul %17, %19, %cst_12 {dimension_numbers = #tpu.dot_dimension_numbers<[1], [1], [0], [0], [0, 0, 1, 0], [], []>} : vector<8x8xbf16>, vector<8x8xbf16>, vector<8x8xf32> -> vector<8x8xf32>
    %23 = vector.broadcast %11 : vector<1x8xf32> to vector<8x8xf32>
    %24 = arith.addf %22, %23 : vector<8x8xf32>
    %cst_13 = arith.constant dense<0xFF800000> : vector<8xf32>
    %25 = vector.multi_reduction <maximumf>, %24, %cst_13 [1] : vector<8x8xf32> to vector<8xf32>
    %26 = vector.shape_cast %25 : vector<8xf32> to vector<8x1xf32>
    %27 = vector.broadcast %26 : vector<8x1xf32> to vector<8x8xf32>
    %28 = arith.subf %24, %27 : vector<8x8xf32>
    %29 = math.exp %28 : vector<8x8xf32>
    %cst_14 = arith.constant dense<0.000000e+00> : vector<8xf32>
    %30 = vector.multi_reduction <add>, %29, %cst_14 [1] : vector<8x8xf32> to vector<8xf32>
    %31 = vector.shape_cast %30 : vector<8xf32> to vector<8x1xf32>
    %32 = tpu.reciprocal %31 {approx = true} : vector<8x1xf32> -> vector<8x1xf32>
    %33 = vector.broadcast %32 : vector<8x1xf32> to vector<8x8xf32>
    %34 = arith.mulf %29, %33 : vector<8x8xf32>
    %35 = arith.truncf %34 : vector<8x8xf32> to vector<8x8xbf16>
    %cst_15 = arith.constant dense<0.000000e+00> : vector<8x8xf32>
    %36 = tpu.matmul %35, %21, %cst_15 {dimension_numbers = #tpu.dot_dimension_numbers<[1], [0], [0], [1], [0, 0, 1, 1], [], []>} : vector<8x8xbf16>, vector<8x8xbf16>, vector<8x8xf32> -> vector<8x8xf32>
    %37 = arith.truncf %36 : vector<8x8xf32> to vector<8x8xbf16>
    %c0_16 = arith.constant 0 : index
    %c0_17 = arith.constant 0 : index
    %c0_18 = arith.constant 0 : index
    %38 = vector.load %arg4[%c0_16, %c0_17, %c0_18] : memref<4x8x32xbf16, #tpu.memory_space<vmem>>, vector<1x8x32xbf16>
    %39 = vector.shape_cast %38 : vector<1x8x32xbf16> to vector<8x32xbf16>
    %cst_19 = arith.constant dense<0.000000e+00> : vector<8x32xf32>
    %40 = tpu.matmul %37, %39, %cst_19 {dimension_numbers = #tpu.dot_dimension_numbers<[1], [0], [0], [1], [0, 0, 1, 1], [], []>} : vector<8x8xbf16>, vector<8x32xbf16>, vector<8x32xf32> -> vector<8x32xf32>
    %41 = vector.extract_strided_slice %12 {offsets = [0, 8], sizes = [8, 8], strides = [1, 1]} : vector<8x32xf32> to vector<8x8xf32>
    %42 = arith.truncf %41 : vector<8x8xf32> to vector<8x8xbf16>
    %43 = vector.extract_strided_slice %13 {offsets = [0, 8], sizes = [8, 8], strides = [1, 1]} : vector<8x32xf32> to vector<8x8xf32>
    %44 = arith.truncf %43 : vector<8x8xf32> to vector<8x8xbf16>
    %45 = vector.extract_strided_slice %14 {offsets = [0, 8], sizes = [8, 8], strides = [1, 1]} : vector<8x32xf32> to vector<8x8xf32>
    %46 = arith.truncf %45 : vector<8x8xf32> to vector<8x8xbf16>
    %cst_20 = arith.constant dense<0.000000e+00> : vector<8x8xf32>
    %47 = tpu.matmul %42, %44, %cst_20 {dimension_numbers = #tpu.dot_dimension_numbers<[1], [1], [0], [0], [0, 0, 1, 0], [], []>} : vector<8x8xbf16>, vector<8x8xbf16>, vector<8x8xf32> -> vector<8x8xf32>
    %48 = vector.broadcast %11 : vector<1x8xf32> to vector<8x8xf32>
    %49 = arith.addf %47, %48 : vector<8x8xf32>
    %cst_21 = arith.constant dense<0xFF800000> : vector<8xf32>
    %50 = vector.multi_reduction <maximumf>, %49, %cst_21 [1] : vector<8x8xf32> to vector<8xf32>
    %51 = vector.shape_cast %50 : vector<8xf32> to vector<8x1xf32>
    %52 = vector.broadcast %51 : vector<8x1xf32> to vector<8x8xf32>
    %53 = arith.subf %49, %52 : vector<8x8xf32>
    %54 = math.exp %53 : vector<8x8xf32>
    %cst_22 = arith.constant dense<0.000000e+00> : vector<8xf32>
    %55 = vector.multi_reduction <add>, %54, %cst_22 [1] : vector<8x8xf32> to vector<8xf32>
    %56 = vector.shape_cast %55 : vector<8xf32> to vector<8x1xf32>
    %57 = tpu.reciprocal %56 {approx = true} : vector<8x1xf32> -> vector<8x1xf32>
    %58 = vector.broadcast %57 : vector<8x1xf32> to vector<8x8xf32>
    %59 = arith.mulf %54, %58 : vector<8x8xf32>
    %60 = arith.truncf %59 : vector<8x8xf32> to vector<8x8xbf16>
    %cst_23 = arith.constant dense<0.000000e+00> : vector<8x8xf32>
    %61 = tpu.matmul %60, %46, %cst_23 {dimension_numbers = #tpu.dot_dimension_numbers<[1], [0], [0], [1], [0, 0, 1, 1], [], []>} : vector<8x8xbf16>, vector<8x8xbf16>, vector<8x8xf32> -> vector<8x8xf32>
    %62 = arith.truncf %61 : vector<8x8xf32> to vector<8x8xbf16>
    %c1 = arith.constant 1 : index
    %c0_24 = arith.constant 0 : index
    %c0_25 = arith.constant 0 : index
    %63 = vector.load %arg4[%c1, %c0_24, %c0_25] : memref<4x8x32xbf16, #tpu.memory_space<vmem>>, vector<1x8x32xbf16>
    %64 = vector.shape_cast %63 : vector<1x8x32xbf16> to vector<8x32xbf16>
    %cst_26 = arith.constant dense<0.000000e+00> : vector<8x32xf32>
    %65 = tpu.matmul %62, %64, %cst_26 {dimension_numbers = #tpu.dot_dimension_numbers<[1], [0], [0], [1], [0, 0, 1, 1], [], []>} : vector<8x8xbf16>, vector<8x32xbf16>, vector<8x32xf32> -> vector<8x32xf32>
    %66 = arith.addf %40, %65 : vector<8x32xf32>
    %67 = vector.extract_strided_slice %12 {offsets = [0, 16], sizes = [8, 8], strides = [1, 1]} : vector<8x32xf32> to vector<8x8xf32>
    %68 = arith.truncf %67 : vector<8x8xf32> to vector<8x8xbf16>
    %69 = vector.extract_strided_slice %13 {offsets = [0, 16], sizes = [8, 8], strides = [1, 1]} : vector<8x32xf32> to vector<8x8xf32>
    %70 = arith.truncf %69 : vector<8x8xf32> to vector<8x8xbf16>
    %71 = vector.extract_strided_slice %14 {offsets = [0, 16], sizes = [8, 8], strides = [1, 1]} : vector<8x32xf32> to vector<8x8xf32>
    %72 = arith.truncf %71 : vector<8x8xf32> to vector<8x8xbf16>
    %cst_27 = arith.constant dense<0.000000e+00> : vector<8x8xf32>
    %73 = tpu.matmul %68, %70, %cst_27 {dimension_numbers = #tpu.dot_dimension_numbers<[1], [1], [0], [0], [0, 0, 1, 0], [], []>} : vector<8x8xbf16>, vector<8x8xbf16>, vector<8x8xf32> -> vector<8x8xf32>
    %74 = vector.broadcast %11 : vector<1x8xf32> to vector<8x8xf32>
    %75 = arith.addf %73, %74 : vector<8x8xf32>
    %cst_28 = arith.constant dense<0xFF800000> : vector<8xf32>
    %76 = vector.multi_reduction <maximumf>, %75, %cst_28 [1] : vector<8x8xf32> to vector<8xf32>
    %77 = vector.shape_cast %76 : vector<8xf32> to vector<8x1xf32>
    %78 = vector.broadcast %77 : vector<8x1xf32> to vector<8x8xf32>
    %79 = arith.subf %75, %78 : vector<8x8xf32>
    %80 = math.exp %79 : vector<8x8xf32>
    %cst_29 = arith.constant dense<0.000000e+00> : vector<8xf32>
    %81 = vector.multi_reduction <add>, %80, %cst_29 [1] : vector<8x8xf32> to vector<8xf32>
    %82 = vector.shape_cast %81 : vector<8xf32> to vector<8x1xf32>
    %83 = tpu.reciprocal %82 {approx = true} : vector<8x1xf32> -> vector<8x1xf32>
    %84 = vector.broadcast %83 : vector<8x1xf32> to vector<8x8xf32>
    %85 = arith.mulf %80, %84 : vector<8x8xf32>
    %86 = arith.truncf %85 : vector<8x8xf32> to vector<8x8xbf16>
    %cst_30 = arith.constant dense<0.000000e+00> : vector<8x8xf32>
    %87 = tpu.matmul %86, %72, %cst_30 {dimension_numbers = #tpu.dot_dimension_numbers<[1], [0], [0], [1], [0, 0, 1, 1], [], []>} : vector<8x8xbf16>, vector<8x8xbf16>, vector<8x8xf32> -> vector<8x8xf32>
    %88 = arith.truncf %87 : vector<8x8xf32> to vector<8x8xbf16>
    %c2 = arith.constant 2 : index
    %c0_31 = arith.constant 0 : index
    %c0_32 = arith.constant 0 : index
    %89 = vector.load %arg4[%c2, %c0_31, %c0_32] : memref<4x8x32xbf16, #tpu.memory_space<vmem>>, vector<1x8x32xbf16>
    %90 = vector.shape_cast %89 : vector<1x8x32xbf16> to vector<8x32xbf16>
    %cst_33 = arith.constant dense<0.000000e+00> : vector<8x32xf32>
    %91 = tpu.matmul %88, %90, %cst_33 {dimension_numbers = #tpu.dot_dimension_numbers<[1], [0], [0], [1], [0, 0, 1, 1], [], []>} : vector<8x8xbf16>, vector<8x32xbf16>, vector<8x32xf32> -> vector<8x32xf32>
    %92 = arith.addf %66, %91 : vector<8x32xf32>
    %93 = vector.extract_strided_slice %12 {offsets = [0, 24], sizes = [8, 8], strides = [1, 1]} : vector<8x32xf32> to vector<8x8xf32>
    %94 = arith.truncf %93 : vector<8x8xf32> to vector<8x8xbf16>
    %95 = vector.extract_strided_slice %13 {offsets = [0, 24], sizes = [8, 8], strides = [1, 1]} : vector<8x32xf32> to vector<8x8xf32>
    %96 = arith.truncf %95 : vector<8x8xf32> to vector<8x8xbf16>
    %97 = vector.extract_strided_slice %14 {offsets = [0, 24], sizes = [8, 8], strides = [1, 1]} : vector<8x32xf32> to vector<8x8xf32>
    %98 = arith.truncf %97 : vector<8x8xf32> to vector<8x8xbf16>
    %cst_34 = arith.constant dense<0.000000e+00> : vector<8x8xf32>
    %99 = tpu.matmul %94, %96, %cst_34 {dimension_numbers = #tpu.dot_dimension_numbers<[1], [1], [0], [0], [0, 0, 1, 0], [], []>} : vector<8x8xbf16>, vector<8x8xbf16>, vector<8x8xf32> -> vector<8x8xf32>
    %100 = vector.broadcast %11 : vector<1x8xf32> to vector<8x8xf32>
    %101 = arith.addf %99, %100 : vector<8x8xf32>
    %cst_35 = arith.constant dense<0xFF800000> : vector<8xf32>
    %102 = vector.multi_reduction <maximumf>, %101, %cst_35 [1] : vector<8x8xf32> to vector<8xf32>
    %103 = vector.shape_cast %102 : vector<8xf32> to vector<8x1xf32>
    %104 = vector.broadcast %103 : vector<8x1xf32> to vector<8x8xf32>
    %105 = arith.subf %101, %104 : vector<8x8xf32>
    %106 = math.exp %105 : vector<8x8xf32>
    %cst_36 = arith.constant dense<0.000000e+00> : vector<8xf32>
    %107 = vector.multi_reduction <add>, %106, %cst_36 [1] : vector<8x8xf32> to vector<8xf32>
    %108 = vector.shape_cast %107 : vector<8xf32> to vector<8x1xf32>
    %109 = tpu.reciprocal %108 {approx = true} : vector<8x1xf32> -> vector<8x1xf32>
    %110 = vector.broadcast %109 : vector<8x1xf32> to vector<8x8xf32>
    %111 = arith.mulf %106, %110 : vector<8x8xf32>
    %112 = arith.truncf %111 : vector<8x8xf32> to vector<8x8xbf16>
    %cst_37 = arith.constant dense<0.000000e+00> : vector<8x8xf32>
    %113 = tpu.matmul %112, %98, %cst_37 {dimension_numbers = #tpu.dot_dimension_numbers<[1], [0], [0], [1], [0, 0, 1, 1], [], []>} : vector<8x8xbf16>, vector<8x8xbf16>, vector<8x8xf32> -> vector<8x8xf32>
    %114 = arith.truncf %113 : vector<8x8xf32> to vector<8x8xbf16>
    %c3 = arith.constant 3 : index
    %c0_38 = arith.constant 0 : index
    %c0_39 = arith.constant 0 : index
    %115 = vector.load %arg4[%c3, %c0_38, %c0_39] : memref<4x8x32xbf16, #tpu.memory_space<vmem>>, vector<1x8x32xbf16>
    %116 = vector.shape_cast %115 : vector<1x8x32xbf16> to vector<8x32xbf16>
    %cst_40 = arith.constant dense<0.000000e+00> : vector<8x32xf32>
    %117 = tpu.matmul %114, %116, %cst_40 {dimension_numbers = #tpu.dot_dimension_numbers<[1], [0], [0], [1], [0, 0, 1, 1], [], []>} : vector<8x8xbf16>, vector<8x32xbf16>, vector<8x32xf32> -> vector<8x32xf32>
    %118 = arith.addf %92, %117 : vector<8x32xf32>
    %119 = vector.broadcast %15 : vector<1x32xf32> to vector<8x32xf32>
    %120 = arith.addf %118, %119 : vector<8x32xf32>
    %121 = arith.addf %120, %1 : vector<8x32xf32>
    %c0_41 = arith.constant 0 : index
    %c0_42 = arith.constant 0 : index
    %122 = vector.load %arg6[%c0_41, %c0_42] : memref<1x32xf32, #tpu.memory_space<vmem>>, vector<1x32xf32>
    %c0_43 = arith.constant 0 : index
    %c0_44 = arith.constant 0 : index
    %123 = vector.load %arg7[%c0_43, %c0_44] : memref<1x32xf32, #tpu.memory_space<vmem>>, vector<1x32xf32>
    %cst_45 = arith.constant dense<0.000000e+00> : vector<8xf32>
    %124 = vector.multi_reduction <add>, %121, %cst_45 [1] : vector<8x32xf32> to vector<8xf32>
    %125 = vector.shape_cast %124 : vector<8xf32> to vector<8x1xf32>
    %cst_46 = arith.constant 3.200000e+01 : f32
    %126 = vector.broadcast %cst_46 : f32 to vector<8x1xf32>
    %127 = arith.divf %125, %126 : vector<8x1xf32>
    %128 = vector.broadcast %127 : vector<8x1xf32> to vector<8x32xf32>
    %129 = arith.subf %121, %128 : vector<8x32xf32>
    %130 = arith.mulf %129, %129 : vector<8x32xf32>
    %cst_47 = arith.constant dense<0.000000e+00> : vector<8xf32>
    %131 = vector.multi_reduction <add>, %130, %cst_47 [1] : vector<8x32xf32> to vector<8xf32>
    %132 = vector.shape_cast %131 : vector<8xf32> to vector<8x1xf32>
    %cst_48 = arith.constant 3.200000e+01 : f32
    %133 = vector.broadcast %cst_48 : f32 to vector<8x1xf32>
    %134 = arith.divf %132, %133 : vector<8x1xf32>
    %135 = vector.broadcast %127 : vector<8x1xf32> to vector<8x32xf32>
    %136 = arith.subf %121, %135 : vector<8x32xf32>
    %cst_49 = arith.constant 9.99999974E-6 : f32
    %137 = vector.broadcast %cst_49 : f32 to vector<8x1xf32>
    %138 = arith.addf %134, %137 : vector<8x1xf32>
    %139 = math.rsqrt %138 : vector<8x1xf32>
    %140 = vector.broadcast %139 : vector<8x1xf32> to vector<8x32xf32>
    %141 = arith.mulf %136, %140 : vector<8x32xf32>
    %142 = vector.broadcast %122 : vector<1x32xf32> to vector<8x32xf32>
    %143 = arith.mulf %141, %142 : vector<8x32xf32>
    %144 = vector.broadcast %123 : vector<1x32xf32> to vector<8x32xf32>
    %145 = arith.addf %143, %144 : vector<8x32xf32>
    %c0_50 = arith.constant 0 : index
    %c0_51 = arith.constant 0 : index
    %146 = vector.load %arg9[%c0_50, %c0_51] : memref<1x128xf32, #tpu.memory_space<vmem>>, vector<1x128xf32>
    %c0_52 = arith.constant 0 : index
    %c0_53 = arith.constant 0 : index
    %147 = vector.load %arg11[%c0_52, %c0_53] : memref<1x32xf32, #tpu.memory_space<vmem>>, vector<1x32xf32>
    %148 = arith.truncf %145 : vector<8x32xf32> to vector<8x32xbf16>
    %c0_54 = arith.constant 0 : index
    %c0_55 = arith.constant 0 : index
    %149 = vector.load %arg8[%c0_54, %c0_55] : memref<32x128xbf16, #tpu.memory_space<vmem>>, vector<32x128xbf16>
    %cst_56 = arith.constant dense<0.000000e+00> : vector<8x128xf32>
    %150 = tpu.matmul %148, %149, %cst_56 {dimension_numbers = #tpu.dot_dimension_numbers<[1], [0], [0], [1], [0, 0, 1, 1], [], []>} : vector<8x32xbf16>, vector<32x128xbf16>, vector<8x128xf32> -> vector<8x128xf32>
    %151 = vector.broadcast %146 : vector<1x128xf32> to vector<8x128xf32>
    %152 = arith.addf %150, %151 : vector<8x128xf32>
    %cst_57 = arith.constant 0.000000e+00 : f32
    %153 = vector.broadcast %cst_57 : f32 to vector<8x128xf32>
    %154 = arith.maximumf %152, %153 : vector<8x128xf32>
    %155 = arith.truncf %154 : vector<8x128xf32> to vector<8x128xbf16>
    %c0_58 = arith.constant 0 : index
    %c0_59 = arith.constant 0 : index
    %156 = vector.load %arg10[%c0_58, %c0_59] : memref<128x32xbf16, #tpu.memory_space<vmem>>, vector<128x32xbf16>
    %cst_60 = arith.constant dense<0.000000e+00> : vector<8x32xf32>
    %157 = tpu.matmul %155, %156, %cst_60 {dimension_numbers = #tpu.dot_dimension_numbers<[1], [0], [0], [1], [0, 0, 1, 1], [], []>} : vector<8x128xbf16>, vector<128x32xbf16>, vector<8x32xf32> -> vector<8x32xf32>
    %158 = vector.broadcast %147 : vector<1x32xf32> to vector<8x32xf32>
    %159 = arith.addf %157, %158 : vector<8x32xf32>
    %160 = arith.addf %159, %145 : vector<8x32xf32>
    %c0_61 = arith.constant 0 : index
    %c0_62 = arith.constant 0 : index
    %161 = vector.load %arg12[%c0_61, %c0_62] : memref<1x32xf32, #tpu.memory_space<vmem>>, vector<1x32xf32>
    %c0_63 = arith.constant 0 : index
    %c0_64 = arith.constant 0 : index
    %162 = vector.load %arg13[%c0_63, %c0_64] : memref<1x32xf32, #tpu.memory_space<vmem>>, vector<1x32xf32>
    %cst_65 = arith.constant dense<0.000000e+00> : vector<8xf32>
    %163 = vector.multi_reduction <add>, %160, %cst_65 [1] : vector<8x32xf32> to vector<8xf32>
    %164 = vector.shape_cast %163 : vector<8xf32> to vector<8x1xf32>
    %cst_66 = arith.constant 3.200000e+01 : f32
    %165 = vector.broadcast %cst_66 : f32 to vector<8x1xf32>
    %166 = arith.divf %164, %165 : vector<8x1xf32>
    %167 = vector.broadcast %166 : vector<8x1xf32> to vector<8x32xf32>
    %168 = arith.subf %160, %167 : vector<8x32xf32>
    %169 = arith.mulf %168, %168 : vector<8x32xf32>
    %cst_67 = arith.constant dense<0.000000e+00> : vector<8xf32>
    %170 = vector.multi_reduction <add>, %169, %cst_67 [1] : vector<8x32xf32> to vector<8xf32>
    %171 = vector.shape_cast %170 : vector<8xf32> to vector<8x1xf32>
    %cst_68 = arith.constant 3.200000e+01 : f32
    %172 = vector.broadcast %cst_68 : f32 to vector<8x1xf32>
    %173 = arith.divf %171, %172 : vector<8x1xf32>
    %174 = vector.broadcast %166 : vector<8x1xf32> to vector<8x32xf32>
    %175 = arith.subf %160, %174 : vector<8x32xf32>
    %cst_69 = arith.constant 9.99999974E-6 : f32
    %176 = vector.broadcast %cst_69 : f32 to vector<8x1xf32>
    %177 = arith.addf %173, %176 : vector<8x1xf32>
    %178 = math.rsqrt %177 : vector<8x1xf32>
    %179 = vector.broadcast %178 : vector<8x1xf32> to vector<8x32xf32>
    %180 = arith.mulf %175, %179 : vector<8x32xf32>
    %181 = vector.broadcast %161 : vector<1x32xf32> to vector<8x32xf32>
    %182 = arith.mulf %180, %181 : vector<8x32xf32>
    %183 = vector.broadcast %162 : vector<1x32xf32> to vector<8x32xf32>
    %184 = arith.addf %182, %183 : vector<8x32xf32>
    %c0_70 = arith.constant 0 : index
    %c0_71 = arith.constant 0 : index
    %c0_72 = arith.constant 0 : index
    %185 = vector.load %arg14[%c0_70, %c0_71, %c0_72] : memref<1x8x32xf32, #tpu.memory_space<vmem>>, vector<1x8x32xf32>
    %186 = vector.shape_cast %185 : vector<1x8x32xf32> to vector<8x32xf32>
    %187 = vector.shape_cast %184 : vector<8x32xf32> to vector<1x8x32xf32>
    tpu.vector_store %arg14[%c0_70, %c0_71, %c0_72], %187 {strides = array<i32>} : memref<1x8x32xf32, #tpu.memory_space<vmem>>, vector<1x8x32xf32>,
    return
  }
  func.func @transform_0(%arg0: i32) -> (i32, i32, i32) {
    %c0_i32 = arith.constant 0 : i32
    %c0_i32_0 = arith.constant 0 : i32
    %c0_i32_1 = arith.constant 0 : i32
    return %arg0, %c0_i32, %c0_i32_0 : i32, i32, i32
  }
  func.func @transform_1(%arg0: i32) -> (i32, i32, i32) {
    %c0_i32 = arith.constant 0 : i32
    %c0_i32_0 = arith.constant 0 : i32
    %c0_i32_1 = arith.constant 0 : i32
    return %arg0, %c0_i32, %c0_i32_0 : i32, i32, i32
  }
  func.func @transform_2(%arg0: i32) -> (i32, i32) {
    %c0_i32 = arith.constant 0 : i32
    %c0_i32_0 = arith.constant 0 : i32
    %c0_i32_1 = arith.constant 0 : i32
    return %c0_i32, %c0_i32_0 : i32, i32
  }
  func.func @transform_3(%arg0: i32) -> (i32, i32, i32) {
    %c0_i32 = arith.constant 0 : i32
    %c0_i32_0 = arith.constant 0 : i32
    %c0_i32_1 = arith.constant 0 : i32
    %c0_i32_2 = arith.constant 0 : i32
    return %c0_i32, %c0_i32_0, %c0_i32_1 : i32, i32, i32
  }
  func.func @transform_4(%arg0: i32) -> (i32, i32) {
    %c0_i32 = arith.constant 0 : i32
    %c0_i32_0 = arith.constant 0 : i32
    %c0_i32_1 = arith.constant 0 : i32
    return %c0_i32, %c0_i32_0 : i32, i32
  }
  func.func @transform_5(%arg0: i32) -> (i32, i32) {
    %c0_i32 = arith.constant 0 : i32
    %c0_i32_0 = arith.constant 0 : i32
    %c0_i32_1 = arith.constant 0 : i32
    return %c0_i32, %c0_i32_0 : i32, i32
  }
  func.func @transform_6(%arg0: i32) -> (i32, i32) {
    %c0_i32 = arith.constant 0 : i32
    %c0_i32_0 = arith.constant 0 : i32
    %c0_i32_1 = arith.constant 0 : i32
    return %c0_i32, %c0_i32_0 : i32, i32
  }
  func.func @transform_7(%arg0: i32) -> (i32, i32) {
    %c0_i32 = arith.constant 0 : i32
    %c0_i32_0 = arith.constant 0 : i32
    %c0_i32_1 = arith.constant 0 : i32
    return %c0_i32, %c0_i32_0 : i32, i32
  }
  func.func @transform_8(%arg0: i32) -> (i32, i32) {
    %c0_i32 = arith.constant 0 : i32
    %c0_i32_0 = arith.constant 0 : i32
    %c0_i32_1 = arith.constant 0 : i32
    return %c0_i32, %c0_i32_0 : i32, i32
  }
  func.func @transform_9(%arg0: i32) -> (i32, i32) {
    %c0_i32 = arith.constant 0 : i32
    %c0_i32_0 = arith.constant 0 : i32
    %c0_i32_1 = arith.constant 0 : i32
    return %c0_i32, %c0_i32_0 : i32, i32
  }
  func.func @transform_10(%arg0: i32) -> (i32, i32) {
    %c0_i32 = arith.constant 0 : i32
    %c0_i32_0 = arith.constant 0 : i32
    %c0_i32_1 = arith.constant 0 : i32
    return %c0_i32, %c0_i32_0 : i32, i32
  }
  func.func @transform_11(%arg0: i32) -> (i32, i32) {
    %c0_i32 = arith.constant 0 : i32
    %c0_i32_0 = arith.constant 0 : i32
    %c0_i32_1 = arith.constant 0 : i32
    return %c0_i32, %c0_i32_0 : i32, i32
  }
  func.func @transform_12(%arg0: i32) -> (i32, i32) {
    %c0_i32 = arith.constant 0 : i32
    %c0_i32_0 = arith.constant 0 : i32
    %c0_i32_1 = arith.constant 0 : i32
    return %c0_i32, %c0_i32_0 : i32, i32
  }
  func.func @transform_13(%arg0: i32) -> (i32, i32, i32) {
    %c0_i32 = arith.constant 0 : i32
    %c0_i32_0 = arith.constant 0 : i32
    %c0_i32_1 = arith.constant 0 : i32
    return %arg0, %c0_i32, %c0_i32_0 : i32, i32, i32
  }
}

module attributes {stable_mosaic.version = 11 : i64} {
  func.func @kernel(%arg0: i32, %arg1: memref<1x8x32xf32, #tpu.memory_space<vmem>>, %arg2: memref<1x8x32xf32, #tpu.memory_space<vmem>>, %arg3: memref<1x1x8xf32, #tpu.memory_space<vmem>>, %arg4: memref<32x96xbf16, #tpu.memory_space<vmem>>, %arg5: memref<4x8x32xbf16, #tpu.memory_space<vmem>>, %arg6: memref<1x32xf32, #tpu.memory_space<vmem>>, %arg7: memref<1x32xf32, #tpu.memory_space<vmem>>, %arg8: memref<1x32xf32, #tpu.memory_space<vmem>>, %arg9: memref<32x32xbf16, #tpu.memory_space<vmem>>, %arg10: memref<32x64xbf16, #tpu.memory_space<vmem>>, %arg11: memref<4x8x32xbf16, #tpu.memory_space<vmem>>, %arg12: memref<1x32xf32, #tpu.memory_space<vmem>>, %arg13: memref<1x32xf32, #tpu.memory_space<vmem>>, %arg14: memref<1x32xf32, #tpu.memory_space<vmem>>, %arg15: memref<32x128xbf16, #tpu.memory_space<vmem>>, %arg16: memref<1x128xf32, #tpu.memory_space<vmem>>, %arg17: memref<128x32xbf16, #tpu.memory_space<vmem>>, %arg18: memref<1x32xf32, #tpu.memory_space<vmem>>, %arg19: memref<1x32xf32, #tpu.memory_space<vmem>>, %arg20: memref<1x32xf32, #tpu.memory_space<vmem>>, %arg21: memref<1x8x32xf32, #tpu.memory_space<vmem>>) attributes {dimension_semantics = [#tpu.dimension_semantics<parallel>], iteration_bounds = array<i64: 2>, scalar_prefetch = 0 : i64, scratch_operands = 0 : i64, tpu.core_type = #tpu.core_type<tc>, window_params = [{transform_indices = @transform_0, window_bounds = array<i64: 1, 8, 32>}, {transform_indices = @transform_1, window_bounds = array<i64: 1, 8, 32>}, {transform_indices = @transform_2, window_bounds = array<i64: 1, 1, 8>}, {pipeline_mode = #tpu.pipeline_mode<synchronous>, transform_indices = @transform_3, window_bounds = array<i64: 32, 96>}, {pipeline_mode = #tpu.pipeline_mode<synchronous>, transform_indices = @transform_4, window_bounds = array<i64: 4, 8, 32>}, {pipeline_mode = #tpu.pipeline_mode<synchronous>, transform_indices = @transform_5, window_bounds = array<i64: 1, 32>}, {pipeline_mode = #tpu.pipeline_mode<synchronous>, transform_indices = @transform_6, window_bounds = array<i64: 1, 32>}, {pipeline_mode = #tpu.pipeline_mode<synchronous>, transform_indices = @transform_7, window_bounds = array<i64: 1, 32>}, {pipeline_mode = #tpu.pipeline_mode<synchronous>, transform_indices = @transform_8, window_bounds = array<i64: 32, 32>}, {pipeline_mode = #tpu.pipeline_mode<synchronous>, transform_indices = @transform_9, window_bounds = array<i64: 32, 64>}, {pipeline_mode = #tpu.pipeline_mode<synchronous>, transform_indices = @transform_10, window_bounds = array<i64: 4, 8, 32>}, {pipeline_mode = #tpu.pipeline_mode<synchronous>, transform_indices = @transform_11, window_bounds = array<i64: 1, 32>}, {pipeline_mode = #tpu.pipeline_mode<synchronous>, transform_indices = @transform_12, window_bounds = array<i64: 1, 32>}, {pipeline_mode = #tpu.pipeline_mode<synchronous>, transform_indices = @transform_13, window_bounds = array<i64: 1, 32>}, {pipeline_mode = #tpu.pipeline_mode<synchronous>, transform_indices = @transform_14, window_bounds = array<i64: 32, 128>}, {pipeline_mode = #tpu.pipeline_mode<synchronous>, transform_indices = @transform_15, window_bounds = array<i64: 1, 128>}, {pipeline_mode = #tpu.pipeline_mode<synchronous>, transform_indices = @transform_16, window_bounds = array<i64: 128, 32>}, {pipeline_mode = #tpu.pipeline_mode<synchronous>, transform_indices = @transform_17, window_bounds = array<i64: 1, 32>}, {pipeline_mode = #tpu.pipeline_mode<synchronous>, transform_indices = @transform_18, window_bounds = array<i64: 1, 32>}, {pipeline_mode = #tpu.pipeline_mode<synchronous>, transform_indices = @transform_19, window_bounds = array<i64: 1, 32>}, {transform_indices = @transform_20, window_bounds = array<i64: 1, 8, 32>}]} {
    %c0 = arith.constant 0 : index
    %c0_0 = arith.constant 0 : index
    %c0_1 = arith.constant 0 : index
    %0 = vector.load %arg1[%c0, %c0_0, %c0_1] : memref<1x8x32xf32, #tpu.memory_space<vmem>>, vector<1x8x32xf32>
    %1 = vector.shape_cast %0 : vector<1x8x32xf32> to vector<8x32xf32>
    %c0_2 = arith.constant 0 : index
    %c0_3 = arith.constant 0 : index
    %c0_4 = arith.constant 0 : index
    %2 = vector.load %arg2[%c0_2, %c0_3, %c0_4] : memref<1x8x32xf32, #tpu.memory_space<vmem>>, vector<1x8x32xf32>
    %3 = vector.shape_cast %2 : vector<1x8x32xf32> to vector<8x32xf32>
    %4 = arith.truncf %1 : vector<8x32xf32> to vector<8x32xbf16>
    %c0_5 = arith.constant 0 : index
    %c0_6 = arith.constant 0 : index
    %5 = vector.load %arg4[%c0_5, %c0_6] : memref<32x96xbf16, #tpu.memory_space<vmem>>, vector<32x96xbf16>
    %cst = arith.constant dense<0.000000e+00> : vector<8x96xf32>
    %6 = tpu.matmul %4, %5, %cst {dimension_numbers = #tpu.dot_dimension_numbers<[1], [0], [0], [1], [0, 0, 1, 1], [], []>} : vector<8x32xbf16>, vector<32x96xbf16>, vector<8x96xf32> -> vector<8x96xf32>
    %7 = tpu.iota {dimensions = array<i32: 0>} : vector<8x8xi32>
    %8 = tpu.iota {dimensions = array<i32: 1>} : vector<8x8xi32>
    %9 = arith.cmpi sgt, %8, %7 : vector<8x8xi32>
    %cst_7 = arith.constant -1.000000e+20 : f32
    %cst_8 = arith.constant 0.000000e+00 : f32
    %10 = vector.broadcast %cst_7 : f32 to vector<8x8xf32>
    %11 = vector.broadcast %cst_8 : f32 to vector<8x8xf32>
    %12 = arith.select %9, %10, %11 : vector<8x8xi1>, vector<8x8xf32>
    %13 = vector.extract_strided_slice %6 {offsets = [0, 0], sizes = [8, 32], strides = [1, 1]} : vector<8x96xf32> to vector<8x32xf32>
    %14 = vector.extract_strided_slice %6 {offsets = [0, 32], sizes = [8, 32], strides = [1, 1]} : vector<8x96xf32> to vector<8x32xf32>
    %15 = vector.extract_strided_slice %6 {offsets = [0, 64], sizes = [8, 32], strides = [1, 1]} : vector<8x96xf32> to vector<8x32xf32>
    %c0_9 = arith.constant 0 : index
    %c0_10 = arith.constant 0 : index
    %16 = vector.load %arg6[%c0_9, %c0_10] : memref<1x32xf32, #tpu.memory_space<vmem>>, vector<1x32xf32>
    %17 = vector.extract_strided_slice %13 {offsets = [0, 0], sizes = [8, 8], strides = [1, 1]} : vector<8x32xf32> to vector<8x8xf32>
    %18 = arith.truncf %17 : vector<8x8xf32> to vector<8x8xbf16>
    %19 = vector.extract_strided_slice %14 {offsets = [0, 0], sizes = [8, 8], strides = [1, 1]} : vector<8x32xf32> to vector<8x8xf32>
    %20 = arith.truncf %19 : vector<8x8xf32> to vector<8x8xbf16>
    %21 = vector.extract_strided_slice %15 {offsets = [0, 0], sizes = [8, 8], strides = [1, 1]} : vector<8x32xf32> to vector<8x8xf32>
    %22 = arith.truncf %21 : vector<8x8xf32> to vector<8x8xbf16>
    %cst_11 = arith.constant dense<0.000000e+00> : vector<8x8xf32>
    %23 = tpu.matmul %18, %20, %cst_11 {dimension_numbers = #tpu.dot_dimension_numbers<[1], [1], [0], [0], [0, 0, 1, 0], [], []>} : vector<8x8xbf16>, vector<8x8xbf16>, vector<8x8xf32> -> vector<8x8xf32>
    %24 = arith.addf %23, %12 : vector<8x8xf32>
    %cst_12 = arith.constant dense<0xFF800000> : vector<8xf32>
    %25 = vector.multi_reduction <maximumf>, %24, %cst_12 [1] : vector<8x8xf32> to vector<8xf32>
    %26 = vector.shape_cast %25 : vector<8xf32> to vector<8x1xf32>
    %27 = vector.broadcast %26 : vector<8x1xf32> to vector<8x8xf32>
    %28 = arith.subf %24, %27 : vector<8x8xf32>
    %29 = math.exp %28 : vector<8x8xf32>
    %cst_13 = arith.constant dense<0.000000e+00> : vector<8xf32>
    %30 = vector.multi_reduction <add>, %29, %cst_13 [1] : vector<8x8xf32> to vector<8xf32>
    %31 = vector.shape_cast %30 : vector<8xf32> to vector<8x1xf32>
    %32 = tpu.reciprocal %31 {approx = true} : vector<8x1xf32> -> vector<8x1xf32>
    %33 = vector.broadcast %32 : vector<8x1xf32> to vector<8x8xf32>
    %34 = arith.mulf %29, %33 : vector<8x8xf32>
    %35 = arith.truncf %34 : vector<8x8xf32> to vector<8x8xbf16>
    %cst_14 = arith.constant dense<0.000000e+00> : vector<8x8xf32>
    %36 = tpu.matmul %35, %22, %cst_14 {dimension_numbers = #tpu.dot_dimension_numbers<[1], [0], [0], [1], [0, 0, 1, 1], [], []>} : vector<8x8xbf16>, vector<8x8xbf16>, vector<8x8xf32> -> vector<8x8xf32>
    %37 = arith.truncf %36 : vector<8x8xf32> to vector<8x8xbf16>
    %c0_15 = arith.constant 0 : index
    %c0_16 = arith.constant 0 : index
    %c0_17 = arith.constant 0 : index
    %38 = vector.load %arg5[%c0_15, %c0_16, %c0_17] : memref<4x8x32xbf16, #tpu.memory_space<vmem>>, vector<1x8x32xbf16>
    %39 = vector.shape_cast %38 : vector<1x8x32xbf16> to vector<8x32xbf16>
    %cst_18 = arith.constant dense<0.000000e+00> : vector<8x32xf32>
    %40 = tpu.matmul %37, %39, %cst_18 {dimension_numbers = #tpu.dot_dimension_numbers<[1], [0], [0], [1], [0, 0, 1, 1], [], []>} : vector<8x8xbf16>, vector<8x32xbf16>, vector<8x32xf32> -> vector<8x32xf32>
    %41 = vector.extract_strided_slice %13 {offsets = [0, 8], sizes = [8, 8], strides = [1, 1]} : vector<8x32xf32> to vector<8x8xf32>
    %42 = arith.truncf %41 : vector<8x8xf32> to vector<8x8xbf16>
    %43 = vector.extract_strided_slice %14 {offsets = [0, 8], sizes = [8, 8], strides = [1, 1]} : vector<8x32xf32> to vector<8x8xf32>
    %44 = arith.truncf %43 : vector<8x8xf32> to vector<8x8xbf16>
    %45 = vector.extract_strided_slice %15 {offsets = [0, 8], sizes = [8, 8], strides = [1, 1]} : vector<8x32xf32> to vector<8x8xf32>
    %46 = arith.truncf %45 : vector<8x8xf32> to vector<8x8xbf16>
    %cst_19 = arith.constant dense<0.000000e+00> : vector<8x8xf32>
    %47 = tpu.matmul %42, %44, %cst_19 {dimension_numbers = #tpu.dot_dimension_numbers<[1], [1], [0], [0], [0, 0, 1, 0], [], []>} : vector<8x8xbf16>, vector<8x8xbf16>, vector<8x8xf32> -> vector<8x8xf32>
    %48 = arith.addf %47, %12 : vector<8x8xf32>
    %cst_20 = arith.constant dense<0xFF800000> : vector<8xf32>
    %49 = vector.multi_reduction <maximumf>, %48, %cst_20 [1] : vector<8x8xf32> to vector<8xf32>
    %50 = vector.shape_cast %49 : vector<8xf32> to vector<8x1xf32>
    %51 = vector.broadcast %50 : vector<8x1xf32> to vector<8x8xf32>
    %52 = arith.subf %48, %51 : vector<8x8xf32>
    %53 = math.exp %52 : vector<8x8xf32>
    %cst_21 = arith.constant dense<0.000000e+00> : vector<8xf32>
    %54 = vector.multi_reduction <add>, %53, %cst_21 [1] : vector<8x8xf32> to vector<8xf32>
    %55 = vector.shape_cast %54 : vector<8xf32> to vector<8x1xf32>
    %56 = tpu.reciprocal %55 {approx = true} : vector<8x1xf32> -> vector<8x1xf32>
    %57 = vector.broadcast %56 : vector<8x1xf32> to vector<8x8xf32>
    %58 = arith.mulf %53, %57 : vector<8x8xf32>
    %59 = arith.truncf %58 : vector<8x8xf32> to vector<8x8xbf16>
    %cst_22 = arith.constant dense<0.000000e+00> : vector<8x8xf32>
    %60 = tpu.matmul %59, %46, %cst_22 {dimension_numbers = #tpu.dot_dimension_numbers<[1], [0], [0], [1], [0, 0, 1, 1], [], []>} : vector<8x8xbf16>, vector<8x8xbf16>, vector<8x8xf32> -> vector<8x8xf32>
    %61 = arith.truncf %60 : vector<8x8xf32> to vector<8x8xbf16>
    %c1 = arith.constant 1 : index
    %c0_23 = arith.constant 0 : index
    %c0_24 = arith.constant 0 : index
    %62 = vector.load %arg5[%c1, %c0_23, %c0_24] : memref<4x8x32xbf16, #tpu.memory_space<vmem>>, vector<1x8x32xbf16>
    %63 = vector.shape_cast %62 : vector<1x8x32xbf16> to vector<8x32xbf16>
    %cst_25 = arith.constant dense<0.000000e+00> : vector<8x32xf32>
    %64 = tpu.matmul %61, %63, %cst_25 {dimension_numbers = #tpu.dot_dimension_numbers<[1], [0], [0], [1], [0, 0, 1, 1], [], []>} : vector<8x8xbf16>, vector<8x32xbf16>, vector<8x32xf32> -> vector<8x32xf32>
    %65 = arith.addf %40, %64 : vector<8x32xf32>
    %66 = vector.extract_strided_slice %13 {offsets = [0, 16], sizes = [8, 8], strides = [1, 1]} : vector<8x32xf32> to vector<8x8xf32>
    %67 = arith.truncf %66 : vector<8x8xf32> to vector<8x8xbf16>
    %68 = vector.extract_strided_slice %14 {offsets = [0, 16], sizes = [8, 8], strides = [1, 1]} : vector<8x32xf32> to vector<8x8xf32>
    %69 = arith.truncf %68 : vector<8x8xf32> to vector<8x8xbf16>
    %70 = vector.extract_strided_slice %15 {offsets = [0, 16], sizes = [8, 8], strides = [1, 1]} : vector<8x32xf32> to vector<8x8xf32>
    %71 = arith.truncf %70 : vector<8x8xf32> to vector<8x8xbf16>
    %cst_26 = arith.constant dense<0.000000e+00> : vector<8x8xf32>
    %72 = tpu.matmul %67, %69, %cst_26 {dimension_numbers = #tpu.dot_dimension_numbers<[1], [1], [0], [0], [0, 0, 1, 0], [], []>} : vector<8x8xbf16>, vector<8x8xbf16>, vector<8x8xf32> -> vector<8x8xf32>
    %73 = arith.addf %72, %12 : vector<8x8xf32>
    %cst_27 = arith.constant dense<0xFF800000> : vector<8xf32>
    %74 = vector.multi_reduction <maximumf>, %73, %cst_27 [1] : vector<8x8xf32> to vector<8xf32>
    %75 = vector.shape_cast %74 : vector<8xf32> to vector<8x1xf32>
    %76 = vector.broadcast %75 : vector<8x1xf32> to vector<8x8xf32>
    %77 = arith.subf %73, %76 : vector<8x8xf32>
    %78 = math.exp %77 : vector<8x8xf32>
    %cst_28 = arith.constant dense<0.000000e+00> : vector<8xf32>
    %79 = vector.multi_reduction <add>, %78, %cst_28 [1] : vector<8x8xf32> to vector<8xf32>
    %80 = vector.shape_cast %79 : vector<8xf32> to vector<8x1xf32>
    %81 = tpu.reciprocal %80 {approx = true} : vector<8x1xf32> -> vector<8x1xf32>
    %82 = vector.broadcast %81 : vector<8x1xf32> to vector<8x8xf32>
    %83 = arith.mulf %78, %82 : vector<8x8xf32>
    %84 = arith.truncf %83 : vector<8x8xf32> to vector<8x8xbf16>
    %cst_29 = arith.constant dense<0.000000e+00> : vector<8x8xf32>
    %85 = tpu.matmul %84, %71, %cst_29 {dimension_numbers = #tpu.dot_dimension_numbers<[1], [0], [0], [1], [0, 0, 1, 1], [], []>} : vector<8x8xbf16>, vector<8x8xbf16>, vector<8x8xf32> -> vector<8x8xf32>
    %86 = arith.truncf %85 : vector<8x8xf32> to vector<8x8xbf16>
    %c2 = arith.constant 2 : index
    %c0_30 = arith.constant 0 : index
    %c0_31 = arith.constant 0 : index
    %87 = vector.load %arg5[%c2, %c0_30, %c0_31] : memref<4x8x32xbf16, #tpu.memory_space<vmem>>, vector<1x8x32xbf16>
    %88 = vector.shape_cast %87 : vector<1x8x32xbf16> to vector<8x32xbf16>
    %cst_32 = arith.constant dense<0.000000e+00> : vector<8x32xf32>
    %89 = tpu.matmul %86, %88, %cst_32 {dimension_numbers = #tpu.dot_dimension_numbers<[1], [0], [0], [1], [0, 0, 1, 1], [], []>} : vector<8x8xbf16>, vector<8x32xbf16>, vector<8x32xf32> -> vector<8x32xf32>
    %90 = arith.addf %65, %89 : vector<8x32xf32>
    %91 = vector.extract_strided_slice %13 {offsets = [0, 24], sizes = [8, 8], strides = [1, 1]} : vector<8x32xf32> to vector<8x8xf32>
    %92 = arith.truncf %91 : vector<8x8xf32> to vector<8x8xbf16>
    %93 = vector.extract_strided_slice %14 {offsets = [0, 24], sizes = [8, 8], strides = [1, 1]} : vector<8x32xf32> to vector<8x8xf32>
    %94 = arith.truncf %93 : vector<8x8xf32> to vector<8x8xbf16>
    %95 = vector.extract_strided_slice %15 {offsets = [0, 24], sizes = [8, 8], strides = [1, 1]} : vector<8x32xf32> to vector<8x8xf32>
    %96 = arith.truncf %95 : vector<8x8xf32> to vector<8x8xbf16>
    %cst_33 = arith.constant dense<0.000000e+00> : vector<8x8xf32>
    %97 = tpu.matmul %92, %94, %cst_33 {dimension_numbers = #tpu.dot_dimension_numbers<[1], [1], [0], [0], [0, 0, 1, 0], [], []>} : vector<8x8xbf16>, vector<8x8xbf16>, vector<8x8xf32> -> vector<8x8xf32>
    %98 = arith.addf %97, %12 : vector<8x8xf32>
    %cst_34 = arith.constant dense<0xFF800000> : vector<8xf32>
    %99 = vector.multi_reduction <maximumf>, %98, %cst_34 [1] : vector<8x8xf32> to vector<8xf32>
    %100 = vector.shape_cast %99 : vector<8xf32> to vector<8x1xf32>
    %101 = vector.broadcast %100 : vector<8x1xf32> to vector<8x8xf32>
    %102 = arith.subf %98, %101 : vector<8x8xf32>
    %103 = math.exp %102 : vector<8x8xf32>
    %cst_35 = arith.constant dense<0.000000e+00> : vector<8xf32>
    %104 = vector.multi_reduction <add>, %103, %cst_35 [1] : vector<8x8xf32> to vector<8xf32>
    %105 = vector.shape_cast %104 : vector<8xf32> to vector<8x1xf32>
    %106 = tpu.reciprocal %105 {approx = true} : vector<8x1xf32> -> vector<8x1xf32>
    %107 = vector.broadcast %106 : vector<8x1xf32> to vector<8x8xf32>
    %108 = arith.mulf %103, %107 : vector<8x8xf32>
    %109 = arith.truncf %108 : vector<8x8xf32> to vector<8x8xbf16>
    %cst_36 = arith.constant dense<0.000000e+00> : vector<8x8xf32>
    %110 = tpu.matmul %109, %96, %cst_36 {dimension_numbers = #tpu.dot_dimension_numbers<[1], [0], [0], [1], [0, 0, 1, 1], [], []>} : vector<8x8xbf16>, vector<8x8xbf16>, vector<8x8xf32> -> vector<8x8xf32>
    %111 = arith.truncf %110 : vector<8x8xf32> to vector<8x8xbf16>
    %c3 = arith.constant 3 : index
    %c0_37 = arith.constant 0 : index
    %c0_38 = arith.constant 0 : index
    %112 = vector.load %arg5[%c3, %c0_37, %c0_38] : memref<4x8x32xbf16, #tpu.memory_space<vmem>>, vector<1x8x32xbf16>
    %113 = vector.shape_cast %112 : vector<1x8x32xbf16> to vector<8x32xbf16>
    %cst_39 = arith.constant dense<0.000000e+00> : vector<8x32xf32>
    %114 = tpu.matmul %111, %113, %cst_39 {dimension_numbers = #tpu.dot_dimension_numbers<[1], [0], [0], [1], [0, 0, 1, 1], [], []>} : vector<8x8xbf16>, vector<8x32xbf16>, vector<8x32xf32> -> vector<8x32xf32>
    %115 = arith.addf %90, %114 : vector<8x32xf32>
    %116 = vector.broadcast %16 : vector<1x32xf32> to vector<8x32xf32>
    %117 = arith.addf %115, %116 : vector<8x32xf32>
    %118 = arith.addf %117, %1 : vector<8x32xf32>
    %c0_40 = arith.constant 0 : index
    %c0_41 = arith.constant 0 : index
    %119 = vector.load %arg7[%c0_40, %c0_41] : memref<1x32xf32, #tpu.memory_space<vmem>>, vector<1x32xf32>
    %c0_42 = arith.constant 0 : index
    %c0_43 = arith.constant 0 : index
    %120 = vector.load %arg8[%c0_42, %c0_43] : memref<1x32xf32, #tpu.memory_space<vmem>>, vector<1x32xf32>
    %cst_44 = arith.constant dense<0.000000e+00> : vector<8xf32>
    %121 = vector.multi_reduction <add>, %118, %cst_44 [1] : vector<8x32xf32> to vector<8xf32>
    %122 = vector.shape_cast %121 : vector<8xf32> to vector<8x1xf32>
    %cst_45 = arith.constant 3.200000e+01 : f32
    %123 = vector.broadcast %cst_45 : f32 to vector<8x1xf32>
    %124 = arith.divf %122, %123 : vector<8x1xf32>
    %125 = vector.broadcast %124 : vector<8x1xf32> to vector<8x32xf32>
    %126 = arith.subf %118, %125 : vector<8x32xf32>
    %127 = arith.mulf %126, %126 : vector<8x32xf32>
    %cst_46 = arith.constant dense<0.000000e+00> : vector<8xf32>
    %128 = vector.multi_reduction <add>, %127, %cst_46 [1] : vector<8x32xf32> to vector<8xf32>
    %129 = vector.shape_cast %128 : vector<8xf32> to vector<8x1xf32>
    %cst_47 = arith.constant 3.200000e+01 : f32
    %130 = vector.broadcast %cst_47 : f32 to vector<8x1xf32>
    %131 = arith.divf %129, %130 : vector<8x1xf32>
    %132 = vector.broadcast %124 : vector<8x1xf32> to vector<8x32xf32>
    %133 = arith.subf %118, %132 : vector<8x32xf32>
    %cst_48 = arith.constant 9.99999974E-6 : f32
    %134 = vector.broadcast %cst_48 : f32 to vector<8x1xf32>
    %135 = arith.addf %131, %134 : vector<8x1xf32>
    %136 = math.rsqrt %135 : vector<8x1xf32>
    %137 = vector.broadcast %136 : vector<8x1xf32> to vector<8x32xf32>
    %138 = arith.mulf %133, %137 : vector<8x32xf32>
    %139 = vector.broadcast %119 : vector<1x32xf32> to vector<8x32xf32>
    %140 = arith.mulf %138, %139 : vector<8x32xf32>
    %141 = vector.broadcast %120 : vector<1x32xf32> to vector<8x32xf32>
    %142 = arith.addf %140, %141 : vector<8x32xf32>
    %143 = arith.truncf %142 : vector<8x32xf32> to vector<8x32xbf16>
    %c0_49 = arith.constant 0 : index
    %c0_50 = arith.constant 0 : index
    %144 = vector.load %arg9[%c0_49, %c0_50] : memref<32x32xbf16, #tpu.memory_space<vmem>>, vector<32x32xbf16>
    %cst_51 = arith.constant dense<0.000000e+00> : vector<8x32xf32>
    %145 = tpu.matmul %143, %144, %cst_51 {dimension_numbers = #tpu.dot_dimension_numbers<[1], [0], [0], [1], [0, 0, 1, 1], [], []>} : vector<8x32xbf16>, vector<32x32xbf16>, vector<8x32xf32> -> vector<8x32xf32>
    %146 = arith.truncf %3 : vector<8x32xf32> to vector<8x32xbf16>
    %c0_52 = arith.constant 0 : index
    %c0_53 = arith.constant 0 : index
    %147 = vector.load %arg10[%c0_52, %c0_53] : memref<32x64xbf16, #tpu.memory_space<vmem>>, vector<32x64xbf16>
    %cst_54 = arith.constant dense<0.000000e+00> : vector<8x64xf32>
    %148 = tpu.matmul %146, %147, %cst_54 {dimension_numbers = #tpu.dot_dimension_numbers<[1], [0], [0], [1], [0, 0, 1, 1], [], []>} : vector<8x32xbf16>, vector<32x64xbf16>, vector<8x64xf32> -> vector<8x64xf32>
    %c0_55 = arith.constant 0 : index
    %c0_56 = arith.constant 0 : index
    %c0_57 = arith.constant 0 : index
    %149 = vector.load %arg3[%c0_55, %c0_56, %c0_57] : memref<1x1x8xf32, #tpu.memory_space<vmem>>, vector<1x1x8xf32>
    %150 = vector.shape_cast %149 : vector<1x1x8xf32> to vector<1x8xf32>
    %cst_58 = arith.constant 0.000000e+00 : f32
    %151 = vector.broadcast %cst_58 : f32 to vector<1x8xf32>
    %152 = arith.cmpf oeq, %150, %151 : vector<1x8xf32>
    %cst_59 = arith.constant -1.000000e+20 : f32
    %cst_60 = arith.constant 0.000000e+00 : f32
    %153 = vector.broadcast %cst_59 : f32 to vector<1x8xf32>
    %154 = vector.broadcast %cst_60 : f32 to vector<1x8xf32>
    %155 = arith.select %152, %153, %154 : vector<1x8xi1>, vector<1x8xf32>
    %156 = vector.extract_strided_slice %148 {offsets = [0, 0], sizes = [8, 32], strides = [1, 1]} : vector<8x64xf32> to vector<8x32xf32>
    %157 = vector.extract_strided_slice %148 {offsets = [0, 32], sizes = [8, 32], strides = [1, 1]} : vector<8x64xf32> to vector<8x32xf32>
    %c0_61 = arith.constant 0 : index
    %c0_62 = arith.constant 0 : index
    %158 = vector.load %arg12[%c0_61, %c0_62] : memref<1x32xf32, #tpu.memory_space<vmem>>, vector<1x32xf32>
    %159 = vector.extract_strided_slice %145 {offsets = [0, 0], sizes = [8, 8], strides = [1, 1]} : vector<8x32xf32> to vector<8x8xf32>
    %160 = arith.truncf %159 : vector<8x8xf32> to vector<8x8xbf16>
    %161 = vector.extract_strided_slice %156 {offsets = [0, 0], sizes = [8, 8], strides = [1, 1]} : vector<8x32xf32> to vector<8x8xf32>
    %162 = arith.truncf %161 : vector<8x8xf32> to vector<8x8xbf16>
    %163 = vector.extract_strided_slice %157 {offsets = [0, 0], sizes = [8, 8], strides = [1, 1]} : vector<8x32xf32> to vector<8x8xf32>
    %164 = arith.truncf %163 : vector<8x8xf32> to vector<8x8xbf16>
    %cst_63 = arith.constant dense<0.000000e+00> : vector<8x8xf32>
    %165 = tpu.matmul %160, %162, %cst_63 {dimension_numbers = #tpu.dot_dimension_numbers<[1], [1], [0], [0], [0, 0, 1, 0], [], []>} : vector<8x8xbf16>, vector<8x8xbf16>, vector<8x8xf32> -> vector<8x8xf32>
    %166 = vector.broadcast %155 : vector<1x8xf32> to vector<8x8xf32>
    %167 = arith.addf %165, %166 : vector<8x8xf32>
    %cst_64 = arith.constant dense<0xFF800000> : vector<8xf32>
    %168 = vector.multi_reduction <maximumf>, %167, %cst_64 [1] : vector<8x8xf32> to vector<8xf32>
    %169 = vector.shape_cast %168 : vector<8xf32> to vector<8x1xf32>
    %170 = vector.broadcast %169 : vector<8x1xf32> to vector<8x8xf32>
    %171 = arith.subf %167, %170 : vector<8x8xf32>
    %172 = math.exp %171 : vector<8x8xf32>
    %cst_65 = arith.constant dense<0.000000e+00> : vector<8xf32>
    %173 = vector.multi_reduction <add>, %172, %cst_65 [1] : vector<8x8xf32> to vector<8xf32>
    %174 = vector.shape_cast %173 : vector<8xf32> to vector<8x1xf32>
    %175 = tpu.reciprocal %174 {approx = true} : vector<8x1xf32> -> vector<8x1xf32>
    %176 = vector.broadcast %175 : vector<8x1xf32> to vector<8x8xf32>
    %177 = arith.mulf %172, %176 : vector<8x8xf32>
    %178 = arith.truncf %177 : vector<8x8xf32> to vector<8x8xbf16>
    %cst_66 = arith.constant dense<0.000000e+00> : vector<8x8xf32>
    %179 = tpu.matmul %178, %164, %cst_66 {dimension_numbers = #tpu.dot_dimension_numbers<[1], [0], [0], [1], [0, 0, 1, 1], [], []>} : vector<8x8xbf16>, vector<8x8xbf16>, vector<8x8xf32> -> vector<8x8xf32>
    %180 = arith.truncf %179 : vector<8x8xf32> to vector<8x8xbf16>
    %c0_67 = arith.constant 0 : index
    %c0_68 = arith.constant 0 : index
    %c0_69 = arith.constant 0 : index
    %181 = vector.load %arg11[%c0_67, %c0_68, %c0_69] : memref<4x8x32xbf16, #tpu.memory_space<vmem>>, vector<1x8x32xbf16>
    %182 = vector.shape_cast %181 : vector<1x8x32xbf16> to vector<8x32xbf16>
    %cst_70 = arith.constant dense<0.000000e+00> : vector<8x32xf32>
    %183 = tpu.matmul %180, %182, %cst_70 {dimension_numbers = #tpu.dot_dimension_numbers<[1], [0], [0], [1], [0, 0, 1, 1], [], []>} : vector<8x8xbf16>, vector<8x32xbf16>, vector<8x32xf32> -> vector<8x32xf32>
    %184 = vector.extract_strided_slice %145 {offsets = [0, 8], sizes = [8, 8], strides = [1, 1]} : vector<8x32xf32> to vector<8x8xf32>
    %185 = arith.truncf %184 : vector<8x8xf32> to vector<8x8xbf16>
    %186 = vector.extract_strided_slice %156 {offsets = [0, 8], sizes = [8, 8], strides = [1, 1]} : vector<8x32xf32> to vector<8x8xf32>
    %187 = arith.truncf %186 : vector<8x8xf32> to vector<8x8xbf16>
    %188 = vector.extract_strided_slice %157 {offsets = [0, 8], sizes = [8, 8], strides = [1, 1]} : vector<8x32xf32> to vector<8x8xf32>
    %189 = arith.truncf %188 : vector<8x8xf32> to vector<8x8xbf16>
    %cst_71 = arith.constant dense<0.000000e+00> : vector<8x8xf32>
    %190 = tpu.matmul %185, %187, %cst_71 {dimension_numbers = #tpu.dot_dimension_numbers<[1], [1], [0], [0], [0, 0, 1, 0], [], []>} : vector<8x8xbf16>, vector<8x8xbf16>, vector<8x8xf32> -> vector<8x8xf32>
    %191 = vector.broadcast %155 : vector<1x8xf32> to vector<8x8xf32>
    %192 = arith.addf %190, %191 : vector<8x8xf32>
    %cst_72 = arith.constant dense<0xFF800000> : vector<8xf32>
    %193 = vector.multi_reduction <maximumf>, %192, %cst_72 [1] : vector<8x8xf32> to vector<8xf32>
    %194 = vector.shape_cast %193 : vector<8xf32> to vector<8x1xf32>
    %195 = vector.broadcast %194 : vector<8x1xf32> to vector<8x8xf32>
    %196 = arith.subf %192, %195 : vector<8x8xf32>
    %197 = math.exp %196 : vector<8x8xf32>
    %cst_73 = arith.constant dense<0.000000e+00> : vector<8xf32>
    %198 = vector.multi_reduction <add>, %197, %cst_73 [1] : vector<8x8xf32> to vector<8xf32>
    %199 = vector.shape_cast %198 : vector<8xf32> to vector<8x1xf32>
    %200 = tpu.reciprocal %199 {approx = true} : vector<8x1xf32> -> vector<8x1xf32>
    %201 = vector.broadcast %200 : vector<8x1xf32> to vector<8x8xf32>
    %202 = arith.mulf %197, %201 : vector<8x8xf32>
    %203 = arith.truncf %202 : vector<8x8xf32> to vector<8x8xbf16>
    %cst_74 = arith.constant dense<0.000000e+00> : vector<8x8xf32>
    %204 = tpu.matmul %203, %189, %cst_74 {dimension_numbers = #tpu.dot_dimension_numbers<[1], [0], [0], [1], [0, 0, 1, 1], [], []>} : vector<8x8xbf16>, vector<8x8xbf16>, vector<8x8xf32> -> vector<8x8xf32>
    %205 = arith.truncf %204 : vector<8x8xf32> to vector<8x8xbf16>
    %c1_75 = arith.constant 1 : index
    %c0_76 = arith.constant 0 : index
    %c0_77 = arith.constant 0 : index
    %206 = vector.load %arg11[%c1_75, %c0_76, %c0_77] : memref<4x8x32xbf16, #tpu.memory_space<vmem>>, vector<1x8x32xbf16>
    %207 = vector.shape_cast %206 : vector<1x8x32xbf16> to vector<8x32xbf16>
    %cst_78 = arith.constant dense<0.000000e+00> : vector<8x32xf32>
    %208 = tpu.matmul %205, %207, %cst_78 {dimension_numbers = #tpu.dot_dimension_numbers<[1], [0], [0], [1], [0, 0, 1, 1], [], []>} : vector<8x8xbf16>, vector<8x32xbf16>, vector<8x32xf32> -> vector<8x32xf32>
    %209 = arith.addf %183, %208 : vector<8x32xf32>
    %210 = vector.extract_strided_slice %145 {offsets = [0, 16], sizes = [8, 8], strides = [1, 1]} : vector<8x32xf32> to vector<8x8xf32>
    %211 = arith.truncf %210 : vector<8x8xf32> to vector<8x8xbf16>
    %212 = vector.extract_strided_slice %156 {offsets = [0, 16], sizes = [8, 8], strides = [1, 1]} : vector<8x32xf32> to vector<8x8xf32>
    %213 = arith.truncf %212 : vector<8x8xf32> to vector<8x8xbf16>
    %214 = vector.extract_strided_slice %157 {offsets = [0, 16], sizes = [8, 8], strides = [1, 1]} : vector<8x32xf32> to vector<8x8xf32>
    %215 = arith.truncf %214 : vector<8x8xf32> to vector<8x8xbf16>
    %cst_79 = arith.constant dense<0.000000e+00> : vector<8x8xf32>
    %216 = tpu.matmul %211, %213, %cst_79 {dimension_numbers = #tpu.dot_dimension_numbers<[1], [1], [0], [0], [0, 0, 1, 0], [], []>} : vector<8x8xbf16>, vector<8x8xbf16>, vector<8x8xf32> -> vector<8x8xf32>
    %217 = vector.broadcast %155 : vector<1x8xf32> to vector<8x8xf32>
    %218 = arith.addf %216, %217 : vector<8x8xf32>
    %cst_80 = arith.constant dense<0xFF800000> : vector<8xf32>
    %219 = vector.multi_reduction <maximumf>, %218, %cst_80 [1] : vector<8x8xf32> to vector<8xf32>
    %220 = vector.shape_cast %219 : vector<8xf32> to vector<8x1xf32>
    %221 = vector.broadcast %220 : vector<8x1xf32> to vector<8x8xf32>
    %222 = arith.subf %218, %221 : vector<8x8xf32>
    %223 = math.exp %222 : vector<8x8xf32>
    %cst_81 = arith.constant dense<0.000000e+00> : vector<8xf32>
    %224 = vector.multi_reduction <add>, %223, %cst_81 [1] : vector<8x8xf32> to vector<8xf32>
    %225 = vector.shape_cast %224 : vector<8xf32> to vector<8x1xf32>
    %226 = tpu.reciprocal %225 {approx = true} : vector<8x1xf32> -> vector<8x1xf32>
    %227 = vector.broadcast %226 : vector<8x1xf32> to vector<8x8xf32>
    %228 = arith.mulf %223, %227 : vector<8x8xf32>
    %229 = arith.truncf %228 : vector<8x8xf32> to vector<8x8xbf16>
    %cst_82 = arith.constant dense<0.000000e+00> : vector<8x8xf32>
    %230 = tpu.matmul %229, %215, %cst_82 {dimension_numbers = #tpu.dot_dimension_numbers<[1], [0], [0], [1], [0, 0, 1, 1], [], []>} : vector<8x8xbf16>, vector<8x8xbf16>, vector<8x8xf32> -> vector<8x8xf32>
    %231 = arith.truncf %230 : vector<8x8xf32> to vector<8x8xbf16>
    %c2_83 = arith.constant 2 : index
    %c0_84 = arith.constant 0 : index
    %c0_85 = arith.constant 0 : index
    %232 = vector.load %arg11[%c2_83, %c0_84, %c0_85] : memref<4x8x32xbf16, #tpu.memory_space<vmem>>, vector<1x8x32xbf16>
    %233 = vector.shape_cast %232 : vector<1x8x32xbf16> to vector<8x32xbf16>
    %cst_86 = arith.constant dense<0.000000e+00> : vector<8x32xf32>
    %234 = tpu.matmul %231, %233, %cst_86 {dimension_numbers = #tpu.dot_dimension_numbers<[1], [0], [0], [1], [0, 0, 1, 1], [], []>} : vector<8x8xbf16>, vector<8x32xbf16>, vector<8x32xf32> -> vector<8x32xf32>
    %235 = arith.addf %209, %234 : vector<8x32xf32>
    %236 = vector.extract_strided_slice %145 {offsets = [0, 24], sizes = [8, 8], strides = [1, 1]} : vector<8x32xf32> to vector<8x8xf32>
    %237 = arith.truncf %236 : vector<8x8xf32> to vector<8x8xbf16>
    %238 = vector.extract_strided_slice %156 {offsets = [0, 24], sizes = [8, 8], strides = [1, 1]} : vector<8x32xf32> to vector<8x8xf32>
    %239 = arith.truncf %238 : vector<8x8xf32> to vector<8x8xbf16>
    %240 = vector.extract_strided_slice %157 {offsets = [0, 24], sizes = [8, 8], strides = [1, 1]} : vector<8x32xf32> to vector<8x8xf32>
    %241 = arith.truncf %240 : vector<8x8xf32> to vector<8x8xbf16>
    %cst_87 = arith.constant dense<0.000000e+00> : vector<8x8xf32>
    %242 = tpu.matmul %237, %239, %cst_87 {dimension_numbers = #tpu.dot_dimension_numbers<[1], [1], [0], [0], [0, 0, 1, 0], [], []>} : vector<8x8xbf16>, vector<8x8xbf16>, vector<8x8xf32> -> vector<8x8xf32>
    %243 = vector.broadcast %155 : vector<1x8xf32> to vector<8x8xf32>
    %244 = arith.addf %242, %243 : vector<8x8xf32>
    %cst_88 = arith.constant dense<0xFF800000> : vector<8xf32>
    %245 = vector.multi_reduction <maximumf>, %244, %cst_88 [1] : vector<8x8xf32> to vector<8xf32>
    %246 = vector.shape_cast %245 : vector<8xf32> to vector<8x1xf32>
    %247 = vector.broadcast %246 : vector<8x1xf32> to vector<8x8xf32>
    %248 = arith.subf %244, %247 : vector<8x8xf32>
    %249 = math.exp %248 : vector<8x8xf32>
    %cst_89 = arith.constant dense<0.000000e+00> : vector<8xf32>
    %250 = vector.multi_reduction <add>, %249, %cst_89 [1] : vector<8x8xf32> to vector<8xf32>
    %251 = vector.shape_cast %250 : vector<8xf32> to vector<8x1xf32>
    %252 = tpu.reciprocal %251 {approx = true} : vector<8x1xf32> -> vector<8x1xf32>
    %253 = vector.broadcast %252 : vector<8x1xf32> to vector<8x8xf32>
    %254 = arith.mulf %249, %253 : vector<8x8xf32>
    %255 = arith.truncf %254 : vector<8x8xf32> to vector<8x8xbf16>
    %cst_90 = arith.constant dense<0.000000e+00> : vector<8x8xf32>
    %256 = tpu.matmul %255, %241, %cst_90 {dimension_numbers = #tpu.dot_dimension_numbers<[1], [0], [0], [1], [0, 0, 1, 1], [], []>} : vector<8x8xbf16>, vector<8x8xbf16>, vector<8x8xf32> -> vector<8x8xf32>
    %257 = arith.truncf %256 : vector<8x8xf32> to vector<8x8xbf16>
    %c3_91 = arith.constant 3 : index
    %c0_92 = arith.constant 0 : index
    %c0_93 = arith.constant 0 : index
    %258 = vector.load %arg11[%c3_91, %c0_92, %c0_93] : memref<4x8x32xbf16, #tpu.memory_space<vmem>>, vector<1x8x32xbf16>
    %259 = vector.shape_cast %258 : vector<1x8x32xbf16> to vector<8x32xbf16>
    %cst_94 = arith.constant dense<0.000000e+00> : vector<8x32xf32>
    %260 = tpu.matmul %257, %259, %cst_94 {dimension_numbers = #tpu.dot_dimension_numbers<[1], [0], [0], [1], [0, 0, 1, 1], [], []>} : vector<8x8xbf16>, vector<8x32xbf16>, vector<8x32xf32> -> vector<8x32xf32>
    %261 = arith.addf %235, %260 : vector<8x32xf32>
    %262 = vector.broadcast %158 : vector<1x32xf32> to vector<8x32xf32>
    %263 = arith.addf %261, %262 : vector<8x32xf32>
    %264 = arith.addf %263, %142 : vector<8x32xf32>
    %c0_95 = arith.constant 0 : index
    %c0_96 = arith.constant 0 : index
    %265 = vector.load %arg13[%c0_95, %c0_96] : memref<1x32xf32, #tpu.memory_space<vmem>>, vector<1x32xf32>
    %c0_97 = arith.constant 0 : index
    %c0_98 = arith.constant 0 : index
    %266 = vector.load %arg14[%c0_97, %c0_98] : memref<1x32xf32, #tpu.memory_space<vmem>>, vector<1x32xf32>
    %cst_99 = arith.constant dense<0.000000e+00> : vector<8xf32>
    %267 = vector.multi_reduction <add>, %264, %cst_99 [1] : vector<8x32xf32> to vector<8xf32>
    %268 = vector.shape_cast %267 : vector<8xf32> to vector<8x1xf32>
    %cst_100 = arith.constant 3.200000e+01 : f32
    %269 = vector.broadcast %cst_100 : f32 to vector<8x1xf32>
    %270 = arith.divf %268, %269 : vector<8x1xf32>
    %271 = vector.broadcast %270 : vector<8x1xf32> to vector<8x32xf32>
    %272 = arith.subf %264, %271 : vector<8x32xf32>
    %273 = arith.mulf %272, %272 : vector<8x32xf32>
    %cst_101 = arith.constant dense<0.000000e+00> : vector<8xf32>
    %274 = vector.multi_reduction <add>, %273, %cst_101 [1] : vector<8x32xf32> to vector<8xf32>
    %275 = vector.shape_cast %274 : vector<8xf32> to vector<8x1xf32>
    %cst_102 = arith.constant 3.200000e+01 : f32
    %276 = vector.broadcast %cst_102 : f32 to vector<8x1xf32>
    %277 = arith.divf %275, %276 : vector<8x1xf32>
    %278 = vector.broadcast %270 : vector<8x1xf32> to vector<8x32xf32>
    %279 = arith.subf %264, %278 : vector<8x32xf32>
    %cst_103 = arith.constant 9.99999974E-6 : f32
    %280 = vector.broadcast %cst_103 : f32 to vector<8x1xf32>
    %281 = arith.addf %277, %280 : vector<8x1xf32>
    %282 = math.rsqrt %281 : vector<8x1xf32>
    %283 = vector.broadcast %282 : vector<8x1xf32> to vector<8x32xf32>
    %284 = arith.mulf %279, %283 : vector<8x32xf32>
    %285 = vector.broadcast %265 : vector<1x32xf32> to vector<8x32xf32>
    %286 = arith.mulf %284, %285 : vector<8x32xf32>
    %287 = vector.broadcast %266 : vector<1x32xf32> to vector<8x32xf32>
    %288 = arith.addf %286, %287 : vector<8x32xf32>
    %c0_104 = arith.constant 0 : index
    %c0_105 = arith.constant 0 : index
    %289 = vector.load %arg16[%c0_104, %c0_105] : memref<1x128xf32, #tpu.memory_space<vmem>>, vector<1x128xf32>
    %c0_106 = arith.constant 0 : index
    %c0_107 = arith.constant 0 : index
    %290 = vector.load %arg18[%c0_106, %c0_107] : memref<1x32xf32, #tpu.memory_space<vmem>>, vector<1x32xf32>
    %291 = arith.truncf %288 : vector<8x32xf32> to vector<8x32xbf16>
    %c0_108 = arith.constant 0 : index
    %c0_109 = arith.constant 0 : index
    %292 = vector.load %arg15[%c0_108, %c0_109] : memref<32x128xbf16, #tpu.memory_space<vmem>>, vector<32x128xbf16>
    %cst_110 = arith.constant dense<0.000000e+00> : vector<8x128xf32>
    %293 = tpu.matmul %291, %292, %cst_110 {dimension_numbers = #tpu.dot_dimension_numbers<[1], [0], [0], [1], [0, 0, 1, 1], [], []>} : vector<8x32xbf16>, vector<32x128xbf16>, vector<8x128xf32> -> vector<8x128xf32>
    %294 = vector.broadcast %289 : vector<1x128xf32> to vector<8x128xf32>
    %295 = arith.addf %293, %294 : vector<8x128xf32>
    %cst_111 = arith.constant 0.000000e+00 : f32
    %296 = vector.broadcast %cst_111 : f32 to vector<8x128xf32>
    %297 = arith.maximumf %295, %296 : vector<8x128xf32>
    %298 = arith.truncf %297 : vector<8x128xf32> to vector<8x128xbf16>
    %c0_112 = arith.constant 0 : index
    %c0_113 = arith.constant 0 : index
    %299 = vector.load %arg17[%c0_112, %c0_113] : memref<128x32xbf16, #tpu.memory_space<vmem>>, vector<128x32xbf16>
    %cst_114 = arith.constant dense<0.000000e+00> : vector<8x32xf32>
    %300 = tpu.matmul %298, %299, %cst_114 {dimension_numbers = #tpu.dot_dimension_numbers<[1], [0], [0], [1], [0, 0, 1, 1], [], []>} : vector<8x128xbf16>, vector<128x32xbf16>, vector<8x32xf32> -> vector<8x32xf32>
    %301 = vector.broadcast %290 : vector<1x32xf32> to vector<8x32xf32>
    %302 = arith.addf %300, %301 : vector<8x32xf32>
    %303 = arith.addf %302, %288 : vector<8x32xf32>
    %c0_115 = arith.constant 0 : index
    %c0_116 = arith.constant 0 : index
    %304 = vector.load %arg19[%c0_115, %c0_116] : memref<1x32xf32, #tpu.memory_space<vmem>>, vector<1x32xf32>
    %c0_117 = arith.constant 0 : index
    %c0_118 = arith.constant 0 : index
    %305 = vector.load %arg20[%c0_117, %c0_118] : memref<1x32xf32, #tpu.memory_space<vmem>>, vector<1x32xf32>
    %cst_119 = arith.constant dense<0.000000e+00> : vector<8xf32>
    %306 = vector.multi_reduction <add>, %303, %cst_119 [1] : vector<8x32xf32> to vector<8xf32>
    %307 = vector.shape_cast %306 : vector<8xf32> to vector<8x1xf32>
    %cst_120 = arith.constant 3.200000e+01 : f32
    %308 = vector.broadcast %cst_120 : f32 to vector<8x1xf32>
    %309 = arith.divf %307, %308 : vector<8x1xf32>
    %310 = vector.broadcast %309 : vector<8x1xf32> to vector<8x32xf32>
    %311 = arith.subf %303, %310 : vector<8x32xf32>
    %312 = arith.mulf %311, %311 : vector<8x32xf32>
    %cst_121 = arith.constant dense<0.000000e+00> : vector<8xf32>
    %313 = vector.multi_reduction <add>, %312, %cst_121 [1] : vector<8x32xf32> to vector<8xf32>
    %314 = vector.shape_cast %313 : vector<8xf32> to vector<8x1xf32>
    %cst_122 = arith.constant 3.200000e+01 : f32
    %315 = vector.broadcast %cst_122 : f32 to vector<8x1xf32>
    %316 = arith.divf %314, %315 : vector<8x1xf32>
    %317 = vector.broadcast %309 : vector<8x1xf32> to vector<8x32xf32>
    %318 = arith.subf %303, %317 : vector<8x32xf32>
    %cst_123 = arith.constant 9.99999974E-6 : f32
    %319 = vector.broadcast %cst_123 : f32 to vector<8x1xf32>
    %320 = arith.addf %316, %319 : vector<8x1xf32>
    %321 = math.rsqrt %320 : vector<8x1xf32>
    %322 = vector.broadcast %321 : vector<8x1xf32> to vector<8x32xf32>
    %323 = arith.mulf %318, %322 : vector<8x32xf32>
    %324 = vector.broadcast %304 : vector<1x32xf32> to vector<8x32xf32>
    %325 = arith.mulf %323, %324 : vector<8x32xf32>
    %326 = vector.broadcast %305 : vector<1x32xf32> to vector<8x32xf32>
    %327 = arith.addf %325, %326 : vector<8x32xf32>
    %c0_124 = arith.constant 0 : index
    %c0_125 = arith.constant 0 : index
    %c0_126 = arith.constant 0 : index
    %328 = vector.load %arg21[%c0_124, %c0_125, %c0_126] : memref<1x8x32xf32, #tpu.memory_space<vmem>>, vector<1x8x32xf32>
    %329 = vector.shape_cast %328 : vector<1x8x32xf32> to vector<8x32xf32>
    %330 = vector.shape_cast %327 : vector<8x32xf32> to vector<1x8x32xf32>
    tpu.vector_store %arg21[%c0_124, %c0_125, %c0_126], %330 {strides = array<i32>} : memref<1x8x32xf32, #tpu.memory_space<vmem>>, vector<1x8x32xf32>,
    return
  }
  func.func @transform_0(%arg0: i32) -> (i32, i32, i32) {
    %c0_i32 = arith.constant 0 : i32
    %c0_i32_0 = arith.constant 0 : i32
    %c0_i32_1 = arith.constant 0 : i32
    return %arg0, %c0_i32, %c0_i32_0 : i32, i32, i32
  }
  func.func @transform_1(%arg0: i32) -> (i32, i32, i32) {
    %c0_i32 = arith.constant 0 : i32
    %c0_i32_0 = arith.constant 0 : i32
    %c0_i32_1 = arith.constant 0 : i32
    return %arg0, %c0_i32, %c0_i32_0 : i32, i32, i32
  }
  func.func @transform_2(%arg0: i32) -> (i32, i32, i32) {
    %c0_i32 = arith.constant 0 : i32
    %c0_i32_0 = arith.constant 0 : i32
    %c0_i32_1 = arith.constant 0 : i32
    return %arg0, %c0_i32, %c0_i32_0 : i32, i32, i32
  }
  func.func @transform_3(%arg0: i32) -> (i32, i32) {
    %c0_i32 = arith.constant 0 : i32
    %c0_i32_0 = arith.constant 0 : i32
    %c0_i32_1 = arith.constant 0 : i32
    return %c0_i32, %c0_i32_0 : i32, i32
  }
  func.func @transform_4(%arg0: i32) -> (i32, i32, i32) {
    %c0_i32 = arith.constant 0 : i32
    %c0_i32_0 = arith.constant 0 : i32
    %c0_i32_1 = arith.constant 0 : i32
    %c0_i32_2 = arith.constant 0 : i32
    return %c0_i32, %c0_i32_0, %c0_i32_1 : i32, i32, i32
  }
  func.func @transform_5(%arg0: i32) -> (i32, i32) {
    %c0_i32 = arith.constant 0 : i32
    %c0_i32_0 = arith.constant 0 : i32
    %c0_i32_1 = arith.constant 0 : i32
    return %c0_i32, %c0_i32_0 : i32, i32
  }
  func.func @transform_6(%arg0: i32) -> (i32, i32) {
    %c0_i32 = arith.constant 0 : i32
    %c0_i32_0 = arith.constant 0 : i32
    %c0_i32_1 = arith.constant 0 : i32
    return %c0_i32, %c0_i32_0 : i32, i32
  }
  func.func @transform_7(%arg0: i32) -> (i32, i32) {
    %c0_i32 = arith.constant 0 : i32
    %c0_i32_0 = arith.constant 0 : i32
    %c0_i32_1 = arith.constant 0 : i32
    return %c0_i32, %c0_i32_0 : i32, i32
  }
  func.func @transform_8(%arg0: i32) -> (i32, i32) {
    %c0_i32 = arith.constant 0 : i32
    %c0_i32_0 = arith.constant 0 : i32
    %c0_i32_1 = arith.constant 0 : i32
    return %c0_i32, %c0_i32_0 : i32, i32
  }
  func.func @transform_9(%arg0: i32) -> (i32, i32) {
    %c0_i32 = arith.constant 0 : i32
    %c0_i32_0 = arith.constant 0 : i32
    %c0_i32_1 = arith.constant 0 : i32
    return %c0_i32, %c0_i32_0 : i32, i32
  }
  func.func @transform_10(%arg0: i32) -> (i32, i32, i32) {
    %c0_i32 = arith.constant 0 : i32
    %c0_i32_0 = arith.constant 0 : i32
    %c0_i32_1 = arith.constant 0 : i32
    %c0_i32_2 = arith.constant 0 : i32
    return %c0_i32, %c0_i32_0, %c0_i32_1 : i32, i32, i32
  }
  func.func @transform_11(%arg0: i32) -> (i32, i32) {
    %c0_i32 = arith.constant 0 : i32
    %c0_i32_0 = arith.constant 0 : i32
    %c0_i32_1 = arith.constant 0 : i32
    return %c0_i32, %c0_i32_0 : i32, i32
  }
  func.func @transform_12(%arg0: i32) -> (i32, i32) {
    %c0_i32 = arith.constant 0 : i32
    %c0_i32_0 = arith.constant 0 : i32
    %c0_i32_1 = arith.constant 0 : i32
    return %c0_i32, %c0_i32_0 : i32, i32
  }
  func.func @transform_13(%arg0: i32) -> (i32, i32) {
    %c0_i32 = arith.constant 0 : i32
    %c0_i32_0 = arith.constant 0 : i32
    %c0_i32_1 = arith.constant 0 : i32
    return %c0_i32, %c0_i32_0 : i32, i32
  }
  func.func @transform_14(%arg0: i32) -> (i32, i32) {
    %c0_i32 = arith.constant 0 : i32
    %c0_i32_0 = arith.constant 0 : i32
    %c0_i32_1 = arith.constant 0 : i32
    return %c0_i32, %c0_i32_0 : i32, i32
  }
  func.func @transform_15(%arg0: i32) -> (i32, i32) {
    %c0_i32 = arith.constant 0 : i32
    %c0_i32_0 = arith.constant 0 : i32
    %c0_i32_1 = arith.constant 0 : i32
    return %c0_i32, %c0_i32_0 : i32, i32
  }
  func.func @transform_16(%arg0: i32) -> (i32, i32) {
    %c0_i32 = arith.constant 0 : i32
    %c0_i32_0 = arith.constant 0 : i32
    %c0_i32_1 = arith.constant 0 : i32
    return %c0_i32, %c0_i32_0 : i32, i32
  }
  func.func @transform_17(%arg0: i32) -> (i32, i32) {
    %c0_i32 = arith.constant 0 : i32
    %c0_i32_0 = arith.constant 0 : i32
    %c0_i32_1 = arith.constant 0 : i32
    return %c0_i32, %c0_i32_0 : i32, i32
  }
  func.func @transform_18(%arg0: i32) -> (i32, i32) {
    %c0_i32 = arith.constant 0 : i32
    %c0_i32_0 = arith.constant 0 : i32
    %c0_i32_1 = arith.constant 0 : i32
    return %c0_i32, %c0_i32_0 : i32, i32
  }
  func.func @transform_19(%arg0: i32) -> (i32, i32) {
    %c0_i32 = arith.constant 0 : i32
    %c0_i32_0 = arith.constant 0 : i32
    %c0_i32_1 = arith.constant 0 : i32
    return %c0_i32, %c0_i32_0 : i32, i32
  }
  func.func @transform_20(%arg0: i32) -> (i32, i32, i32) {
    %c0_i32 = arith.constant 0 : i32
    %c0_i32_0 = arith.constant 0 : i32
    %c0_i32_1 = arith.constant 0 : i32
    return %arg0, %c0_i32, %c0_i32_0 : i32, i32, i32
  }
}

</mosaic_0001>

<llo_original>
// kernel: _lambda_.9
$region0: #{_lambda_.9}
  #allocation0 [shape = 'u32[]', space=smem, size = 0x4, offset = 0x4, fixed_abs, tag = 'smem constant byte address 0x4 - core index']
  #allocation1 [shape = 'u32[72,128]{1,0:T(1,128)}', space=vmem, size = 0x9000, scoped, tag = 'internal scratch']
  %s0 = inlined_call_operand.vmem [shape: f32[16,32], index: 0, kind: input, shape index: {}]
  %s1 = inlined_call_operand.vmem [shape: bf16[32,128], index: 1, kind: input, shape index: {}]
  %s2 = inlined_call_operand.vmem [shape: f32[1,128], index: 2, kind: input, shape index: {}]
  %s3 = inlined_call_operand.vmem [shape: f32[16,128], index: 3, kind: output, shape index: {}]
  %s4 = sld [smem:[#allocation0]]
  $region22: #{_lambda_.9} parent=0
    _
  %s6 = ssub.s32 1, %s4
  %s7 = scalar_select 0, %s6, %s4
  // Predicated region
  $region2: #{_lambda_.9} parent=0 // pred_check
    _
  $region3: #{_lambda_.9} parent=0 // pred_check_branch
    %9 = sbr.rel (0) target = $region5
  $region4: #{_lambda_.9} parent=0 // pred_region
    _
  $region5: #{_lambda_.9} parent=0 // pred_fallthru
    _
  // Predicated region
  $region6: #{_lambda_.9} parent=0 // pred_check
    _
  $region7: #{_lambda_.9} parent=0 // pred_check_branch
    %11 = sbr.rel (0) target = $region9
  $region8: #{_lambda_.9} parent=0 // pred_region
    _
  $region9: #{_lambda_.9} parent=0 // pred_fallthru
    _
  // Predicated region
  $region10: #{_lambda_.9} parent=0 // pred_check
    _
  $region11: #{_lambda_.9} parent=0 // pred_check_branch
    %13 = sbr.rel (0) target = $region13
  $region12: #{_lambda_.9} parent=0 // pred_region
    _
  $region13: #{_lambda_.9} parent=0 // pred_fallthru
    _
  %v15 = vld [vmem:[%s0] sm:$0xff]
  %v16 = vld [vmem:[%s0 + $0x8] sm:$0xff]
  %v17 = vpack.c.bf16 %v16, %v15
  %v18 = vld [vmem:[%s1] sm:$0xf]
  %v19 = vld [vmem:[%s1 + $0x4] sm:$0xf]
  %v20 = vld [vmem:[%s1 + $0x8] sm:$0xf]
  %v21 = vld [vmem:[%s1 + $0xc] sm:$0xf]
  %v22 = vld [vmem:[%s2] sm:$0x1]
  %v24 = vperm.slane %v22, 0
  %v30 = vunpack.c.l.b16 %v18
  %v31 = vunpack.c.l.b16 %v19
  %v32 = vunpack.c.l.b16 %v20
  %v33 = vunpack.c.l.b16 %v21
  %v34 = vpack.c.b16 %v31, %v30
  %v35 = vpack.c.b16 %v33, %v32
  %vm38 = vcmask 261120
  %v40 = vsel %vm38, %v17, 0
  %42 = vmatpush.bf16.msra.mxu0 0
  %43 = vmatpush.bf16.msra.mxu0 0
  %44 = vmatpush.bf16.msra.mxu0 0
  %45 = vmatpush.bf16.msra.mxu0 0
  %46 = vmatpush.bf16.msra.mxu0 0
  %47 = vmatpush.bf16.msra.mxu0 0
  %48 = vmatpush.bf16.msra.mxu0 %v35
  %49 = vmatpush.bf16.msra.mxu0 %v34
  %50 = vmatmul.bf16.gmra.mxu0 %v40
  %v51 = vpop.f32.mrf.mxu0
  %v52 = vadd.f32 %v24, %v51
  %v53 = vpop.f32.mrf.mxu0
  %v54 = vadd.f32 %v24, %v53
  %55 = vdwg.mxu0
  %56 = vst [vmem:[%s3] sm:$0xff] %v52
  %57 = vst [vmem:[%s3 + $0x8] sm:$0xff] %v54
  // Predicated region
  $region14: #{_lambda_.9} parent=0 // pred_check
    _
  $region15: #{_lambda_.9} parent=0 // pred_check_branch
    %59 = sbr.rel (0) target = $region17
  $region16: #{_lambda_.9} parent=0 // pred_region
    _
  $region17: #{_lambda_.9} parent=0 // pred_fallthru
    _
  // Predicated region
  $region18: #{_lambda_.9} parent=0 // pred_check
    _
  $region19: #{_lambda_.9} parent=0 // pred_check_branch
    %61 = sbr.rel (0) target = $region21
  $region20: #{_lambda_.9} parent=0 // pred_region
    _
  $region21: #{_lambda_.9} parent=0 // pred_fallthru
    _

// kernel: _lambda_.5
$region0: #{_lambda_.5}
  #allocation0 [shape = 'u32[]', space=smem, size = 0x4, offset = 0x4, fixed_abs, tag = 'smem constant byte address 0x4 - core index']
  #allocation1 [shape = 'u32[72,128]{1,0:T(1,128)}', space=vmem, size = 0x9000, scoped, tag = 'internal scratch']
  %s0 = inlined_call_operand.vmem [shape: f32[2,8,32], index: 0, kind: input, shape index: {}]
  %s1 = inlined_call_operand.vmem [shape: f32[2,1,8], index: 1, kind: input, shape index: {}]
  %s2 = inlined_call_operand.vmem [shape: bf16[32,96], index: 2, kind: input, shape index: {}]
  %s3 = inlined_call_operand.vmem [shape: bf16[4,8,32], index: 3, kind: input, shape index: {}]
  %s4 = inlined_call_operand.vmem [shape: f32[1,32], index: 4, kind: input, shape index: {}]
  %s5 = inlined_call_operand.vmem [shape: f32[1,32], index: 5, kind: input, shape index: {}]
  %s6 = inlined_call_operand.vmem [shape: f32[1,32], index: 6, kind: input, shape index: {}]
  %s7 = inlined_call_operand.vmem [shape: bf16[32,128], index: 7, kind: input, shape index: {}]
  %s8 = inlined_call_operand.vmem [shape: f32[1,128], index: 8, kind: input, shape index: {}]
  %s9 = inlined_call_operand.vmem [shape: bf16[128,32], index: 9, kind: input, shape index: {}]
  %s10 = inlined_call_operand.vmem [shape: f32[1,32], index: 10, kind: input, shape index: {}]
  %s11 = inlined_call_operand.vmem [shape: f32[1,32], index: 11, kind: input, shape index: {}]
  %s12 = inlined_call_operand.vmem [shape: f32[1,32], index: 12, kind: input, shape index: {}]
  %s13 = inlined_call_operand.vmem [shape: f32[2,8,32], index: 13, kind: output, shape index: {}]
  %s14 = sld [smem:[#allocation0]]
  $region85: #{_lambda_.5} parent=0
    _
  %s16 = ssub.s32 1, %s14
  %s17 = scalar_select 0, %s16, %s14
  loop: start=0, step=1, limit=4
  $region2: #{_lambda_.5} parent=0 // loop_pre_header
    _
  $region3: #{_lambda_.5} parent=0 // loop_header
    %s19 = sphi 0, %s23
    %p20 = scmp.ge.s32.totalorder %s19, 4
    %s29 = sphi 0, %s31
    %s32 = sphi 0, %s29
    %s33 = sphi 0, %s32
    %s49 = sphi 0, %s33
    %s55 = sphi 0, %s57
    %s58 = sphi 0, %s55
    %s59 = sphi 0, %s58
    %s75 = sphi 0, %s59
    %s79 = sphi 0, %s79
    %s81 = sphi 0, %s79
    %s82 = sphi 0, %s81
    %s96 = sphi 0, %s82
    %s100 = sphi 0, %s100
    %s102 = sphi 0, %s100
    %s103 = sphi 0, %s102
    %s117 = sphi 0, %s103
    %s121 = sphi 0, %s121
    %s123 = sphi 0, %s121
    %s124 = sphi 0, %s123
    %s138 = sphi 0, %s124
    %s142 = sphi 0, %s142
    %s144 = sphi 0, %s142
    %s145 = sphi 0, %s144
    %s159 = sphi 0, %s145
    %s163 = sphi 0, %s163
    %s165 = sphi 0, %s163
    %s166 = sphi 0, %s165
    %s180 = sphi 0, %s166
    %s184 = sphi 0, %s184
    %s186 = sphi 0, %s184
    %s187 = sphi 0, %s186
    %s201 = sphi 0, %s187
    %s205 = sphi 0, %s205
    %s207 = sphi 0, %s205
    %s208 = sphi 0, %s207
    %s222 = sphi 0, %s208
    %s226 = sphi 0, %s226
    %s228 = sphi 0, %s226
    %s229 = sphi 0, %s228
    %s243 = sphi 0, %s229
    %s247 = sphi 0, %s247
    %s249 = sphi 0, %s247
    %s250 = sphi 0, %s249
    %s264 = sphi 0, %s250
    %s268 = sphi 0, %s268
    %s270 = sphi 0, %s268
    %s271 = sphi 0, %s270
    %s285 = sphi 0, %s271
    %s289 = sphi 0, %s289
    %s291 = sphi 0, %s289
    %s292 = sphi 0, %s291
    %s306 = sphi 0, %s292
    %s312 = sphi 0, %s314
    %s315 = sphi 0, %s312
    %s316 = sphi 0, %s315
    %s332 = sphi 0, %s316
  $region4: #{_lambda_.5} parent=0 // loop_header_branch
    %22 = sbr.rel (%p20) target = $region8
  $region5: #{_lambda_.5} parent=0 // loop_body
    %s24 = ssub.s32 %s19, 1
    %s25 = ssub.s32 %s19, 2
    %s26 = sadd.s32 %s19, 1
    %s27 = ssub.s32 %s19, %s26
    %p28 = scmp.eq.s32.totalorder %s27, 0
    %s30 = sadd.s32 %s29, 1
    %s31 = scalar_select %p28, %s29, %s30
    %p34 = pneg %p28
    %p35 = scmp.eq.s32.totalorder %s19, 1
    %p36 = por %p34, %p35
    %p37 = scmp.ne.s32.totalorder %s29, %s32
    %p38 = scmp.eq.s32.totalorder %s19, 0
    %p39 = por %p37, %p38
    %p40 = scmp.ne.s32.totalorder %s29, %s32
    %p41 = scmp.eq.s32.totalorder %s24, 1
    %p42 = por %p40, %p41
    %p43 = scmp.ne.s32.totalorder %s32, %s33
    %p44 = scmp.eq.s32.totalorder %s24, 0
    %p45 = por %p43, %p44
    %p46 = scmp.ne.s32.totalorder %s32, %s33
    %p47 = scmp.eq.s32.totalorder %s25, 1
    %p48 = por %p46, %p47
    %p50 = scmp.ne.s32.totalorder %s33, %s49
    %p51 = scmp.eq.s32.totalorder %s25, 0
    %p52 = por %p50, %p51
    %s53 = ssub.s32 %s19, %s26
    %p54 = scmp.eq.s32.totalorder %s53, 0
    %s56 = sadd.s32 %s55, 1
    %s57 = scalar_select %p54, %s55, %s56
    %p60 = pneg %p54
    %p61 = scmp.eq.s32.totalorder %s19, 1
    %p62 = por %p60, %p61
    %p63 = scmp.ne.s32.totalorder %s55, %s58
    %p64 = scmp.eq.s32.totalorder %s19, 0
    %p65 = por %p63, %p64
    %p66 = scmp.ne.s32.totalorder %s55, %s58
    %p67 = scmp.eq.s32.totalorder %s24, 1
    %p68 = por %p66, %p67
    %p69 = scmp.ne.s32.totalorder %s58, %s59
    %p70 = scmp.eq.s32.totalorder %s24, 0
    %p71 = por %p69, %p70
    %p72 = scmp.ne.s32.totalorder %s58, %s59
    %p73 = scmp.eq.s32.totalorder %s25, 1
    %p74 = por %p72, %p73
    %p76 = scmp.ne.s32.totalorder %s59, %s75
    %p77 = scmp.eq.s32.totalorder %s25, 0
    %p78 = por %p76, %p77
    %s80 = sadd.s32 %s79, 1
    %p83 = scmp.eq.s32.totalorder %s19, 1
    %p84 = scmp.ne.s32.totalorder %s79, %s81
    %p85 = scmp.eq.s32.totalorder %s19, 0
    %p86 = por %p84, %p85
    %p87 = scmp.ne.s32.totalorder %s79, %s81
    %p88 = scmp.eq.s32.totalorder %s24, 1
    %p89 = por %p87, %p88
    %p90 = scmp.ne.s32.totalorder %s81, %s82
    %p91 = scmp.eq.s32.totalorder %s24, 0
    %p92 = por %p90, %p91
    %p93 = scmp.ne.s32.totalorder %s81, %s82
    %p94 = scmp.eq.s32.totalorder %s25, 1
    %p95 = por %p93, %p94
    %p97 = scmp.ne.s32.totalorder %s82, %s96
    %p98 = scmp.eq.s32.totalorder %s25, 0
    %p99 = por %p97, %p98
    %s101 = sadd.s32 %s100, 1
    %p104 = scmp.eq.s32.totalorder %s19, 1
    %p105 = scmp.ne.s32.totalorder %s100, %s102
    %p106 = scmp.eq.s32.totalorder %s19, 0
    %p107 = por %p105, %p106
    %p108 = scmp.ne.s32.totalorder %s100, %s102
    %p109 = scmp.eq.s32.totalorder %s24, 1
    %p110 = por %p108, %p109
    %p111 = scmp.ne.s32.totalorder %s102, %s103
    %p112 = scmp.eq.s32.totalorder %s24, 0
    %p113 = por %p111, %p112
    %p114 = scmp.ne.s32.totalorder %s102, %s103
    %p115 = scmp.eq.s32.totalorder %s25, 1
    %p116 = por %p114, %p115
    %p118 = scmp.ne.s32.totalorder %s103, %s117
    %p119 = scmp.eq.s32.totalorder %s25, 0
    %p120 = por %p118, %p119
    %s122 = sadd.s32 %s121, 1
    %p125 = scmp.eq.s32.totalorder %s19, 1
    %p126 = scmp.ne.s32.totalorder %s121, %s123
    %p127 = scmp.eq.s32.totalorder %s19, 0
    %p128 = por %p126, %p127
    %p129 = scmp.ne.s32.totalorder %s121, %s123
    %p130 = scmp.eq.s32.totalorder %s24, 1
    %p131 = por %p129, %p130
    %p132 = scmp.ne.s32.totalorder %s123, %s124
    %p133 = scmp.eq.s32.totalorder %s24, 0
    %p134 = por %p132, %p133
    %p135 = scmp.ne.s32.totalorder %s123, %s124
    %p136 = scmp.eq.s32.totalorder %s25, 1
    %p137 = por %p135, %p136
    %p139 = scmp.ne.s32.totalorder %s124, %s138
    %p140 = scmp.eq.s32.totalorder %s25, 0
    %p141 = por %p139, %p140
    %s143 = sadd.s32 %s142, 1
    %p146 = scmp.eq.s32.totalorder %s19, 1
    %p147 = scmp.ne.s32.totalorder %s142, %s144
    %p148 = scmp.eq.s32.totalorder %s19, 0
    %p149 = por %p147, %p148
    %p150 = scmp.ne.s32.totalorder %s142, %s144
    %p151 = scmp.eq.s32.totalorder %s24, 1
    %p152 = por %p150, %p151
    %p153 = scmp.ne.s32.totalorder %s144, %s145
    %p154 = scmp.eq.s32.totalorder %s24, 0
    %p155 = por %p153, %p154
    %p156 = scmp.ne.s32.totalorder %s144, %s145
    %p157 = scmp.eq.s32.totalorder %s25, 1
    %p158 = por %p156, %p157
    %p160 = scmp.ne.s32.totalorder %s145, %s159
    %p161 = scmp.eq.s32.totalorder %s25, 0
    %p162 = por %p160, %p161
    %s164 = sadd.s32 %s163, 1
    %p167 = scmp.eq.s32.totalorder %s19, 1
    %p168 = scmp.ne.s32.totalorder %s163, %s165
    %p169 = scmp.eq.s32.totalorder %s19, 0
    %p170 = por %p168, %p169
    %p171 = scmp.ne.s32.totalorder %s163, %s165
    %p172 = scmp.eq.s32.totalorder %s24, 1
    %p173 = por %p171, %p172
    %p174 = scmp.ne.s32.totalorder %s165, %s166
    %p175 = scmp.eq.s32.totalorder %s24, 0
    %p176 = por %p174, %p175
    %p177 = scmp.ne.s32.totalorder %s165, %s166
    %p178 = scmp.eq.s32.totalorder %s25, 1
    %p179 = por %p177, %p178
    %p181 = scmp.ne.s32.totalorder %s166, %s180
    %p182 = scmp.eq.s32.totalorder %s25, 0
    %p183 = por %p181, %p182
    %s185 = sadd.s32 %s184, 1
    %p188 = scmp.eq.s32.totalorder %s19, 1
    %p189 = scmp.ne.s32.totalorder %s184, %s186
    %p190 = scmp.eq.s32.totalorder %s19, 0
    %p191 = por %p189, %p190
    %p192 = scmp.ne.s32.totalorder %s184, %s186
    %p193 = scmp.eq.s32.totalorder %s24, 1
    %p194 = por %p192, %p193
    %p195 = scmp.ne.s32.totalorder %s186, %s187
    %p196 = scmp.eq.s32.totalorder %s24, 0
    %p197 = por %p195, %p196
    %p198 = scmp.ne.s32.totalorder %s186, %s187
    %p199 = scmp.eq.s32.totalorder %s25, 1
    %p200 = por %p198, %p199
    %p202 = scmp.ne.s32.totalorder %s187, %s201
    %p203 = scmp.eq.s32.totalorder %s25, 0
    %p204 = por %p202, %p203
    %s206 = sadd.s32 %s205, 1
    %p209 = scmp.eq.s32.totalorder %s19, 1
    %p210 = scmp.ne.s32.totalorder %s205, %s207
    %p211 = scmp.eq.s32.totalorder %s19, 0
    %p212 = por %p210, %p211
    %p213 = scmp.ne.s32.totalorder %s205, %s207
    %p214 = scmp.eq.s32.totalorder %s24, 1
    %p215 = por %p213, %p214
    %p216 = scmp.ne.s32.totalorder %s207, %s208
    %p217 = scmp.eq.s32.totalorder %s24, 0
    %p218 = por %p216, %p217
    %p219 = scmp.ne.s32.totalorder %s207, %s208
    %p220 = scmp.eq.s32.totalorder %s25, 1
    %p221 = por %p219, %p220
    %p223 = scmp.ne.s32.totalorder %s208, %s222
    %p224 = scmp.eq.s32.totalorder %s25, 0
    %p225 = por %p223, %p224
    %s227 = sadd.s32 %s226, 1
    %p230 = scmp.eq.s32.totalorder %s19, 1
    %p231 = scmp.ne.s32.totalorder %s226, %s228
    %p232 = scmp.eq.s32.totalorder %s19, 0
    %p233 = por %p231, %p232
    %p234 = scmp.ne.s32.totalorder %s226, %s228
    %p235 = scmp.eq.s32.totalorder %s24, 1
    %p236 = por %p234, %p235
    %p237 = scmp.ne.s32.totalorder %s228, %s229
    %p238 = scmp.eq.s32.totalorder %s24, 0
    %p239 = por %p237, %p238
    %p240 = scmp.ne.s32.totalorder %s228, %s229
    %p241 = scmp.eq.s32.totalorder %s25, 1
    %p242 = por %p240, %p241
    %p244 = scmp.ne.s32.totalorder %s229, %s243
    %p245 = scmp.eq.s32.totalorder %s25, 0
    %p246 = por %p244, %p245
    %s248 = sadd.s32 %s247, 1
    %p251 = scmp.eq.s32.totalorder %s19, 1
    %p252 = scmp.ne.s32.totalorder %s247, %s249
    %p253 = scmp.eq.s32.totalorder %s19, 0
    %p254 = por %p252, %p253
    %p255 = scmp.ne.s32.totalorder %s247, %s249
    %p256 = scmp.eq.s32.totalorder %s24, 1
    %p257 = por %p255, %p256
    %p258 = scmp.ne.s32.totalorder %s249, %s250
    %p259 = scmp.eq.s32.totalorder %s24, 0
    %p260 = por %p258, %p259
    %p261 = scmp.ne.s32.totalorder %s249, %s250
    %p262 = scmp.eq.s32.totalorder %s25, 1
    %p263 = por %p261, %p262
    %p265 = scmp.ne.s32.totalorder %s250, %s264
    %p266 = scmp.eq.s32.totalorder %s25, 0
    %p267 = por %p265, %p266
    %s269 = sadd.s32 %s268, 1
    %p272 = scmp.eq.s32.totalorder %s19, 1
    %p273 = scmp.ne.s32.totalorder %s268, %s270
    %p274 = scmp.eq.s32.totalorder %s19, 0
    %p275 = por %p273, %p274
    %p276 = scmp.ne.s32.totalorder %s268, %s270
    %p277 = scmp.eq.s32.totalorder %s24, 1
    %p278 = por %p276, %p277
    %p279 = scmp.ne.s32.totalorder %s270, %s271
    %p280 = scmp.eq.s32.totalorder %s24, 0
    %p281 = por %p279, %p280
    %p282 = scmp.ne.s32.totalorder %s270, %s271
    %p283 = scmp.eq.s32.totalorder %s25, 1
    %p284 = por %p282, %p283
    %p286 = scmp.ne.s32.totalorder %s271, %s285
    %p287 = scmp.eq.s32.totalorder %s25, 0
    %p288 = por %p286, %p287
    %s290 = sadd.s32 %s289, 1
    %p293 = scmp.eq.s32.totalorder %s19, 1
    %p294 = scmp.ne.s32.totalorder %s289, %s291
    %p295 = scmp.eq.s32.totalorder %s19, 0
    %p296 = por %p294, %p295
    %p297 = scmp.ne.s32.totalorder %s289, %s291
    %p298 = scmp.eq.s32.totalorder %s24, 1
    %p299 = por %p297, %p298
    %p300 = scmp.ne.s32.totalorder %s291, %s292
    %p301 = scmp.eq.s32.totalorder %s24, 0
    %p302 = por %p300, %p301
    %p303 = scmp.ne.s32.totalorder %s291, %s292
    %p304 = scmp.eq.s32.totalorder %s25, 1
    %p305 = por %p303, %p304
    %p307 = scmp.ne.s32.totalorder %s292, %s306
    %p308 = scmp.eq.s32.totalorder %s25, 0
    %p309 = por %p307, %p308
    %s310 = ssub.s32 %s19, %s26
    %p311 = scmp.eq.s32.totalorder %s310, 0
    %s313 = sadd.s32 %s312, 1
    %s314 = scalar_select %p311, %s312, %s313
    %p317 = pneg %p311
    %p318 = scmp.eq.s32.totalorder %s19, 1
    %p319 = por %p317, %p318
    %p320 = scmp.ne.s32.totalorder %s312, %s315
    %p321 = scmp.eq.s32.totalorder %s19, 0
    %p322 = por %p320, %p321
    %p323 = scmp.ne.s32.totalorder %s312, %s315
    %p324 = scmp.eq.s32.totalorder %s24, 1
    %p325 = por %p323, %p324
    %p326 = scmp.ne.s32.totalorder %s315, %s316
    %p327 = scmp.eq.s32.totalorder %s24, 0
    %p328 = por %p326, %p327
    %p329 = scmp.ne.s32.totalorder %s315, %s316
    %p330 = scmp.eq.s32.totalorder %s25, 1
    %p331 = por %p329, %p330
    %p333 = scmp.ne.s32.totalorder %s316, %s332
    %p334 = scmp.eq.s32.totalorder %s25, 0
    %p335 = por %p333, %p334
    %p336 = scmp.le.s32.totalorder 1, %s19
    %p337 = scmp.lt.s32.totalorder %s19, 3
    %p338 = pnand %p336, %p337
    %p339 = pneg %p338
    // Predicated region
    $region9: #{_lambda_.5} parent=5 // pred_check
      _
    $region10: #{_lambda_.5} parent=5 // pred_check_branch
      %341 = sbr.rel (%p338) target = $region12
    $region11: #{_lambda_.5} parent=5 // pred_region
      %s342 = ssub.s32 %s19, 1
      // Predicated region
      $region13: #{_lambda_.5} parent=11 // pred_check
        %p343 = pneg %p92
      $region14: #{_lambda_.5} parent=11 // pred_check_branch
        %345 = sbr.rel (%p343) target = $region16
      $region15: #{_lambda_.5} parent=11 // pred_region
        _
      $region16: #{_lambda_.5} parent=11 // pred_fallthru
        _
      // Predicated region
      $region17: #{_lambda_.5} parent=11 // pred_check
        %p346 = pneg %p113
      $region18: #{_lambda_.5} parent=11 // pred_check_branch
        %348 = sbr.rel (%p346) target = $region20
      $region19: #{_lambda_.5} parent=11 // pred_region
        _
      $region20: #{_lambda_.5} parent=11 // pred_fallthru
        _
      // Predicated region
      $region21: #{_lambda_.5} parent=11 // pred_check
        %p349 = pneg %p134
      $region22: #{_lambda_.5} parent=11 // pred_check_branch
        %351 = sbr.rel (%p349) target = $region24
      $region23: #{_lambda_.5} parent=11 // pred_region
        _
      $region24: #{_lambda_.5} parent=11 // pred_fallthru
        _
      // Predicated region
      $region25: #{_lambda_.5} parent=11 // pred_check
        %p352 = pneg %p155
      $region26: #{_lambda_.5} parent=11 // pred_check_branch
        %354 = sbr.rel (%p352) target = $region28
      $region27: #{_lambda_.5} parent=11 // pred_region
        _
      $region28: #{_lambda_.5} parent=11 // pred_fallthru
        _
      // Predicated region
      $region29: #{_lambda_.5} parent=11 // pred_check
        %p355 = pneg %p176
      $region30: #{_lambda_.5} parent=11 // pred_check_branch
        %357 = sbr.rel (%p355) target = $region32
      $region31: #{_lambda_.5} parent=11 // pred_region
        _
      $region32: #{_lambda_.5} parent=11 // pred_fallthru
        _
      // Predicated region
      $region33: #{_lambda_.5} parent=11 // pred_check
        %p358 = pneg %p197
      $region34: #{_lambda_.5} parent=11 // pred_check_branch
        %360 = sbr.rel (%p358) target = $region36
      $region35: #{_lambda_.5} parent=11 // pred_region
        _
      $region36: #{_lambda_.5} parent=11 // pred_fallthru
        _
      // Predicated region
      $region37: #{_lambda_.5} parent=11 // pred_check
        %p361 = pneg %p218
      $region38: #{_lambda_.5} parent=11 // pred_check_branch
        %363 = sbr.rel (%p361) target = $region40
      $region39: #{_lambda_.5} parent=11 // pred_region
        _
      $region40: #{_lambda_.5} parent=11 // pred_fallthru
        _
      // Predicated region
      $region41: #{_lambda_.5} parent=11 // pred_check
        %p364 = pneg %p239
      $region42: #{_lambda_.5} parent=11 // pred_check_branch
        %366 = sbr.rel (%p364) target = $region44
      $region43: #{_lambda_.5} parent=11 // pred_region
        _
      $region44: #{_lambda_.5} parent=11 // pred_fallthru
        _
      // Predicated region
      $region45: #{_lambda_.5} parent=11 // pred_check
        %p367 = pneg %p260
      $region46: #{_lambda_.5} parent=11 // pred_check_branch
        %369 = sbr.rel (%p367) target = $region48
      $region47: #{_lambda_.5} parent=11 // pred_region
        _
      $region48: #{_lambda_.5} parent=11 // pred_fallthru
        _
      // Predicated region
      $region49: #{_lambda_.5} parent=11 // pred_check
        %p370 = pneg %p281
      $region50: #{_lambda_.5} parent=11 // pred_check_branch
        %372 = sbr.rel (%p370) target = $region52
      $region51: #{_lambda_.5} parent=11 // pred_region
        _
      $region52: #{_lambda_.5} parent=11 // pred_fallthru
        _
      // Predicated region
      $region53: #{_lambda_.5} parent=11 // pred_check
        %p373 = pneg %p302
      $region54: #{_lambda_.5} parent=11 // pred_check_branch
        %375 = sbr.rel (%p373) target = $region56
      $region55: #{_lambda_.5} parent=11 // pred_region
        _
      $region56: #{_lambda_.5} parent=11 // pred_fallthru
        _
    $region12: #{_lambda_.5} parent=5 // pred_fallthru
      _
    %p376 = scmp.lt.s32.totalorder %s19, 2
    // Predicated region
    $region57: #{_lambda_.5} parent=5 // pred_check
      %p377 = pneg %p376
    $region58: #{_lambda_.5} parent=5 // pred_check_branch
      %379 = sbr.rel (%p377) target = $region60
    $region59: #{_lambda_.5} parent=5 // pred_region
      // Predicated region
      $region61: #{_lambda_.5} parent=59 // pred_check
        %p380 = pneg %p39
      $region62: #{_lambda_.5} parent=59 // pred_check_branch
        %382 = sbr.rel (%p380) target = $region64
      $region63: #{_lambda_.5} parent=59 // pred_region
        %p383 = scmp.lt.s32.totalorder %s19, 1
        %s384 = scalar_select %p383, %s19, 1
        %s385 = smul.addr %s384, 8
        %s386 = scalar_lea.vmem %s0, %s385
      $region64: #{_lambda_.5} parent=59 // pred_fallthru
        _
      // Predicated region
      $region65: #{_lambda_.5} parent=59 // pred_check
        %p387 = pneg %p65
      $region66: #{_lambda_.5} parent=59 // pred_check_branch
        %389 = sbr.rel (%p387) target = $region68
      $region67: #{_lambda_.5} parent=59 // pred_region
        %p390 = scmp.lt.s32.totalorder %s19, 1
        %s391 = scalar_select %p390, %s19, 1
        %s392 = scalar_lea.vmem %s1, %s391
      $region68: #{_lambda_.5} parent=59 // pred_fallthru
        _
    $region60: #{_lambda_.5} parent=5 // pred_fallthru
      _
    %p393 = scmp.le.s32.totalorder 1, %s19
    %p394 = scmp.lt.s32.totalorder %s19, 3
    %p395 = pnand %p393, %p394
    %p396 = pneg %p395
    // Predicated region
    $region69: #{_lambda_.5} parent=5 // pred_check
      _
    $region70: #{_lambda_.5} parent=5 // pred_check_branch
      %398 = sbr.rel (%p395) target = $region72
    $region71: #{_lambda_.5} parent=5 // pred_region
      %s399 = ssub.s32 %s19, 1
      %p400 = scmp.lt.s32.totalorder %s24, 1
      %s401 = scalar_select %p400, %s24, 1
      %s402 = smul.addr %s401, 8
      %s403 = scalar_lea.vmem %s0, %s402
      %p404 = pneg %p45
      %p405 = pneg %p42
      %p406 = scmp.lt.s32.totalorder %s24, 1
      %s407 = scalar_select %p406, %s24, 1
      %s408 = scalar_lea.vmem %s1, %s407
      %p409 = pneg %p71
      %p410 = pneg %p68
      %p411 = pneg %p92
      %p412 = pneg %p89
      %p413 = pneg %p113
      %p414 = pneg %p110
      %p415 = pneg %p134
      %p416 = pneg %p131
      %p417 = pneg %p155
      %p418 = pneg %p152
      %p419 = pneg %p176
      %p420 = pneg %p173
      %p421 = pneg %p197
      %p422 = pneg %p194
      %p423 = pneg %p218
      %p424 = pneg %p215
      %p425 = pneg %p239
      %p426 = pneg %p236
      %p427 = pneg %p260
      %p428 = pneg %p257
      %p429 = pneg %p281
      %p430 = pneg %p278
      %p431 = pneg %p302
      %p432 = pneg %p299
      %p433 = pneg %p328
      %p434 = pneg %p325
      %p435 = scmp.lt.s32.totalorder %s24, 1
      %s436 = scalar_select %p435, %s24, 1
      %s437 = smul.addr %s436, 8
      %s438 = scalar_lea.vmem %s13, %s437
      %p439 = scmp.lt.s32.totalorder %s24, 1
      %s440 = scalar_select %p439, %s24, 1
      %s441 = smul.addr %s440, 8
      %s442 = scalar_lea.vmem %s0, %s441
      %p443 = scmp.lt.s32.totalorder %s24, 1
      %s444 = scalar_select %p443, %s24, 1
      %s445 = scalar_lea.vmem %s1, %s444
      %p446 = scmp.lt.s32.totalorder %s24, 1
      %s447 = scalar_select %p446, %s24, 1
      %s448 = smul.addr %s447, 8
      %s449 = scalar_lea.vmem %s13, %s448
      %v451 = vld [vmem:[%s442] sm:$0xff]
      %v452 = vpack.c.bf16 %v451, %v451
      %v453 = vld [vmem:[%s2] sm:$0xf]
      %v454 = vld [vmem:[%s2 + $0x4] sm:$0xf]
      %v455 = vld [vmem:[%s2 + $0x8] sm:$0xf]
      %v456 = vld [vmem:[%s2 + $0xc] sm:$0xf]
      %v461 = vunpack.c.l.b16 %v453
      %v462 = vunpack.c.l.b16 %v454
      %v463 = vunpack.c.l.b16 %v455
      %v464 = vunpack.c.l.b16 %v456
      %v465 = vpack.c.b16 %v462, %v461
      %v466 = vpack.c.b16 %v464, %v463
      %vm469 = vcmask 261120
      %v471 = vsel %vm469, %v452, 0
      %473 = vmatpush.bf16.msra.mxu0 0
      %474 = vmatpush.bf16.msra.mxu0 0
      %475 = vmatpush.bf16.msra.mxu0 0
      %476 = vmatpush.bf16.msra.mxu0 0
      %477 = vmatpush.bf16.msra.mxu0 0
      %478 = vmatpush.bf16.msra.mxu0 0
      %479 = vmatpush.bf16.msra.mxu0 %v466
      %480 = vmatpush.bf16.msra.mxu0 %v465
      %481 = vmatmul.bf16.gmra.mxu0 %v471
      %v482 = vpop.f32.mrf.mxu0
      %v483 = vadd.f32 0.0, %v482
      %v484 = vpop.f32.mrf.mxu0
      %485 = vdwg.mxu0
      %v486 = vld [vmem:[%s445] sm:$0x1]
      %vm487 = vcmp.eq.f32.partialorder %v486, 0.0
      %v488 = vsel %vm487, -1e+20, 0.0
      %v489 = vld [vmem:[%s4] sm:$0x1]
      %v490 = vpack.c.bf16 %v483, %v483
      %v492 = vperm.slane %v488, 0
      %495 = vrot.lane.b32.xlu0 %v490, 96
      %v496 = vpop.permute.xlu0 %495
      %vm497 = vcmask 64512
      %v499 = vsel %vm497, %v490, 0
      %v502 = vsel %vm497, %v496, 0
      %504 = vmatpush.bf16.xpose.msra.mxu0 0
      %505 = vmatpush.bf16.xpose.msra.mxu0 0
      %506 = vmatpush.bf16.xpose.msra.mxu0 0
      %507 = vmatpush.bf16.xpose.msra.mxu0 0
      %508 = vmatpush.bf16.xpose.msra.mxu0 0
      %509 = vmatpush.bf16.xpose.msra.mxu0 0
      %510 = vmatpush.bf16.xpose.msra.mxu0 0
      %511 = vmatpush.bf16.xpose.msra.mxu0 %v502
      %512 = vmatmul.bf16.gmra.mxu0 %v499
      %v513 = vpop.f32.mrf.mxu0
      %v514 = vadd.f32 %v492, %v513
      %v515 = vpop.f32.mrf.mxu0
      %516 = vdwg.mxu0
      %v517 = vsel %vm497, %v514, -inf
      %518 = vmax.xlane.f32.xlu0 %v517
      %v519 = vpop.xlane.xlu0 %518
      %v520 = vsub.f32 %v514, %v519
      %v521 = vmul.f32 %v520, 1.442695
      %v522 = vpow.pop %v521
      %v523 = vsel %vm497, %v522, 0.0
      %524 = vadd.xlane.f32.xlu0 %v523
      %v525 = vpop.xlane.xlu0 %524
      %v526 = vrcp.pop %v525
      %v527 = vmul.f32 %v522, %v526
      %v528 = vpack.c.bf16 %v527, %v527
      %529 = vrot.lane.b32.xlu0 %v490, 64
      %v530 = vpop.permute.xlu0 %529
      %v532 = vsel %vm497, %v528, 0
      %vm534 = vcmask 1043456
      %v536 = vsel %vm534, %v530, 0
      %538 = vmatpush.bf16.msra.mxu0 0
      %539 = vmatpush.bf16.msra.mxu0 0
      %540 = vmatpush.bf16.msra.mxu0 0
      %541 = vmatpush.bf16.msra.mxu0 0
      %542 = vmatpush.bf16.msra.mxu0 0
      %543 = vmatpush.bf16.msra.mxu0 0
      %544 = vmatpush.bf16.msra.mxu0 0
      %545 = vmatpush.bf16.msra.mxu0 %v536
      %546 = vmatmul.bf16.gmra.mxu0 %v532
      %v547 = vpop.f32.mrf.mxu0
      %v548 = vadd.f32 0.0, %v547
      %v549 = vpop.f32.mrf.mxu0
      %550 = vdwg.mxu0
      %v551 = vpack.c.bf16 %v548, %v548
      %v552 = vld [vmem:[%s3] sm:$0xf]
      %553 = vrot.lane.b32.xlu0 %v490, 120
      %v554 = vpop.permute.xlu0 %553
      %555 = vrot.lane.b32.xlu0 %v490, 88
      %v556 = vpop.permute.xlu0 %555
      %v558 = vsel %vm497, %v554, 0
      %v561 = vsel %vm497, %v556, 0
      %563 = vmatpush.bf16.xpose.msra.mxu0 0
      %564 = vmatpush.bf16.xpose.msra.mxu0 0
      %565 = vmatpush.bf16.xpose.msra.mxu0 0
      %566 = vmatpush.bf16.xpose.msra.mxu0 0
      %567 = vmatpush.bf16.xpose.msra.mxu0 0
      %568 = vmatpush.bf16.xpose.msra.mxu0 0
      %569 = vmatpush.bf16.xpose.msra.mxu0 0
      %570 = vmatpush.bf16.xpose.msra.mxu0 %v561
      %571 = vmatmul.bf16.gmra.mxu0 %v558
      %v572 = vpop.f32.mrf.mxu0
      %v573 = vadd.f32 %v492, %v572
      %v574 = vpop.f32.mrf.mxu0
      %575 = vdwg.mxu0
      %v576 = vsel %vm497, %v573, -inf
      %577 = vmax.xlane.f32.xlu0 %v576
      %v578 = vpop.xlane.xlu0 %577
      %v579 = vsub.f32 %v573, %v578
      %v580 = vmul.f32 %v579, 1.442695
      %v581 = vpow.pop %v580
      %v582 = vsel %vm497, %v581, 0.0
      %583 = vadd.xlane.f32.xlu0 %v582
      %v584 = vpop.xlane.xlu0 %583
      %v585 = vrcp.pop %v584
      %v586 = vmul.f32 %v581, %v585
      %v587 = vpack.c.bf16 %v586, %v586
      %588 = vrot.lane.b32.xlu0 %v490, 56
      %v589 = vpop.permute.xlu0 %588
      %v591 = vsel %vm497, %v587, 0
      %v594 = vsel %vm534, %v589, 0
      %596 = vmatpush.bf16.msra.mxu0 0
      %597 = vmatpush.bf16.msra.mxu0 0
      %598 = vmatpush.bf16.msra.mxu0 0
      %599 = vmatpush.bf16.msra.mxu0 0
      %600 = vmatpush.bf16.msra.mxu0 0
      %601 = vmatpush.bf16.msra.mxu0 0
      %602 = vmatpush.bf16.msra.mxu0 0
      %603 = vmatpush.bf16.msra.mxu0 %v594
      %604 = vmatmul.bf16.gmra.mxu0 %v591
      %v605 = vpop.f32.mrf.mxu0
      %v606 = vadd.f32 0.0, %v605
      %v607 = vpop.f32.mrf.mxu0
      %608 = vdwg.mxu0
      %v609 = vpack.c.bf16 %v606, %v606
      %s610 = scalar_lea.vmem %s3, 4
      %v611 = vld [vmem:[%s610] sm:$0xf]
      %v613 = vsel %vm497, %v609, 0
      %v616 = vsel %vm534, %v611, 0
      %618 = vmatpush.bf16.msra.mxu0 0
      %619 = vmatpush.bf16.msra.mxu0 0
      %620 = vmatpush.bf16.msra.mxu0 0
      %621 = vmatpush.bf16.msra.mxu0 0
      %622 = vmatpush.bf16.msra.mxu0 0
      %623 = vmatpush.bf16.msra.mxu0 0
      %624 = vmatpush.bf16.msra.mxu0 0
      %625 = vmatpush.bf16.msra.mxu0 %v616
      %626 = vmatmul.bf16.gmra.mxu0 %v613
      %v627 = vpop.f32.mrf.mxu0
      %v628 = vadd.f32 0.0, %v627
      %v629 = vpop.f32.mrf.mxu0
      %630 = vdwg.mxu0
      %v632 = vsel %vm497, %v551, 0
      %v635 = vsel %vm534, %v552, 0
      %637 = vmatpush.bf16.msra.mxu0 0
      %638 = vmatpush.bf16.msra.mxu0 0
      %639 = vmatpush.bf16.msra.mxu0 0
      %640 = vmatpush.bf16.msra.mxu0 0
      %641 = vmatpush.bf16.msra.mxu0 0
      %642 = vmatpush.bf16.msra.mxu0 0
      %643 = vmatpush.bf16.msra.mxu0 0
      %644 = vmatpush.bf16.msra.mxu0 %v635
      %645 = vmatmul.bf16.gmra.mxu0 %v632
      %v646 = vpop.f32.mrf.mxu0
      %v647 = vadd.f32 %v628, %v646
      %v648 = vpop.f32.mrf.mxu0
      %649 = vdwg.mxu0
      %650 = vrot.lane.b32.xlu0 %v490, 112
      %v651 = vpop.permute.xlu0 %650
      %652 = vrot.lane.b32.xlu0 %v490, 80
      %v653 = vpop.permute.xlu0 %652
      %v655 = vsel %vm497, %v651, 0
      %v658 = vsel %vm497, %v653, 0
      %660 = vmatpush.bf16.xpose.msra.mxu0 0
      %661 = vmatpush.bf16.xpose.msra.mxu0 0
      %662 = vmatpush.bf16.xpose.msra.mxu0 0
      %663 = vmatpush.bf16.xpose.msra.mxu0 0
      %664 = vmatpush.bf16.xpose.msra.mxu0 0
      %665 = vmatpush.bf16.xpose.msra.mxu0 0
      %666 = vmatpush.bf16.xpose.msra.mxu0 0
      %667 = vmatpush.bf16.xpose.msra.mxu0 %v658
      %668 = vmatmul.bf16.gmra.mxu0 %v655
      %v669 = vpop.f32.mrf.mxu0
      %v670 = vadd.f32 %v492, %v669
      %v671 = vpop.f32.mrf.mxu0
      %672 = vdwg.mxu0
      %v673 = vsel %vm497, %v670, -inf
      %674 = vmax.xlane.f32.xlu0 %v673
      %v675 = vpop.xlane.xlu0 %674
      %v676 = vsub.f32 %v670, %v675
      %v677 = vmul.f32 %v676, 1.442695
      %v678 = vpow.pop %v677
      %v679 = vsel %vm497, %v678, 0.0
      %680 = vadd.xlane.f32.xlu0 %v679
      %v681 = vpop.xlane.xlu0 %680
      %v682 = vrcp.pop %v681
      %v683 = vmul.f32 %v678, %v682
      %v684 = vpack.c.bf16 %v683, %v683
      %685 = vrot.lane.b32.xlu0 %v490, 48
      %v686 = vpop.permute.xlu0 %685
      %v688 = vsel %vm497, %v684, 0
      %v691 = vsel %vm534, %v686, 0
      %693 = vmatpush.bf16.msra.mxu0 0
      %694 = vmatpush.bf16.msra.mxu0 0
      %695 = vmatpush.bf16.msra.mxu0 0
      %696 = vmatpush.bf16.msra.mxu0 0
      %697 = vmatpush.bf16.msra.mxu0 0
      %698 = vmatpush.bf16.msra.mxu0 0
      %699 = vmatpush.bf16.msra.mxu0 0
      %700 = vmatpush.bf16.msra.mxu0 %v691
      %701 = vmatmul.bf16.gmra.mxu0 %v688
      %v702 = vpop.f32.mrf.mxu0
      %v703 = vadd.f32 0.0, %v702
      %v704 = vpop.f32.mrf.mxu0
      %705 = vdwg.mxu0
      %v706 = vpack.c.bf16 %v703, %v703
      %s707 = scalar_lea.vmem %s3, 8
      %v708 = vld [vmem:[%s707] sm:$0xf]
      %v710 = vsel %vm497, %v706, 0
      %v713 = vsel %vm534, %v708, 0
      %715 = vmatpush.bf16.msra.mxu0 0
      %716 = vmatpush.bf16.msra.mxu0 0
      %717 = vmatpush.bf16.msra.mxu0 0
      %718 = vmatpush.bf16.msra.mxu0 0
      %719 = vmatpush.bf16.msra.mxu0 0
      %720 = vmatpush.bf16.msra.mxu0 0
      %721 = vmatpush.bf16.msra.mxu0 0
      %722 = vmatpush.bf16.msra.mxu0 %v713
      %723 = vmatmul.bf16.gmra.mxu0 %v710
      %v724 = vpop.f32.mrf.mxu0
      %v725 = vadd.f32 0.0, %v724
      %v726 = vpop.f32.mrf.mxu0
      %727 = vdwg.mxu0
      %v728 = vadd.f32 %v647, %v725
      %729 = vrot.lane.b32.xlu0 %v490, 104
      %v730 = vpop.permute.xlu0 %729
      %731 = vrot.lane.b32.xlu0 %v490, 72
      %v732 = vpop.permute.xlu0 %731
      %v734 = vsel %vm497, %v730, 0
      %v737 = vsel %vm497, %v732, 0
      %739 = vmatpush.bf16.xpose.msra.mxu0 0
      %740 = vmatpush.bf16.xpose.msra.mxu0 0
      %741 = vmatpush.bf16.xpose.msra.mxu0 0
      %742 = vmatpush.bf16.xpose.msra.mxu0 0
      %743 = vmatpush.bf16.xpose.msra.mxu0 0
      %744 = vmatpush.bf16.xpose.msra.mxu0 0
      %745 = vmatpush.bf16.xpose.msra.mxu0 0
      %746 = vmatpush.bf16.xpose.msra.mxu0 %v737
      %747 = vmatmul.bf16.gmra.mxu0 %v734
      %v748 = vpop.f32.mrf.mxu0
      %v749 = vadd.f32 %v492, %v748
      %v750 = vpop.f32.mrf.mxu0
      %751 = vdwg.mxu0
      %v752 = vsel %vm497, %v749, -inf
      %753 = vmax.xlane.f32.xlu0 %v752
      %v754 = vpop.xlane.xlu0 %753
      %v755 = vsub.f32 %v749, %v754
      %v756 = vmul.f32 %v755, 1.442695
      %v757 = vpow.pop %v756
      %v758 = vsel %vm497, %v757, 0.0
      %759 = vadd.xlane.f32.xlu0 %v758
      %v760 = vpop.xlane.xlu0 %759
      %v761 = vrcp.pop %v760
      %v762 = vmul.f32 %v757, %v761
      %v763 = vpack.c.bf16 %v762, %v762
      %764 = vrot.lane.b32.xlu0 %v490, 40
      %v765 = vpop.permute.xlu0 %764
      %v767 = vsel %vm497, %v763, 0
      %v770 = vsel %vm534, %v765, 0
      %772 = vmatpush.bf16.msra.mxu0 0
      %773 = vmatpush.bf16.msra.mxu0 0
      %774 = vmatpush.bf16.msra.mxu0 0
      %775 = vmatpush.bf16.msra.mxu0 0
      %776 = vmatpush.bf16.msra.mxu0 0
      %777 = vmatpush.bf16.msra.mxu0 0
      %778 = vmatpush.bf16.msra.mxu0 0
      %779 = vmatpush.bf16.msra.mxu0 %v770
      %780 = vmatmul.bf16.gmra.mxu0 %v767
      %v781 = vpop.f32.mrf.mxu0
      %v782 = vadd.f32 0.0, %v781
      %v783 = vpop.f32.mrf.mxu0
      %784 = vdwg.mxu0
      %v785 = vpack.c.bf16 %v782, %v782
      %s786 = scalar_lea.vmem %s3, 12
      %v787 = vld [vmem:[%s786] sm:$0xf]
      %v789 = vsel %vm497, %v785, 0
      %v792 = vsel %vm534, %v787, 0
      %794 = vmatpush.bf16.msra.mxu0 0
      %795 = vmatpush.bf16.msra.mxu0 0
      %796 = vmatpush.bf16.msra.mxu0 0
      %797 = vmatpush.bf16.msra.mxu0 0
      %798 = vmatpush.bf16.msra.mxu0 0
      %799 = vmatpush.bf16.msra.mxu0 0
      %800 = vmatpush.bf16.msra.mxu0 0
      %801 = vmatpush.bf16.msra.mxu0 %v792
      %802 = vmatmul.bf16.gmra.mxu0 %v789
      %v803 = vpop.f32.mrf.mxu0
      %v804 = vadd.f32 0.0, %v803
      %v805 = vpop.f32.mrf.mxu0
      %806 = vdwg.mxu0
      %v807 = vadd.f32 %v728, %v804
      %v809 = vperm.slane %v489, 0
      %v811 = vadd.f32 %v807, %v809
      %v812 = vadd.f32 %v811, %v451
      %v813 = vld [vmem:[%s5] sm:$0x1]
      %v814 = vld [vmem:[%s6] sm:$0x1]
      %v815 = vsel %vm469, %v812, 0.0
      %816 = vadd.xlane.f32.xlu0 %v815
      %v817 = vpop.xlane.xlu0 %816
      %v818 = vrcp.pop 32.0
      %v819 = vmul.f32 32.0, %v818
      %v820 = vsub.f32 1.0, %v819
      %v821 = vmul.f32 %v818, %v820
      %v822 = vadd.f32 %v818, %v821
      %vm823 = vweird.f32 %v818
      %v824 = vsel %vm823, %v818, %v822
      %v825 = vmul.f32 %v817, %v824
      %v826 = vsub.f32 %v812, %v825
      %v827 = vmul.f32 %v826, %v826
      %v828 = vsel %vm469, %v827, 0.0
      %829 = vadd.xlane.f32.xlu0 %v828
      %v830 = vpop.xlane.xlu0 %829
      %v831 = vmul.f32 %v830, %v824
      %v832 = vadd.f32 %v831, 1e-05
      %v833 = vrsqrt.pop %v832
      %v834 = vmul.f32 %v833, %v832
      %v835 = vmul.f32 %v834, %v833
      %v836 = vmul.f32 0.5, %v835
      %v837 = vsub.f32 1.5, %v836
      %v838 = vmul.f32 %v833, %v837
      %vm839 = vweird.f32 %v832
      %vm840 = vweird.f32 %v833
      %vm841 = vmor %vm839, %vm840
      %v842 = vsel %vm841, %v833, %v838
      %v843 = vmul.f32 %v826, %v842
      %v845 = vperm.slane %v813, 0
      %v847 = vmul.f32 %v843, %v845
      %v849 = vperm.slane %v814, 0
      %v851 = vadd.f32 %v847, %v849
      %v852 = vld [vmem:[%s8] sm:$0x1]
      %v853 = vld [vmem:[%s10] sm:$0x1]
      %v854 = vpack.c.bf16 %v851, %v851
      %v855 = vld [vmem:[%s7] sm:$0xf]
      %v856 = vld [vmem:[%s7 + $0x4] sm:$0xf]
      %v857 = vld [vmem:[%s7 + $0x8] sm:$0xf]
      %v858 = vld [vmem:[%s7 + $0xc] sm:$0xf]
      %v860 = vperm.slane %v852, 0
      %v866 = vunpack.c.l.b16 %v855
      %v867 = vunpack.c.l.b16 %v856
      %v868 = vunpack.c.l.b16 %v857
      %v869 = vunpack.c.l.b16 %v858
      %v870 = vpack.c.b16 %v867, %v866
      %v871 = vpack.c.b16 %v869, %v868
      %v875 = vsel %vm469, %v854, 0
      %877 = vmatpush.bf16.msra.mxu0 0
      %878 = vmatpush.bf16.msra.mxu0 0
      %879 = vmatpush.bf16.msra.mxu0 0
      %880 = vmatpush.bf16.msra.mxu0 0
      %881 = vmatpush.bf16.msra.mxu0 0
      %882 = vmatpush.bf16.msra.mxu0 0
      %883 = vmatpush.bf16.msra.mxu0 %v871
      %884 = vmatpush.bf16.msra.mxu0 %v870
      %885 = vmatmul.bf16.gmra.mxu0 %v875
      %v886 = vpop.f32.mrf.mxu0
      %v887 = vadd.f32 %v860, %v886
      %v888 = vpop.f32.mrf.mxu0
      %889 = vdwg.mxu0
      %v890 = vmax.f32 %v887, 0.0
      %v891 = vpack.c.bf16 %v890, %v890
      %v892 = vld [vmem:[%s9] sm:$0xf]
      %v893 = vld [vmem:[%s9 + $0x4] sm:$0xf]
      %v894 = vld [vmem:[%s9 + $0x8] sm:$0xf]
      %v895 = vld [vmem:[%s9 + $0xc] sm:$0xf]
      %v896 = vld [vmem:[%s9 + $0x10] sm:$0xf]
      %v897 = vld [vmem:[%s9 + $0x14] sm:$0xf]
      %v898 = vld [vmem:[%s9 + $0x18] sm:$0xf]
      %v899 = vld [vmem:[%s9 + $0x1c] sm:$0xf]
      %v900 = vld [vmem:[%s9 + $0x20] sm:$0xf]
      %v901 = vld [vmem:[%s9 + $0x24] sm:$0xf]
      %v902 = vld [vmem:[%s9 + $0x28] sm:$0xf]
      %v903 = vld [vmem:[%s9 + $0x2c] sm:$0xf]
      %v904 = vld [vmem:[%s9 + $0x30] sm:$0xf]
      %v905 = vld [vmem:[%s9 + $0x34] sm:$0xf]
      %v906 = vld [vmem:[%s9 + $0x38] sm:$0xf]
      %v907 = vld [vmem:[%s9 + $0x3c] sm:$0xf]
      %v909 = vperm.slane %v853, 0
      %v927 = vunpack.c.l.b16 %v892
      %v928 = vunpack.c.l.b16 %v893
      %v929 = vunpack.c.l.b16 %v894
      %v930 = vunpack.c.l.b16 %v895
      %v931 = vunpack.c.l.b16 %v896
      %v932 = vunpack.c.l.b16 %v897
      %v933 = vunpack.c.l.b16 %v898
      %v934 = vunpack.c.l.b16 %v899
      %v935 = vunpack.c.l.b16 %v900
      %v936 = vunpack.c.l.b16 %v901
      %v937 = vunpack.c.l.b16 %v902
      %v938 = vunpack.c.l.b16 %v903
      %v939 = vunpack.c.l.b16 %v904
      %v940 = vunpack.c.l.b16 %v905
      %v941 = vunpack.c.l.b16 %v906
      %v942 = vunpack.c.l.b16 %v907
      %v943 = vpack.c.b16 %v928, %v927
      %v944 = vpack.c.b16 %v930, %v929
      %v945 = vpack.c.b16 %v932, %v931
      %v946 = vpack.c.b16 %v934, %v933
      %v947 = vpack.c.b16 %v936, %v935
      %v948 = vpack.c.b16 %v938, %v937
      %v949 = vpack.c.b16 %v940, %v939
      %v950 = vpack.c.b16 %v942, %v941
      %959 = vmatpush.bf16.msra.mxu0 %v950
      %960 = vmatpush.bf16.msra.mxu0 %v949
      %961 = vmatpush.bf16.msra.mxu0 %v948
      %962 = vmatpush.bf16.msra.mxu0 %v947
      %963 = vmatpush.bf16.msra.mxu0 %v946
      %964 = vmatpush.bf16.msra.mxu0 %v945
      %965 = vmatpush.bf16.msra.mxu0 %v944
      %966 = vmatpush.bf16.msra.mxu0 %v943
      %967 = vmatmul.bf16.gmra.mxu0 %v891
      %v968 = vpop.f32.mrf.mxu0
      %v969 = vadd.f32 %v909, %v968
      %v970 = vpop.f32.mrf.mxu0
      %971 = vdwg.mxu0
      %v972 = vadd.f32 %v969, %v851
      %v973 = vld [vmem:[%s11] sm:$0x1]
      %v974 = vld [vmem:[%s12] sm:$0x1]
      %v975 = vsel %vm469, %v972, 0.0
      %976 = vadd.xlane.f32.xlu0 %v975
      %v977 = vpop.xlane.xlu0 %976
      %v978 = vmul.f32 %v977, %v824
      %v979 = vsub.f32 %v972, %v978
      %v980 = vmul.f32 %v979, %v979
      %v981 = vsel %vm469, %v980, 0.0
      %982 = vadd.xlane.f32.xlu0 %v981
      %v983 = vpop.xlane.xlu0 %982
      %v984 = vmul.f32 %v983, %v824
      %v985 = vadd.f32 %v984, 1e-05
      %v986 = vrsqrt.pop %v985
      %v987 = vmul.f32 %v986, %v985
      %v988 = vmul.f32 %v987, %v986
      %v989 = vmul.f32 0.5, %v988
      %v990 = vsub.f32 1.5, %v989
      %v991 = vmul.f32 %v986, %v990
      %vm992 = vweird.f32 %v985
      %vm993 = vweird.f32 %v986
      %vm994 = vmor %vm992, %vm993
      %v995 = vsel %vm994, %v986, %v991
      %v996 = vmul.f32 %v979, %v995
      %v998 = vperm.slane %v973, 0
      %v1000 = vmul.f32 %v996, %v998
      %v1002 = vperm.slane %v974, 0
      %v1004 = vadd.f32 %v1000, %v1002
      %1005 = vst.msk [vmem:[%s449] sm:$0xff] %vm469, %v1004
      %p1006 = scmp.lt.s32.totalorder %s24, 1
      %s1007 = scalar_select %p1006, %s24, 1
      %s1008 = smul.addr %s1007, 8
      %s1009 = scalar_lea.vmem %s13, %s1008
      // Predicated region
      $region73: #{_lambda_.5} parent=71 // pred_check
        %p1010 = pneg %p325
      $region74: #{_lambda_.5} parent=71 // pred_check_branch
        %1012 = sbr.rel (%p1010) target = $region76
      $region75: #{_lambda_.5} parent=71 // pred_region
        _
      $region76: #{_lambda_.5} parent=71 // pred_fallthru
        _
    $region72: #{_lambda_.5} parent=5 // pred_fallthru
      _
    %p1013 = scmp.le.s32.totalorder 2, %s19
    // Predicated region
    $region77: #{_lambda_.5} parent=5 // pred_check
      %p1014 = pneg %p1013
    $region78: #{_lambda_.5} parent=5 // pred_check_branch
      %1016 = sbr.rel (%p1014) target = $region80
    $region79: #{_lambda_.5} parent=5 // pred_region
      %s1017 = ssub.s32 %s19, 2
      // Predicated region
      $region81: #{_lambda_.5} parent=79 // pred_check
        %p1018 = pneg %p331
      $region82: #{_lambda_.5} parent=79 // pred_check_branch
        %1020 = sbr.rel (%p1018) target = $region84
      $region83: #{_lambda_.5} parent=79 // pred_region
        %p1021 = scmp.lt.s32.totalorder %s25, 1
        %s1022 = scalar_select %p1021, %s25, 1
        %s1023 = smul.addr %s1022, 8
        %s1024 = scalar_lea.vmem %s13, %s1023
      $region84: #{_lambda_.5} parent=79 // pred_fallthru
        _
    $region80: #{_lambda_.5} parent=5 // pred_fallthru
      _
  $region6: #{_lambda_.5} parent=0 // loop_footer
    %s23 = sadd.s32 1, %s19
  $region7: #{_lambda_.5} parent=0 // loop_footer_branch
    %18 = sbr.rel target = $region3
  $region8: #{_lambda_.5} parent=0 // loop_exit
    _

// kernel: _lambda_.7
$region0: #{_lambda_.7}
  #allocation0 [shape = 'u32[]', space=smem, size = 0x4, offset = 0x4, fixed_abs, tag = 'smem constant byte address 0x4 - core index']
  #allocation1 [shape = 'u32[72,128]{1,0:T(1,128)}', space=vmem, size = 0x9000, scoped, tag = 'internal scratch']
  %s0 = inlined_call_operand.vmem [shape: f32[2,8,32], index: 0, kind: input, shape index: {}]
  %s1 = inlined_call_operand.vmem [shape: f32[2,8,32], index: 1, kind: input, shape index: {}]
  %s2 = inlined_call_operand.vmem [shape: f32[2,1,8], index: 2, kind: input, shape index: {}]
  %s3 = inlined_call_operand.vmem [shape: bf16[32,96], index: 3, kind: input, shape index: {}]
  %s4 = inlined_call_operand.vmem [shape: bf16[4,8,32], index: 4, kind: input, shape index: {}]
  %s5 = inlined_call_operand.vmem [shape: f32[1,32], index: 5, kind: input, shape index: {}]
  %s6 = inlined_call_operand.vmem [shape: f32[1,32], index: 6, kind: input, shape index: {}]
  %s7 = inlined_call_operand.vmem [shape: f32[1,32], index: 7, kind: input, shape index: {}]
  %s8 = inlined_call_operand.vmem [shape: bf16[32,32], index: 8, kind: input, shape index: {}]
  %s9 = inlined_call_operand.vmem [shape: bf16[32,64], index: 9, kind: input, shape index: {}]
  %s10 = inlined_call_operand.vmem [shape: bf16[4,8,32], index: 10, kind: input, shape index: {}]
  %s11 = inlined_call_operand.vmem [shape: f32[1,32], index: 11, kind: input, shape index: {}]
  %s12 = inlined_call_operand.vmem [shape: f32[1,32], index: 12, kind: input, shape index: {}]
  %s13 = inlined_call_operand.vmem [shape: f32[1,32], index: 13, kind: input, shape index: {}]
  %s14 = inlined_call_operand.vmem [shape: bf16[32,128], index: 14, kind: input, shape index: {}]
  %s15 = inlined_call_operand.vmem [shape: f32[1,128], index: 15, kind: input, shape index: {}]
  %s16 = inlined_call_operand.vmem [shape: bf16[128,32], index: 16, kind: input, shape index: {}]
  %s17 = inlined_call_operand.vmem [shape: f32[1,32], index: 17, kind: input, shape index: {}]
  %s18 = inlined_call_operand.vmem [shape: f32[1,32], index: 18, kind: input, shape index: {}]
  %s19 = inlined_call_operand.vmem [shape: f32[1,32], index: 19, kind: input, shape index: {}]
  %s20 = inlined_call_operand.vmem [shape: f32[2,8,32], index: 20, kind: output, shape index: {}]
  %s21 = sld [smem:[#allocation0]]
  $region113: #{_lambda_.7} parent=0
    _
  %s23 = ssub.s32 1, %s21
  %s24 = scalar_select 0, %s23, %s21
  loop: start=0, step=1, limit=4
  $region2: #{_lambda_.7} parent=0 // loop_pre_header
    _
  $region3: #{_lambda_.7} parent=0 // loop_header
    %s26 = sphi 0, %s30
    %p27 = scmp.ge.s32.totalorder %s26, 4
    %s36 = sphi 0, %s38
    %s39 = sphi 0, %s36
    %s40 = sphi 0, %s39
    %s56 = sphi 0, %s40
    %s62 = sphi 0, %s64
    %s65 = sphi 0, %s62
    %s66 = sphi 0, %s65
    %s82 = sphi 0, %s66
    %s88 = sphi 0, %s90
    %s91 = sphi 0, %s88
    %s92 = sphi 0, %s91
    %s108 = sphi 0, %s92
    %s112 = sphi 0, %s112
    %s114 = sphi 0, %s112
    %s115 = sphi 0, %s114
    %s129 = sphi 0, %s115
    %s133 = sphi 0, %s133
    %s135 = sphi 0, %s133
    %s136 = sphi 0, %s135
    %s150 = sphi 0, %s136
    %s154 = sphi 0, %s154
    %s156 = sphi 0, %s154
    %s157 = sphi 0, %s156
    %s171 = sphi 0, %s157
    %s175 = sphi 0, %s175
    %s177 = sphi 0, %s175
    %s178 = sphi 0, %s177
    %s192 = sphi 0, %s178
    %s196 = sphi 0, %s196
    %s198 = sphi 0, %s196
    %s199 = sphi 0, %s198
    %s213 = sphi 0, %s199
    %s217 = sphi 0, %s217
    %s219 = sphi 0, %s217
    %s220 = sphi 0, %s219
    %s234 = sphi 0, %s220
    %s238 = sphi 0, %s238
    %s240 = sphi 0, %s238
    %s241 = sphi 0, %s240
    %s255 = sphi 0, %s241
    %s259 = sphi 0, %s259
    %s261 = sphi 0, %s259
    %s262 = sphi 0, %s261
    %s276 = sphi 0, %s262
    %s280 = sphi 0, %s280
    %s282 = sphi 0, %s280
    %s283 = sphi 0, %s282
    %s297 = sphi 0, %s283
    %s301 = sphi 0, %s301
    %s303 = sphi 0, %s301
    %s304 = sphi 0, %s303
    %s318 = sphi 0, %s304
    %s322 = sphi 0, %s322
    %s324 = sphi 0, %s322
    %s325 = sphi 0, %s324
    %s339 = sphi 0, %s325
    %s343 = sphi 0, %s343
    %s345 = sphi 0, %s343
    %s346 = sphi 0, %s345
    %s360 = sphi 0, %s346
    %s364 = sphi 0, %s364
    %s366 = sphi 0, %s364
    %s367 = sphi 0, %s366
    %s381 = sphi 0, %s367
    %s385 = sphi 0, %s385
    %s387 = sphi 0, %s385
    %s388 = sphi 0, %s387
    %s402 = sphi 0, %s388
    %s406 = sphi 0, %s406
    %s408 = sphi 0, %s406
    %s409 = sphi 0, %s408
    %s423 = sphi 0, %s409
    %s427 = sphi 0, %s427
    %s429 = sphi 0, %s427
    %s430 = sphi 0, %s429
    %s444 = sphi 0, %s430
    %s448 = sphi 0, %s448
    %s450 = sphi 0, %s448
    %s451 = sphi 0, %s450
    %s465 = sphi 0, %s451
    %s471 = sphi 0, %s473
    %s474 = sphi 0, %s471
    %s475 = sphi 0, %s474
    %s491 = sphi 0, %s475
  $region4: #{_lambda_.7} parent=0 // loop_header_branch
    %29 = sbr.rel (%p27) target = $region8
  $region5: #{_lambda_.7} parent=0 // loop_body
    %s31 = ssub.s32 %s26, 1
    %s32 = ssub.s32 %s26, 2
    %s33 = sadd.s32 %s26, 1
    %s34 = ssub.s32 %s26, %s33
    %p35 = scmp.eq.s32.totalorder %s34, 0
    %s37 = sadd.s32 %s36, 1
    %s38 = scalar_select %p35, %s36, %s37
    %p41 = pneg %p35
    %p42 = scmp.eq.s32.totalorder %s26, 1
    %p43 = por %p41, %p42
    %p44 = scmp.ne.s32.totalorder %s36, %s39
    %p45 = scmp.eq.s32.totalorder %s26, 0
    %p46 = por %p44, %p45
    %p47 = scmp.ne.s32.totalorder %s36, %s39
    %p48 = scmp.eq.s32.totalorder %s31, 1
    %p49 = por %p47, %p48
    %p50 = scmp.ne.s32.totalorder %s39, %s40
    %p51 = scmp.eq.s32.totalorder %s31, 0
    %p52 = por %p50, %p51
    %p53 = scmp.ne.s32.totalorder %s39, %s40
    %p54 = scmp.eq.s32.totalorder %s32, 1
    %p55 = por %p53, %p54
    %p57 = scmp.ne.s32.totalorder %s40, %s56
    %p58 = scmp.eq.s32.totalorder %s32, 0
    %p59 = por %p57, %p58
    %s60 = ssub.s32 %s26, %s33
    %p61 = scmp.eq.s32.totalorder %s60, 0
    %s63 = sadd.s32 %s62, 1
    %s64 = scalar_select %p61, %s62, %s63
    %p67 = pneg %p61
    %p68 = scmp.eq.s32.totalorder %s26, 1
    %p69 = por %p67, %p68
    %p70 = scmp.ne.s32.totalorder %s62, %s65
    %p71 = scmp.eq.s32.totalorder %s26, 0
    %p72 = por %p70, %p71
    %p73 = scmp.ne.s32.totalorder %s62, %s65
    %p74 = scmp.eq.s32.totalorder %s31, 1
    %p75 = por %p73, %p74
    %p76 = scmp.ne.s32.totalorder %s65, %s66
    %p77 = scmp.eq.s32.totalorder %s31, 0
    %p78 = por %p76, %p77
    %p79 = scmp.ne.s32.totalorder %s65, %s66
    %p80 = scmp.eq.s32.totalorder %s32, 1
    %p81 = por %p79, %p80
    %p83 = scmp.ne.s32.totalorder %s66, %s82
    %p84 = scmp.eq.s32.totalorder %s32, 0
    %p85 = por %p83, %p84
    %s86 = ssub.s32 %s26, %s33
    %p87 = scmp.eq.s32.totalorder %s86, 0
    %s89 = sadd.s32 %s88, 1
    %s90 = scalar_select %p87, %s88, %s89
    %p93 = pneg %p87
    %p94 = scmp.eq.s32.totalorder %s26, 1
    %p95 = por %p93, %p94
    %p96 = scmp.ne.s32.totalorder %s88, %s91
    %p97 = scmp.eq.s32.totalorder %s26, 0
    %p98 = por %p96, %p97
    %p99 = scmp.ne.s32.totalorder %s88, %s91
    %p100 = scmp.eq.s32.totalorder %s31, 1
    %p101 = por %p99, %p100
    %p102 = scmp.ne.s32.totalorder %s91, %s92
    %p103 = scmp.eq.s32.totalorder %s31, 0
    %p104 = por %p102, %p103
    %p105 = scmp.ne.s32.totalorder %s91, %s92
    %p106 = scmp.eq.s32.totalorder %s32, 1
    %p107 = por %p105, %p106
    %p109 = scmp.ne.s32.totalorder %s92, %s108
    %p110 = scmp.eq.s32.totalorder %s32, 0
    %p111 = por %p109, %p110
    %s113 = sadd.s32 %s112, 1
    %p116 = scmp.eq.s32.totalorder %s26, 1
    %p117 = scmp.ne.s32.totalorder %s112, %s114
    %p118 = scmp.eq.s32.totalorder %s26, 0
    %p119 = por %p117, %p118
    %p120 = scmp.ne.s32.totalorder %s112, %s114
    %p121 = scmp.eq.s32.totalorder %s31, 1
    %p122 = por %p120, %p121
    %p123 = scmp.ne.s32.totalorder %s114, %s115
    %p124 = scmp.eq.s32.totalorder %s31, 0
    %p125 = por %p123, %p124
    %p126 = scmp.ne.s32.totalorder %s114, %s115
    %p127 = scmp.eq.s32.totalorder %s32, 1
    %p128 = por %p126, %p127
    %p130 = scmp.ne.s32.totalorder %s115, %s129
    %p131 = scmp.eq.s32.totalorder %s32, 0
    %p132 = por %p130, %p131
    %s134 = sadd.s32 %s133, 1
    %p137 = scmp.eq.s32.totalorder %s26, 1
    %p138 = scmp.ne.s32.totalorder %s133, %s135
    %p139 = scmp.eq.s32.totalorder %s26, 0
    %p140 = por %p138, %p139
    %p141 = scmp.ne.s32.totalorder %s133, %s135
    %p142 = scmp.eq.s32.totalorder %s31, 1
    %p143 = por %p141, %p142
    %p144 = scmp.ne.s32.totalorder %s135, %s136
    %p145 = scmp.eq.s32.totalorder %s31, 0
    %p146 = por %p144, %p145
    %p147 = scmp.ne.s32.totalorder %s135, %s136
    %p148 = scmp.eq.s32.totalorder %s32, 1
    %p149 = por %p147, %p148
    %p151 = scmp.ne.s32.totalorder %s136, %s150
    %p152 = scmp.eq.s32.totalorder %s32, 0
    %p153 = por %p151, %p152
    %s155 = sadd.s32 %s154, 1
    %p158 = scmp.eq.s32.totalorder %s26, 1
    %p159 = scmp.ne.s32.totalorder %s154, %s156
    %p160 = scmp.eq.s32.totalorder %s26, 0
    %p161 = por %p159, %p160
    %p162 = scmp.ne.s32.totalorder %s154, %s156
    %p163 = scmp.eq.s32.totalorder %s31, 1
    %p164 = por %p162, %p163
    %p165 = scmp.ne.s32.totalorder %s156, %s157
    %p166 = scmp.eq.s32.totalorder %s31, 0
    %p167 = por %p165, %p166
    %p168 = scmp.ne.s32.totalorder %s156, %s157
    %p169 = scmp.eq.s32.totalorder %s32, 1
    %p170 = por %p168, %p169
    %p172 = scmp.ne.s32.totalorder %s157, %s171
    %p173 = scmp.eq.s32.totalorder %s32, 0
    %p174 = por %p172, %p173
    %s176 = sadd.s32 %s175, 1
    %p179 = scmp.eq.s32.totalorder %s26, 1
    %p180 = scmp.ne.s32.totalorder %s175, %s177
    %p181 = scmp.eq.s32.totalorder %s26, 0
    %p182 = por %p180, %p181
    %p183 = scmp.ne.s32.totalorder %s175, %s177
    %p184 = scmp.eq.s32.totalorder %s31, 1
    %p185 = por %p183, %p184
    %p186 = scmp.ne.s32.totalorder %s177, %s178
    %p187 = scmp.eq.s32.totalorder %s31, 0
    %p188 = por %p186, %p187
    %p189 = scmp.ne.s32.totalorder %s177, %s178
    %p190 = scmp.eq.s32.totalorder %s32, 1
    %p191 = por %p189, %p190
    %p193 = scmp.ne.s32.totalorder %s178, %s192
    %p194 = scmp.eq.s32.totalorder %s32, 0
    %p195 = por %p193, %p194
    %s197 = sadd.s32 %s196, 1
    %p200 = scmp.eq.s32.totalorder %s26, 1
    %p201 = scmp.ne.s32.totalorder %s196, %s198
    %p202 = scmp.eq.s32.totalorder %s26, 0
    %p203 = por %p201, %p202
    %p204 = scmp.ne.s32.totalorder %s196, %s198
    %p205 = scmp.eq.s32.totalorder %s31, 1
    %p206 = por %p204, %p205
    %p207 = scmp.ne.s32.totalorder %s198, %s199
    %p208 = scmp.eq.s32.totalorder %s31, 0
    %p209 = por %p207, %p208
    %p210 = scmp.ne.s32.totalorder %s198, %s199
    %p211 = scmp.eq.s32.totalorder %s32, 1
    %p212 = por %p210, %p211
    %p214 = scmp.ne.s32.totalorder %s199, %s213
    %p215 = scmp.eq.s32.totalorder %s32, 0
    %p216 = por %p214, %p215
    %s218 = sadd.s32 %s217, 1
    %p221 = scmp.eq.s32.totalorder %s26, 1
    %p222 = scmp.ne.s32.totalorder %s217, %s219
    %p223 = scmp.eq.s32.totalorder %s26, 0
    %p224 = por %p222, %p223
    %p225 = scmp.ne.s32.totalorder %s217, %s219
    %p226 = scmp.eq.s32.totalorder %s31, 1
    %p227 = por %p225, %p226
    %p228 = scmp.ne.s32.totalorder %s219, %s220
    %p229 = scmp.eq.s32.totalorder %s31, 0
    %p230 = por %p228, %p229
    %p231 = scmp.ne.s32.totalorder %s219, %s220
    %p232 = scmp.eq.s32.totalorder %s32, 1
    %p233 = por %p231, %p232
    %p235 = scmp.ne.s32.totalorder %s220, %s234
    %p236 = scmp.eq.s32.totalorder %s32, 0
    %p237 = por %p235, %p236
    %s239 = sadd.s32 %s238, 1
    %p242 = scmp.eq.s32.totalorder %s26, 1
    %p243 = scmp.ne.s32.totalorder %s238, %s240
    %p244 = scmp.eq.s32.totalorder %s26, 0
    %p245 = por %p243, %p244
    %p246 = scmp.ne.s32.totalorder %s238, %s240
    %p247 = scmp.eq.s32.totalorder %s31, 1
    %p248 = por %p246, %p247
    %p249 = scmp.ne.s32.totalorder %s240, %s241
    %p250 = scmp.eq.s32.totalorder %s31, 0
    %p251 = por %p249, %p250
    %p252 = scmp.ne.s32.totalorder %s240, %s241
    %p253 = scmp.eq.s32.totalorder %s32, 1
    %p254 = por %p252, %p253
    %p256 = scmp.ne.s32.totalorder %s241, %s255
    %p257 = scmp.eq.s32.totalorder %s32, 0
    %p258 = por %p256, %p257
    %s260 = sadd.s32 %s259, 1
    %p263 = scmp.eq.s32.totalorder %s26, 1
    %p264 = scmp.ne.s32.totalorder %s259, %s261
    %p265 = scmp.eq.s32.totalorder %s26, 0
    %p266 = por %p264, %p265
    %p267 = scmp.ne.s32.totalorder %s259, %s261
    %p268 = scmp.eq.s32.totalorder %s31, 1
    %p269 = por %p267, %p268
    %p270 = scmp.ne.s32.totalorder %s261, %s262
    %p271 = scmp.eq.s32.totalorder %s31, 0
    %p272 = por %p270, %p271
    %p273 = scmp.ne.s32.totalorder %s261, %s262
    %p274 = scmp.eq.s32.totalorder %s32, 1
    %p275 = por %p273, %p274
    %p277 = scmp.ne.s32.totalorder %s262, %s276
    %p278 = scmp.eq.s32.totalorder %s32, 0
    %p279 = por %p277, %p278
    %s281 = sadd.s32 %s280, 1
    %p284 = scmp.eq.s32.totalorder %s26, 1
    %p285 = scmp.ne.s32.totalorder %s280, %s282
    %p286 = scmp.eq.s32.totalorder %s26, 0
    %p287 = por %p285, %p286
    %p288 = scmp.ne.s32.totalorder %s280, %s282
    %p289 = scmp.eq.s32.totalorder %s31, 1
    %p290 = por %p288, %p289
    %p291 = scmp.ne.s32.totalorder %s282, %s283
    %p292 = scmp.eq.s32.totalorder %s31, 0
    %p293 = por %p291, %p292
    %p294 = scmp.ne.s32.totalorder %s282, %s283
    %p295 = scmp.eq.s32.totalorder %s32, 1
    %p296 = por %p294, %p295
    %p298 = scmp.ne.s32.totalorder %s283, %s297
    %p299 = scmp.eq.s32.totalorder %s32, 0
    %p300 = por %p298, %p299
    %s302 = sadd.s32 %s301, 1
    %p305 = scmp.eq.s32.totalorder %s26, 1
    %p306 = scmp.ne.s32.totalorder %s301, %s303
    %p307 = scmp.eq.s32.totalorder %s26, 0
    %p308 = por %p306, %p307
    %p309 = scmp.ne.s32.totalorder %s301, %s303
    %p310 = scmp.eq.s32.totalorder %s31, 1
    %p311 = por %p309, %p310
    %p312 = scmp.ne.s32.totalorder %s303, %s304
    %p313 = scmp.eq.s32.totalorder %s31, 0
    %p314 = por %p312, %p313
    %p315 = scmp.ne.s32.totalorder %s303, %s304
    %p316 = scmp.eq.s32.totalorder %s32, 1
    %p317 = por %p315, %p316
    %p319 = scmp.ne.s32.totalorder %s304, %s318
    %p320 = scmp.eq.s32.totalorder %s32, 0
    %p321 = por %p319, %p320
    %s323 = sadd.s32 %s322, 1
    %p326 = scmp.eq.s32.totalorder %s26, 1
    %p327 = scmp.ne.s32.totalorder %s322, %s324
    %p328 = scmp.eq.s32.totalorder %s26, 0
    %p329 = por %p327, %p328
    %p330 = scmp.ne.s32.totalorder %s322, %s324
    %p331 = scmp.eq.s32.totalorder %s31, 1
    %p332 = por %p330, %p331
    %p333 = scmp.ne.s32.totalorder %s324, %s325
    %p334 = scmp.eq.s32.totalorder %s31, 0
    %p335 = por %p333, %p334
    %p336 = scmp.ne.s32.totalorder %s324, %s325
    %p337 = scmp.eq.s32.totalorder %s32, 1
    %p338 = por %p336, %p337
    %p340 = scmp.ne.s32.totalorder %s325, %s339
    %p341 = scmp.eq.s32.totalorder %s32, 0
    %p342 = por %p340, %p341
    %s344 = sadd.s32 %s343, 1
    %p347 = scmp.eq.s32.totalorder %s26, 1
    %p348 = scmp.ne.s32.totalorder %s343, %s345
    %p349 = scmp.eq.s32.totalorder %s26, 0
    %p350 = por %p348, %p349
    %p351 = scmp.ne.s32.totalorder %s343, %s345
    %p352 = scmp.eq.s32.totalorder %s31, 1
    %p353 = por %p351, %p352
    %p354 = scmp.ne.s32.totalorder %s345, %s346
    %p355 = scmp.eq.s32.totalorder %s31, 0
    %p356 = por %p354, %p355
    %p357 = scmp.ne.s32.totalorder %s345, %s346
    %p358 = scmp.eq.s32.totalorder %s32, 1
    %p359 = por %p357, %p358
    %p361 = scmp.ne.s32.totalorder %s346, %s360
    %p362 = scmp.eq.s32.totalorder %s32, 0
    %p363 = por %p361, %p362
    %s365 = sadd.s32 %s364, 1
    %p368 = scmp.eq.s32.totalorder %s26, 1
    %p369 = scmp.ne.s32.totalorder %s364, %s366
    %p370 = scmp.eq.s32.totalorder %s26, 0
    %p371 = por %p369, %p370
    %p372 = scmp.ne.s32.totalorder %s364, %s366
    %p373 = scmp.eq.s32.totalorder %s31, 1
    %p374 = por %p372, %p373
    %p375 = scmp.ne.s32.totalorder %s366, %s367
    %p376 = scmp.eq.s32.totalorder %s31, 0
    %p377 = por %p375, %p376
    %p378 = scmp.ne.s32.totalorder %s366, %s367
    %p379 = scmp.eq.s32.totalorder %s32, 1
    %p380 = por %p378, %p379
    %p382 = scmp.ne.s32.totalorder %s367, %s381
    %p383 = scmp.eq.s32.totalorder %s32, 0
    %p384 = por %p382, %p383
    %s386 = sadd.s32 %s385, 1
    %p389 = scmp.eq.s32.totalorder %s26, 1
    %p390 = scmp.ne.s32.totalorder %s385, %s387
    %p391 = scmp.eq.s32.totalorder %s26, 0
    %p392 = por %p390, %p391
    %p393 = scmp.ne.s32.totalorder %s385, %s387
    %p394 = scmp.eq.s32.totalorder %s31, 1
    %p395 = por %p393, %p394
    %p396 = scmp.ne.s32.totalorder %s387, %s388
    %p397 = scmp.eq.s32.totalorder %s31, 0
    %p398 = por %p396, %p397
    %p399 = scmp.ne.s32.totalorder %s387, %s388
    %p400 = scmp.eq.s32.totalorder %s32, 1
    %p401 = por %p399, %p400
    %p403 = scmp.ne.s32.totalorder %s388, %s402
    %p404 = scmp.eq.s32.totalorder %s32, 0
    %p405 = por %p403, %p404
    %s407 = sadd.s32 %s406, 1
    %p410 = scmp.eq.s32.totalorder %s26, 1
    %p411 = scmp.ne.s32.totalorder %s406, %s408
    %p412 = scmp.eq.s32.totalorder %s26, 0
    %p413 = por %p411, %p412
    %p414 = scmp.ne.s32.totalorder %s406, %s408
    %p415 = scmp.eq.s32.totalorder %s31, 1
    %p416 = por %p414, %p415
    %p417 = scmp.ne.s32.totalorder %s408, %s409
    %p418 = scmp.eq.s32.totalorder %s31, 0
    %p419 = por %p417, %p418
    %p420 = scmp.ne.s32.totalorder %s408, %s409
    %p421 = scmp.eq.s32.totalorder %s32, 1
    %p422 = por %p420, %p421
    %p424 = scmp.ne.s32.totalorder %s409, %s423
    %p425 = scmp.eq.s32.totalorder %s32, 0
    %p426 = por %p424, %p425
    %s428 = sadd.s32 %s427, 1
    %p431 = scmp.eq.s32.totalorder %s26, 1
    %p432 = scmp.ne.s32.totalorder %s427, %s429
    %p433 = scmp.eq.s32.totalorder %s26, 0
    %p434 = por %p432, %p433
    %p435 = scmp.ne.s32.totalorder %s427, %s429
    %p436 = scmp.eq.s32.totalorder %s31, 1
    %p437 = por %p435, %p436
    %p438 = scmp.ne.s32.totalorder %s429, %s430
    %p439 = scmp.eq.s32.totalorder %s31, 0
    %p440 = por %p438, %p439
    %p441 = scmp.ne.s32.totalorder %s429, %s430
    %p442 = scmp.eq.s32.totalorder %s32, 1
    %p443 = por %p441, %p442
    %p445 = scmp.ne.s32.totalorder %s430, %s444
    %p446 = scmp.eq.s32.totalorder %s32, 0
    %p447 = por %p445, %p446
    %s449 = sadd.s32 %s448, 1
    %p452 = scmp.eq.s32.totalorder %s26, 1
    %p453 = scmp.ne.s32.totalorder %s448, %s450
    %p454 = scmp.eq.s32.totalorder %s26, 0
    %p455 = por %p453, %p454
    %p456 = scmp.ne.s32.totalorder %s448, %s450
    %p457 = scmp.eq.s32.totalorder %s31, 1
    %p458 = por %p456, %p457
    %p459 = scmp.ne.s32.totalorder %s450, %s451
    %p460 = scmp.eq.s32.totalorder %s31, 0
    %p461 = por %p459, %p460
    %p462 = scmp.ne.s32.totalorder %s450, %s451
    %p463 = scmp.eq.s32.totalorder %s32, 1
    %p464 = por %p462, %p463
    %p466 = scmp.ne.s32.totalorder %s451, %s465
    %p467 = scmp.eq.s32.totalorder %s32, 0
    %p468 = por %p466, %p467
    %s469 = ssub.s32 %s26, %s33
    %p470 = scmp.eq.s32.totalorder %s469, 0
    %s472 = sadd.s32 %s471, 1
    %s473 = scalar_select %p470, %s471, %s472
    %p476 = pneg %p470
    %p477 = scmp.eq.s32.totalorder %s26, 1
    %p478 = por %p476, %p477
    %p479 = scmp.ne.s32.totalorder %s471, %s474
    %p480 = scmp.eq.s32.totalorder %s26, 0
    %p481 = por %p479, %p480
    %p482 = scmp.ne.s32.totalorder %s471, %s474
    %p483 = scmp.eq.s32.totalorder %s31, 1
    %p484 = por %p482, %p483
    %p485 = scmp.ne.s32.totalorder %s474, %s475
    %p486 = scmp.eq.s32.totalorder %s31, 0
    %p487 = por %p485, %p486
    %p488 = scmp.ne.s32.totalorder %s474, %s475
    %p489 = scmp.eq.s32.totalorder %s32, 1
    %p490 = por %p488, %p489
    %p492 = scmp.ne.s32.totalorder %s475, %s491
    %p493 = scmp.eq.s32.totalorder %s32, 0
    %p494 = por %p492, %p493
    %p495 = scmp.le.s32.totalorder 1, %s26
    %p496 = scmp.lt.s32.totalorder %s26, 3
    %p497 = pnand %p495, %p496
    %p498 = pneg %p497
    // Predicated region
    $region9: #{_lambda_.7} parent=5 // pred_check
      _
    $region10: #{_lambda_.7} parent=5 // pred_check_branch
      %500 = sbr.rel (%p497) target = $region12
    $region11: #{_lambda_.7} parent=5 // pred_region
      %s501 = ssub.s32 %s26, 1
      // Predicated region
      $region13: #{_lambda_.7} parent=11 // pred_check
        %p502 = pneg %p125
      $region14: #{_lambda_.7} parent=11 // pred_check_branch
        %504 = sbr.rel (%p502) target = $region16
      $region15: #{_lambda_.7} parent=11 // pred_region
        _
      $region16: #{_lambda_.7} parent=11 // pred_fallthru
        _
      // Predicated region
      $region17: #{_lambda_.7} parent=11 // pred_check
        %p505 = pneg %p146
      $region18: #{_lambda_.7} parent=11 // pred_check_branch
        %507 = sbr.rel (%p505) target = $region20
      $region19: #{_lambda_.7} parent=11 // pred_region
        _
      $region20: #{_lambda_.7} parent=11 // pred_fallthru
        _
      // Predicated region
      $region21: #{_lambda_.7} parent=11 // pred_check
        %p508 = pneg %p167
      $region22: #{_lambda_.7} parent=11 // pred_check_branch
        %510 = sbr.rel (%p508) target = $region24
      $region23: #{_lambda_.7} parent=11 // pred_region
        _
      $region24: #{_lambda_.7} parent=11 // pred_fallthru
        _
      // Predicated region
      $region25: #{_lambda_.7} parent=11 // pred_check
        %p511 = pneg %p188
      $region26: #{_lambda_.7} parent=11 // pred_check_branch
        %513 = sbr.rel (%p511) target = $region28
      $region27: #{_lambda_.7} parent=11 // pred_region
        _
      $region28: #{_lambda_.7} parent=11 // pred_fallthru
        _
      // Predicated region
      $region29: #{_lambda_.7} parent=11 // pred_check
        %p514 = pneg %p209
      $region30: #{_lambda_.7} parent=11 // pred_check_branch
        %516 = sbr.rel (%p514) target = $region32
      $region31: #{_lambda_.7} parent=11 // pred_region
        _
      $region32: #{_lambda_.7} parent=11 // pred_fallthru
        _
      // Predicated region
      $region33: #{_lambda_.7} parent=11 // pred_check
        %p517 = pneg %p230
      $region34: #{_lambda_.7} parent=11 // pred_check_branch
        %519 = sbr.rel (%p517) target = $region36
      $region35: #{_lambda_.7} parent=11 // pred_region
        _
      $region36: #{_lambda_.7} parent=11 // pred_fallthru
        _
      // Predicated region
      $region37: #{_lambda_.7} parent=11 // pred_check
        %p520 = pneg %p251
      $region38: #{_lambda_.7} parent=11 // pred_check_branch
        %522 = sbr.rel (%p520) target = $region40
      $region39: #{_lambda_.7} parent=11 // pred_region
        _
      $region40: #{_lambda_.7} parent=11 // pred_fallthru
        _
      // Predicated region
      $region41: #{_lambda_.7} parent=11 // pred_check
        %p523 = pneg %p272
      $region42: #{_lambda_.7} parent=11 // pred_check_branch
        %525 = sbr.rel (%p523) target = $region44
      $region43: #{_lambda_.7} parent=11 // pred_region
        _
      $region44: #{_lambda_.7} parent=11 // pred_fallthru
        _
      // Predicated region
      $region45: #{_lambda_.7} parent=11 // pred_check
        %p526 = pneg %p293
      $region46: #{_lambda_.7} parent=11 // pred_check_branch
        %528 = sbr.rel (%p526) target = $region48
      $region47: #{_lambda_.7} parent=11 // pred_region
        _
      $region48: #{_lambda_.7} parent=11 // pred_fallthru
        _
      // Predicated region
      $region49: #{_lambda_.7} parent=11 // pred_check
        %p529 = pneg %p314
      $region50: #{_lambda_.7} parent=11 // pred_check_branch
        %531 = sbr.rel (%p529) target = $region52
      $region51: #{_lambda_.7} parent=11 // pred_region
        _
      $region52: #{_lambda_.7} parent=11 // pred_fallthru
        _
      // Predicated region
      $region53: #{_lambda_.7} parent=11 // pred_check
        %p532 = pneg %p335
      $region54: #{_lambda_.7} parent=11 // pred_check_branch
        %534 = sbr.rel (%p532) target = $region56
      $region55: #{_lambda_.7} parent=11 // pred_region
        _
      $region56: #{_lambda_.7} parent=11 // pred_fallthru
        _
      // Predicated region
      $region57: #{_lambda_.7} parent=11 // pred_check
        %p535 = pneg %p356
      $region58: #{_lambda_.7} parent=11 // pred_check_branch
        %537 = sbr.rel (%p535) target = $region60
      $region59: #{_lambda_.7} parent=11 // pred_region
        _
      $region60: #{_lambda_.7} parent=11 // pred_fallthru
        _
      // Predicated region
      $region61: #{_lambda_.7} parent=11 // pred_check
        %p538 = pneg %p377
      $region62: #{_lambda_.7} parent=11 // pred_check_branch
        %540 = sbr.rel (%p538) target = $region64
      $region63: #{_lambda_.7} parent=11 // pred_region
        _
      $region64: #{_lambda_.7} parent=11 // pred_fallthru
        _
      // Predicated region
      $region65: #{_lambda_.7} parent=11 // pred_check
        %p541 = pneg %p398
      $region66: #{_lambda_.7} parent=11 // pred_check_branch
        %543 = sbr.rel (%p541) target = $region68
      $region67: #{_lambda_.7} parent=11 // pred_region
        _
      $region68: #{_lambda_.7} parent=11 // pred_fallthru
        _
      // Predicated region
      $region69: #{_lambda_.7} parent=11 // pred_check
        %p544 = pneg %p419
      $region70: #{_lambda_.7} parent=11 // pred_check_branch
        %546 = sbr.rel (%p544) target = $region72
      $region71: #{_lambda_.7} parent=11 // pred_region
        _
      $region72: #{_lambda_.7} parent=11 // pred_fallthru
        _
      // Predicated region
      $region73: #{_lambda_.7} parent=11 // pred_check
        %p547 = pneg %p440
      $region74: #{_lambda_.7} parent=11 // pred_check_branch
        %549 = sbr.rel (%p547) target = $region76
      $region75: #{_lambda_.7} parent=11 // pred_region
        _
      $region76: #{_lambda_.7} parent=11 // pred_fallthru
        _
      // Predicated region
      $region77: #{_lambda_.7} parent=11 // pred_check
        %p550 = pneg %p461
      $region78: #{_lambda_.7} parent=11 // pred_check_branch
        %552 = sbr.rel (%p550) target = $region80
      $region79: #{_lambda_.7} parent=11 // pred_region
        _
      $region80: #{_lambda_.7} parent=11 // pred_fallthru
        _
    $region12: #{_lambda_.7} parent=5 // pred_fallthru
      _
    %p553 = scmp.lt.s32.totalorder %s26, 2
    // Predicated region
    $region81: #{_lambda_.7} parent=5 // pred_check
      %p554 = pneg %p553
    $region82: #{_lambda_.7} parent=5 // pred_check_branch
      %556 = sbr.rel (%p554) target = $region84
    $region83: #{_lambda_.7} parent=5 // pred_region
      // Predicated region
      $region85: #{_lambda_.7} parent=83 // pred_check
        %p557 = pneg %p46
      $region86: #{_lambda_.7} parent=83 // pred_check_branch
        %559 = sbr.rel (%p557) target = $region88
      $region87: #{_lambda_.7} parent=83 // pred_region
        %p560 = scmp.lt.s32.totalorder %s26, 1
        %s561 = scalar_select %p560, %s26, 1
        %s562 = smul.addr %s561, 8
        %s563 = scalar_lea.vmem %s0, %s562
      $region88: #{_lambda_.7} parent=83 // pred_fallthru
        _
      // Predicated region
      $region89: #{_lambda_.7} parent=83 // pred_check
        %p564 = pneg %p72
      $region90: #{_lambda_.7} parent=83 // pred_check_branch
        %566 = sbr.rel (%p564) target = $region92
      $region91: #{_lambda_.7} parent=83 // pred_region
        %p567 = scmp.lt.s32.totalorder %s26, 1
        %s568 = scalar_select %p567, %s26, 1
        %s569 = smul.addr %s568, 8
        %s570 = scalar_lea.vmem %s1, %s569
      $region92: #{_lambda_.7} parent=83 // pred_fallthru
        _
      // Predicated region
      $region93: #{_lambda_.7} parent=83 // pred_check
        %p571 = pneg %p98
      $region94: #{_lambda_.7} parent=83 // pred_check_branch
        %573 = sbr.rel (%p571) target = $region96
      $region95: #{_lambda_.7} parent=83 // pred_region
        %p574 = scmp.lt.s32.totalorder %s26, 1
        %s575 = scalar_select %p574, %s26, 1
        %s576 = scalar_lea.vmem %s2, %s575
      $region96: #{_lambda_.7} parent=83 // pred_fallthru
        _
    $region84: #{_lambda_.7} parent=5 // pred_fallthru
      _
    %p577 = scmp.le.s32.totalorder 1, %s26
    %p578 = scmp.lt.s32.totalorder %s26, 3
    %p579 = pnand %p577, %p578
    %p580 = pneg %p579
    // Predicated region
    $region97: #{_lambda_.7} parent=5 // pred_check
      _
    $region98: #{_lambda_.7} parent=5 // pred_check_branch
      %582 = sbr.rel (%p579) target = $region100
    $region99: #{_lambda_.7} parent=5 // pred_region
      %s583 = ssub.s32 %s26, 1
      %p584 = scmp.lt.s32.totalorder %s31, 1
      %s585 = scalar_select %p584, %s31, 1
      %s586 = smul.addr %s585, 8
      %s587 = scalar_lea.vmem %s0, %s586
      %p588 = pneg %p52
      %p589 = pneg %p49
      %p590 = scmp.lt.s32.totalorder %s31, 1
      %s591 = scalar_select %p590, %s31, 1
      %s592 = smul.addr %s591, 8
      %s593 = scalar_lea.vmem %s1, %s592
      %p594 = pneg %p78
      %p595 = pneg %p75
      %p596 = scmp.lt.s32.totalorder %s31, 1
      %s597 = scalar_select %p596, %s31, 1
      %s598 = scalar_lea.vmem %s2, %s597
      %p599 = pneg %p104
      %p600 = pneg %p101
      %p601 = pneg %p125
      %p602 = pneg %p122
      %p603 = pneg %p146
      %p604 = pneg %p143
      %p605 = pneg %p167
      %p606 = pneg %p164
      %p607 = pneg %p188
      %p608 = pneg %p185
      %p609 = pneg %p209
      %p610 = pneg %p206
      %p611 = pneg %p230
      %p612 = pneg %p227
      %p613 = pneg %p251
      %p614 = pneg %p248
      %p615 = pneg %p272
      %p616 = pneg %p269
      %p617 = pneg %p293
      %p618 = pneg %p290
      %p619 = pneg %p314
      %p620 = pneg %p311
      %p621 = pneg %p335
      %p622 = pneg %p332
      %p623 = pneg %p356
      %p624 = pneg %p353
      %p625 = pneg %p377
      %p626 = pneg %p374
      %p627 = pneg %p398
      %p628 = pneg %p395
      %p629 = pneg %p419
      %p630 = pneg %p416
      %p631 = pneg %p440
      %p632 = pneg %p437
      %p633 = pneg %p461
      %p634 = pneg %p458
      %p635 = pneg %p487
      %p636 = pneg %p484
      %p637 = scmp.lt.s32.totalorder %s31, 1
      %s638 = scalar_select %p637, %s31, 1
      %s639 = smul.addr %s638, 8
      %s640 = scalar_lea.vmem %s20, %s639
      %p641 = scmp.lt.s32.totalorder %s31, 1
      %s642 = scalar_select %p641, %s31, 1
      %s643 = smul.addr %s642, 8
      %s644 = scalar_lea.vmem %s0, %s643
      %p645 = scmp.lt.s32.totalorder %s31, 1
      %s646 = scalar_select %p645, %s31, 1
      %s647 = smul.addr %s646, 8
      %s648 = scalar_lea.vmem %s1, %s647
      %p649 = scmp.lt.s32.totalorder %s31, 1
      %s650 = scalar_select %p649, %s31, 1
      %s651 = scalar_lea.vmem %s2, %s650
      %p652 = scmp.lt.s32.totalorder %s31, 1
      %s653 = scalar_select %p652, %s31, 1
      %s654 = smul.addr %s653, 8
      %s655 = scalar_lea.vmem %s20, %s654
      %v657 = vld [vmem:[%s644] sm:$0xff]
      %v658 = vld [vmem:[%s648] sm:$0xff]
      %v659 = vpack.c.bf16 %v657, %v657
      %v660 = vld [vmem:[%s3] sm:$0xf]
      %v661 = vld [vmem:[%s3 + $0x4] sm:$0xf]
      %v662 = vld [vmem:[%s3 + $0x8] sm:$0xf]
      %v663 = vld [vmem:[%s3 + $0xc] sm:$0xf]
      %v668 = vunpack.c.l.b16 %v660
      %v669 = vunpack.c.l.b16 %v661
      %v670 = vunpack.c.l.b16 %v662
      %v671 = vunpack.c.l.b16 %v663
      %v672 = vpack.c.b16 %v669, %v668
      %v673 = vpack.c.b16 %v671, %v670
      %vm676 = vcmask 261120
      %v678 = vsel %vm676, %v659, 0
      %680 = vmatpush.bf16.msra.mxu0 0
      %681 = vmatpush.bf16.msra.mxu0 0
      %682 = vmatpush.bf16.msra.mxu0 0
      %683 = vmatpush.bf16.msra.mxu0 0
      %684 = vmatpush.bf16.msra.mxu0 0
      %685 = vmatpush.bf16.msra.mxu0 0
      %686 = vmatpush.bf16.msra.mxu0 %v673
      %687 = vmatpush.bf16.msra.mxu0 %v672
      %688 = vmatmul.bf16.gmra.mxu0 %v678
      %v689 = vpop.f32.mrf.mxu0
      %v690 = vadd.f32 0.0, %v689
      %v691 = vpop.f32.mrf.mxu0
      %692 = vdwg.mxu0
      %v693 = vlaneseq
      %v694 = vshrl.u32 %v693, 7
      %v695 = vlaneseq
      %v696 = vand.u32 %v695, 127
      %vm697 = vcmp.gt.s32.totalorder %v696, %v694
      %v698 = vsel %vm697, -1e+20, 0.0
      %v699 = vld [vmem:[%s5] sm:$0x1]
      %v700 = vpack.c.bf16 %v690, %v690
      %702 = vrot.lane.b32.xlu0 %v700, 96
      %v703 = vpop.permute.xlu0 %702
      %vm704 = vcmask 64512
      %v706 = vsel %vm704, %v700, 0
      %v709 = vsel %vm704, %v703, 0
      %711 = vmatpush.bf16.xpose.msra.mxu0 0
      %712 = vmatpush.bf16.xpose.msra.mxu0 0
      %713 = vmatpush.bf16.xpose.msra.mxu0 0
      %714 = vmatpush.bf16.xpose.msra.mxu0 0
      %715 = vmatpush.bf16.xpose.msra.mxu0 0
      %716 = vmatpush.bf16.xpose.msra.mxu0 0
      %717 = vmatpush.bf16.xpose.msra.mxu0 0
      %718 = vmatpush.bf16.xpose.msra.mxu0 %v709
      %719 = vmatmul.bf16.gmra.mxu0 %v706
      %v720 = vpop.f32.mrf.mxu0
      %v721 = vadd.f32 %v698, %v720
      %v722 = vpop.f32.mrf.mxu0
      %723 = vdwg.mxu0
      %v724 = vsel %vm704, %v721, -inf
      %725 = vmax.xlane.f32.xlu0 %v724
      %v726 = vpop.xlane.xlu0 %725
      %v727 = vsub.f32 %v721, %v726
      %v728 = vmul.f32 %v727, 1.442695
      %v729 = vpow.pop %v728
      %v730 = vsel %vm704, %v729, 0.0
      %731 = vadd.xlane.f32.xlu0 %v730
      %v732 = vpop.xlane.xlu0 %731
      %v733 = vrcp.pop %v732
      %v734 = vmul.f32 %v729, %v733
      %v735 = vpack.c.bf16 %v734, %v734
      %736 = vrot.lane.b32.xlu0 %v700, 64
      %v737 = vpop.permute.xlu0 %736
      %v739 = vsel %vm704, %v735, 0
      %vm741 = vcmask 1043456
      %v743 = vsel %vm741, %v737, 0
      %745 = vmatpush.bf16.msra.mxu0 0
      %746 = vmatpush.bf16.msra.mxu0 0
      %747 = vmatpush.bf16.msra.mxu0 0
      %748 = vmatpush.bf16.msra.mxu0 0
      %749 = vmatpush.bf16.msra.mxu0 0
      %750 = vmatpush.bf16.msra.mxu0 0
      %751 = vmatpush.bf16.msra.mxu0 0
      %752 = vmatpush.bf16.msra.mxu0 %v743
      %753 = vmatmul.bf16.gmra.mxu0 %v739
      %v754 = vpop.f32.mrf.mxu0
      %v755 = vadd.f32 0.0, %v754
      %v756 = vpop.f32.mrf.mxu0
      %757 = vdwg.mxu0
      %v758 = vpack.c.bf16 %v755, %v755
      %v759 = vld [vmem:[%s4] sm:$0xf]
      %760 = vrot.lane.b32.xlu0 %v700, 120
      %v761 = vpop.permute.xlu0 %760
      %762 = vrot.lane.b32.xlu0 %v700, 88
      %v763 = vpop.permute.xlu0 %762
      %v765 = vsel %vm704, %v761, 0
      %v768 = vsel %vm704, %v763, 0
      %770 = vmatpush.bf16.xpose.msra.mxu0 0
      %771 = vmatpush.bf16.xpose.msra.mxu0 0
      %772 = vmatpush.bf16.xpose.msra.mxu0 0
      %773 = vmatpush.bf16.xpose.msra.mxu0 0
      %774 = vmatpush.bf16.xpose.msra.mxu0 0
      %775 = vmatpush.bf16.xpose.msra.mxu0 0
      %776 = vmatpush.bf16.xpose.msra.mxu0 0
      %777 = vmatpush.bf16.xpose.msra.mxu0 %v768
      %778 = vmatmul.bf16.gmra.mxu0 %v765
      %v779 = vpop.f32.mrf.mxu0
      %v780 = vadd.f32 %v698, %v779
      %v781 = vpop.f32.mrf.mxu0
      %782 = vdwg.mxu0
      %v783 = vsel %vm704, %v780, -inf
      %784 = vmax.xlane.f32.xlu0 %v783
      %v785 = vpop.xlane.xlu0 %784
      %v786 = vsub.f32 %v780, %v785
      %v787 = vmul.f32 %v786, 1.442695
      %v788 = vpow.pop %v787
      %v789 = vsel %vm704, %v788, 0.0
      %790 = vadd.xlane.f32.xlu0 %v789
      %v791 = vpop.xlane.xlu0 %790
      %v792 = vrcp.pop %v791
      %v793 = vmul.f32 %v788, %v792
      %v794 = vpack.c.bf16 %v793, %v793
      %795 = vrot.lane.b32.xlu0 %v700, 56
      %v796 = vpop.permute.xlu0 %795
      %v798 = vsel %vm704, %v794, 0
      %v801 = vsel %vm741, %v796, 0
      %803 = vmatpush.bf16.msra.mxu0 0
      %804 = vmatpush.bf16.msra.mxu0 0
      %805 = vmatpush.bf16.msra.mxu0 0
      %806 = vmatpush.bf16.msra.mxu0 0
      %807 = vmatpush.bf16.msra.mxu0 0
      %808 = vmatpush.bf16.msra.mxu0 0
      %809 = vmatpush.bf16.msra.mxu0 0
      %810 = vmatpush.bf16.msra.mxu0 %v801
      %811 = vmatmul.bf16.gmra.mxu0 %v798
      %v812 = vpop.f32.mrf.mxu0
      %v813 = vadd.f32 0.0, %v812
      %v814 = vpop.f32.mrf.mxu0
      %815 = vdwg.mxu0
      %v816 = vpack.c.bf16 %v813, %v813
      %s817 = scalar_lea.vmem %s4, 4
      %v818 = vld [vmem:[%s817] sm:$0xf]
      %v820 = vsel %vm704, %v816, 0
      %v823 = vsel %vm741, %v818, 0
      %825 = vmatpush.bf16.msra.mxu0 0
      %826 = vmatpush.bf16.msra.mxu0 0
      %827 = vmatpush.bf16.msra.mxu0 0
      %828 = vmatpush.bf16.msra.mxu0 0
      %829 = vmatpush.bf16.msra.mxu0 0
      %830 = vmatpush.bf16.msra.mxu0 0
      %831 = vmatpush.bf16.msra.mxu0 0
      %832 = vmatpush.bf16.msra.mxu0 %v823
      %833 = vmatmul.bf16.gmra.mxu0 %v820
      %v834 = vpop.f32.mrf.mxu0
      %v835 = vadd.f32 0.0, %v834
      %v836 = vpop.f32.mrf.mxu0
      %837 = vdwg.mxu0
      %v839 = vsel %vm704, %v758, 0
      %v842 = vsel %vm741, %v759, 0
      %844 = vmatpush.bf16.msra.mxu0 0
      %845 = vmatpush.bf16.msra.mxu0 0
      %846 = vmatpush.bf16.msra.mxu0 0
      %847 = vmatpush.bf16.msra.mxu0 0
      %848 = vmatpush.bf16.msra.mxu0 0
      %849 = vmatpush.bf16.msra.mxu0 0
      %850 = vmatpush.bf16.msra.mxu0 0
      %851 = vmatpush.bf16.msra.mxu0 %v842
      %852 = vmatmul.bf16.gmra.mxu0 %v839
      %v853 = vpop.f32.mrf.mxu0
      %v854 = vadd.f32 %v835, %v853
      %v855 = vpop.f32.mrf.mxu0
      %856 = vdwg.mxu0
      %857 = vrot.lane.b32.xlu0 %v700, 112
      %v858 = vpop.permute.xlu0 %857
      %859 = vrot.lane.b32.xlu0 %v700, 80
      %v860 = vpop.permute.xlu0 %859
      %v862 = vsel %vm704, %v858, 0
      %v865 = vsel %vm704, %v860, 0
      %867 = vmatpush.bf16.xpose.msra.mxu0 0
      %868 = vmatpush.bf16.xpose.msra.mxu0 0
      %869 = vmatpush.bf16.xpose.msra.mxu0 0
      %870 = vmatpush.bf16.xpose.msra.mxu0 0
      %871 = vmatpush.bf16.xpose.msra.mxu0 0
      %872 = vmatpush.bf16.xpose.msra.mxu0 0
      %873 = vmatpush.bf16.xpose.msra.mxu0 0
      %874 = vmatpush.bf16.xpose.msra.mxu0 %v865
      %875 = vmatmul.bf16.gmra.mxu0 %v862
      %v876 = vpop.f32.mrf.mxu0
      %v877 = vadd.f32 %v698, %v876
      %v878 = vpop.f32.mrf.mxu0
      %879 = vdwg.mxu0
      %v880 = vsel %vm704, %v877, -inf
      %881 = vmax.xlane.f32.xlu0 %v880
      %v882 = vpop.xlane.xlu0 %881
      %v883 = vsub.f32 %v877, %v882
      %v884 = vmul.f32 %v883, 1.442695
      %v885 = vpow.pop %v884
      %v886 = vsel %vm704, %v885, 0.0
      %887 = vadd.xlane.f32.xlu0 %v886
      %v888 = vpop.xlane.xlu0 %887
      %v889 = vrcp.pop %v888
      %v890 = vmul.f32 %v885, %v889
      %v891 = vpack.c.bf16 %v890, %v890
      %892 = vrot.lane.b32.xlu0 %v700, 48
      %v893 = vpop.permute.xlu0 %892
      %v895 = vsel %vm704, %v891, 0
      %v898 = vsel %vm741, %v893, 0
      %900 = vmatpush.bf16.msra.mxu0 0
      %901 = vmatpush.bf16.msra.mxu0 0
      %902 = vmatpush.bf16.msra.mxu0 0
      %903 = vmatpush.bf16.msra.mxu0 0
      %904 = vmatpush.bf16.msra.mxu0 0
      %905 = vmatpush.bf16.msra.mxu0 0
      %906 = vmatpush.bf16.msra.mxu0 0
      %907 = vmatpush.bf16.msra.mxu0 %v898
      %908 = vmatmul.bf16.gmra.mxu0 %v895
      %v909 = vpop.f32.mrf.mxu0
      %v910 = vadd.f32 0.0, %v909
      %v911 = vpop.f32.mrf.mxu0
      %912 = vdwg.mxu0
      %v913 = vpack.c.bf16 %v910, %v910
      %s914 = scalar_lea.vmem %s4, 8
      %v915 = vld [vmem:[%s914] sm:$0xf]
      %v917 = vsel %vm704, %v913, 0
      %v920 = vsel %vm741, %v915, 0
      %922 = vmatpush.bf16.msra.mxu0 0
      %923 = vmatpush.bf16.msra.mxu0 0
      %924 = vmatpush.bf16.msra.mxu0 0
      %925 = vmatpush.bf16.msra.mxu0 0
      %926 = vmatpush.bf16.msra.mxu0 0
      %927 = vmatpush.bf16.msra.mxu0 0
      %928 = vmatpush.bf16.msra.mxu0 0
      %929 = vmatpush.bf16.msra.mxu0 %v920
      %930 = vmatmul.bf16.gmra.mxu0 %v917
      %v931 = vpop.f32.mrf.mxu0
      %v932 = vadd.f32 0.0, %v931
      %v933 = vpop.f32.mrf.mxu0
      %934 = vdwg.mxu0
      %v935 = vadd.f32 %v854, %v932
      %936 = vrot.lane.b32.xlu0 %v700, 104
      %v937 = vpop.permute.xlu0 %936
      %938 = vrot.lane.b32.xlu0 %v700, 72
      %v939 = vpop.permute.xlu0 %938
      %v941 = vsel %vm704, %v937, 0
      %v944 = vsel %vm704, %v939, 0
      %946 = vmatpush.bf16.xpose.msra.mxu0 0
      %947 = vmatpush.bf16.xpose.msra.mxu0 0
      %948 = vmatpush.bf16.xpose.msra.mxu0 0
      %949 = vmatpush.bf16.xpose.msra.mxu0 0
      %950 = vmatpush.bf16.xpose.msra.mxu0 0
      %951 = vmatpush.bf16.xpose.msra.mxu0 0
      %952 = vmatpush.bf16.xpose.msra.mxu0 0
      %953 = vmatpush.bf16.xpose.msra.mxu0 %v944
      %954 = vmatmul.bf16.gmra.mxu0 %v941
      %v955 = vpop.f32.mrf.mxu0
      %v956 = vadd.f32 %v698, %v955
      %v957 = vpop.f32.mrf.mxu0
      %958 = vdwg.mxu0
      %v959 = vsel %vm704, %v956, -inf
      %960 = vmax.xlane.f32.xlu0 %v959
      %v961 = vpop.xlane.xlu0 %960
      %v962 = vsub.f32 %v956, %v961
      %v963 = vmul.f32 %v962, 1.442695
      %v964 = vpow.pop %v963
      %v965 = vsel %vm704, %v964, 0.0
      %966 = vadd.xlane.f32.xlu0 %v965
      %v967 = vpop.xlane.xlu0 %966
      %v968 = vrcp.pop %v967
      %v969 = vmul.f32 %v964, %v968
      %v970 = vpack.c.bf16 %v969, %v969
      %971 = vrot.lane.b32.xlu0 %v700, 40
      %v972 = vpop.permute.xlu0 %971
      %v974 = vsel %vm704, %v970, 0
      %v977 = vsel %vm741, %v972, 0
      %979 = vmatpush.bf16.msra.mxu0 0
      %980 = vmatpush.bf16.msra.mxu0 0
      %981 = vmatpush.bf16.msra.mxu0 0
      %982 = vmatpush.bf16.msra.mxu0 0
      %983 = vmatpush.bf16.msra.mxu0 0
      %984 = vmatpush.bf16.msra.mxu0 0
      %985 = vmatpush.bf16.msra.mxu0 0
      %986 = vmatpush.bf16.msra.mxu0 %v977
      %987 = vmatmul.bf16.gmra.mxu0 %v974
      %v988 = vpop.f32.mrf.mxu0
      %v989 = vadd.f32 0.0, %v988
      %v990 = vpop.f32.mrf.mxu0
      %991 = vdwg.mxu0
      %v992 = vpack.c.bf16 %v989, %v989
      %s993 = scalar_lea.vmem %s4, 12
      %v994 = vld [vmem:[%s993] sm:$0xf]
      %v996 = vsel %vm704, %v992, 0
      %v999 = vsel %vm741, %v994, 0
      %1001 = vmatpush.bf16.msra.mxu0 0
      %1002 = vmatpush.bf16.msra.mxu0 0
      %1003 = vmatpush.bf16.msra.mxu0 0
      %1004 = vmatpush.bf16.msra.mxu0 0
      %1005 = vmatpush.bf16.msra.mxu0 0
      %1006 = vmatpush.bf16.msra.mxu0 0
      %1007 = vmatpush.bf16.msra.mxu0 0
      %1008 = vmatpush.bf16.msra.mxu0 %v999
      %1009 = vmatmul.bf16.gmra.mxu0 %v996
      %v1010 = vpop.f32.mrf.mxu0
      %v1011 = vadd.f32 0.0, %v1010
      %v1012 = vpop.f32.mrf.mxu0
      %1013 = vdwg.mxu0
      %v1014 = vadd.f32 %v935, %v1011
      %v1016 = vperm.slane %v699, 0
      %v1018 = vadd.f32 %v1014, %v1016
      %v1019 = vadd.f32 %v1018, %v657
      %v1020 = vld [vmem:[%s6] sm:$0x1]
      %v1021 = vld [vmem:[%s7] sm:$0x1]
      %v1022 = vsel %vm676, %v1019, 0.0
      %1023 = vadd.xlane.f32.xlu0 %v1022
      %v1024 = vpop.xlane.xlu0 %1023
      %v1025 = vrcp.pop 32.0
      %v1026 = vmul.f32 32.0, %v1025
      %v1027 = vsub.f32 1.0, %v1026
      %v1028 = vmul.f32 %v1025, %v1027
      %v1029 = vadd.f32 %v1025, %v1028
      %vm1030 = vweird.f32 %v1025
      %v1031 = vsel %vm1030, %v1025, %v1029
      %v1032 = vmul.f32 %v1024, %v1031
      %v1033 = vsub.f32 %v1019, %v1032
      %v1034 = vmul.f32 %v1033, %v1033
      %v1035 = vsel %vm676, %v1034, 0.0
      %1036 = vadd.xlane.f32.xlu0 %v1035
      %v1037 = vpop.xlane.xlu0 %1036
      %v1038 = vmul.f32 %v1037, %v1031
      %v1039 = vadd.f32 %v1038, 1e-05
      %v1040 = vrsqrt.pop %v1039
      %v1041 = vmul.f32 %v1040, %v1039
      %v1042 = vmul.f32 %v1041, %v1040
      %v1043 = vmul.f32 0.5, %v1042
      %v1044 = vsub.f32 1.5, %v1043
      %v1045 = vmul.f32 %v1040, %v1044
      %vm1046 = vweird.f32 %v1039
      %vm1047 = vweird.f32 %v1040
      %vm1048 = vmor %vm1046, %vm1047
      %v1049 = vsel %vm1048, %v1040, %v1045
      %v1050 = vmul.f32 %v1033, %v1049
      %v1052 = vperm.slane %v1020, 0
      %v1054 = vmul.f32 %v1050, %v1052
      %v1056 = vperm.slane %v1021, 0
      %v1058 = vadd.f32 %v1054, %v1056
      %v1059 = vpack.c.bf16 %v1058, %v1058
      %v1060 = vld [vmem:[%s8] sm:$0xf]
      %v1061 = vld [vmem:[%s8 + $0x4] sm:$0xf]
      %v1062 = vld [vmem:[%s8 + $0x8] sm:$0xf]
      %v1063 = vld [vmem:[%s8 + $0xc] sm:$0xf]
      %v1068 = vunpack.c.l.b16 %v1060
      %v1069 = vunpack.c.l.b16 %v1061
      %v1070 = vunpack.c.l.b16 %v1062
      %v1071 = vunpack.c.l.b16 %v1063
      %v1072 = vpack.c.b16 %v1069, %v1068
      %v1073 = vpack.c.b16 %v1071, %v1070
      %v1077 = vsel %vm676, %v1059, 0
      %1079 = vmatpush.bf16.msra.mxu0 0
      %1080 = vmatpush.bf16.msra.mxu0 0
      %1081 = vmatpush.bf16.msra.mxu0 0
      %1082 = vmatpush.bf16.msra.mxu0 0
      %1083 = vmatpush.bf16.msra.mxu0 0
      %1084 = vmatpush.bf16.msra.mxu0 0
      %1085 = vmatpush.bf16.msra.mxu0 %v1073
      %1086 = vmatpush.bf16.msra.mxu0 %v1072
      %1087 = vmatmul.bf16.gmra.mxu0 %v1077
      %v1088 = vpop.f32.mrf.mxu0
      %v1089 = vadd.f32 0.0, %v1088
      %v1090 = vpop.f32.mrf.mxu0
      %1091 = vdwg.mxu0
      %v1092 = vpack.c.bf16 %v658, %v658
      %v1093 = vld [vmem:[%s9] sm:$0xf]
      %v1094 = vld [vmem:[%s9 + $0x4] sm:$0xf]
      %v1095 = vld [vmem:[%s9 + $0x8] sm:$0xf]
      %v1096 = vld [vmem:[%s9 + $0xc] sm:$0xf]
      %v1101 = vunpack.c.l.b16 %v1093
      %v1102 = vunpack.c.l.b16 %v1094
      %v1103 = vunpack.c.l.b16 %v1095
      %v1104 = vunpack.c.l.b16 %v1096
      %v1105 = vpack.c.b16 %v1102, %v1101
      %v1106 = vpack.c.b16 %v1104, %v1103
      %v1110 = vsel %vm676, %v1092, 0
      %1112 = vmatpush.bf16.msra.mxu0 0
      %1113 = vmatpush.bf16.msra.mxu0 0
      %1114 = vmatpush.bf16.msra.mxu0 0
      %1115 = vmatpush.bf16.msra.mxu0 0
      %1116 = vmatpush.bf16.msra.mxu0 0
      %1117 = vmatpush.bf16.msra.mxu0 0
      %1118 = vmatpush.bf16.msra.mxu0 %v1106
      %1119 = vmatpush.bf16.msra.mxu0 %v1105
      %1120 = vmatmul.bf16.gmra.mxu0 %v1110
      %v1121 = vpop.f32.mrf.mxu0
      %v1122 = vadd.f32 0.0, %v1121
      %v1123 = vpop.f32.mrf.mxu0
      %1124 = vdwg.mxu0
      %v1125 = vld [vmem:[%s651] sm:$0x1]
      %vm1126 = vcmp.eq.f32.partialorder %v1125, 0.0
      %v1127 = vsel %vm1126, -1e+20, 0.0
      %v1128 = vld [vmem:[%s11] sm:$0x1]
      %v1129 = vpack.c.bf16 %v1089, %v1089
      %v1130 = vpack.c.bf16 %v1122, %v1122
      %v1132 = vperm.slane %v1127, 0
      %v1135 = vsel %vm704, %v1129, 0
      %v1138 = vsel %vm704, %v1130, 0
      %1140 = vmatpush.bf16.xpose.msra.mxu0 0
      %1141 = vmatpush.bf16.xpose.msra.mxu0 0
      %1142 = vmatpush.bf16.xpose.msra.mxu0 0
      %1143 = vmatpush.bf16.xpose.msra.mxu0 0
      %1144 = vmatpush.bf16.xpose.msra.mxu0 0
      %1145 = vmatpush.bf16.xpose.msra.mxu0 0
      %1146 = vmatpush.bf16.xpose.msra.mxu0 0
      %1147 = vmatpush.bf16.xpose.msra.mxu0 %v1138
      %1148 = vmatmul.bf16.gmra.mxu0 %v1135
      %v1149 = vpop.f32.mrf.mxu0
      %v1150 = vadd.f32 %v1132, %v1149
      %v1151 = vpop.f32.mrf.mxu0
      %1152 = vdwg.mxu0
      %v1153 = vsel %vm704, %v1150, -inf
      %1154 = vmax.xlane.f32.xlu0 %v1153
      %v1155 = vpop.xlane.xlu0 %1154
      %v1156 = vsub.f32 %v1150, %v1155
      %v1157 = vmul.f32 %v1156, 1.442695
      %v1158 = vpow.pop %v1157
      %v1159 = vsel %vm704, %v1158, 0.0
      %1160 = vadd.xlane.f32.xlu0 %v1159
      %v1161 = vpop.xlane.xlu0 %1160
      %v1162 = vrcp.pop %v1161
      %v1163 = vmul.f32 %v1158, %v1162
      %v1164 = vpack.c.bf16 %v1163, %v1163
      %1166 = vrot.lane.b32.xlu0 %v1130, 96
      %v1167 = vpop.permute.xlu0 %1166
      %v1169 = vsel %vm704, %v1164, 0
      %v1172 = vsel %vm741, %v1167, 0
      %1174 = vmatpush.bf16.msra.mxu0 0
      %1175 = vmatpush.bf16.msra.mxu0 0
      %1176 = vmatpush.bf16.msra.mxu0 0
      %1177 = vmatpush.bf16.msra.mxu0 0
      %1178 = vmatpush.bf16.msra.mxu0 0
      %1179 = vmatpush.bf16.msra.mxu0 0
      %1180 = vmatpush.bf16.msra.mxu0 0
      %1181 = vmatpush.bf16.msra.mxu0 %v1172
      %1182 = vmatmul.bf16.gmra.mxu0 %v1169
      %v1183 = vpop.f32.mrf.mxu0
      %v1184 = vadd.f32 0.0, %v1183
      %v1185 = vpop.f32.mrf.mxu0
      %1186 = vdwg.mxu0
      %v1187 = vpack.c.bf16 %v1184, %v1184
      %v1188 = vld [vmem:[%s10] sm:$0xf]
      %1190 = vrot.lane.b32.xlu0 %v1129, 120
      %v1191 = vpop.permute.xlu0 %1190
      %1192 = vrot.lane.b32.xlu0 %v1130, 120
      %v1193 = vpop.permute.xlu0 %1192
      %v1195 = vsel %vm704, %v1191, 0
      %v1198 = vsel %vm704, %v1193, 0
      %1200 = vmatpush.bf16.xpose.msra.mxu0 0
      %1201 = vmatpush.bf16.xpose.msra.mxu0 0
      %1202 = vmatpush.bf16.xpose.msra.mxu0 0
      %1203 = vmatpush.bf16.xpose.msra.mxu0 0
      %1204 = vmatpush.bf16.xpose.msra.mxu0 0
      %1205 = vmatpush.bf16.xpose.msra.mxu0 0
      %1206 = vmatpush.bf16.xpose.msra.mxu0 0
      %1207 = vmatpush.bf16.xpose.msra.mxu0 %v1198
      %1208 = vmatmul.bf16.gmra.mxu0 %v1195
      %v1209 = vpop.f32.mrf.mxu0
      %v1210 = vadd.f32 %v1132, %v1209
      %v1211 = vpop.f32.mrf.mxu0
      %1212 = vdwg.mxu0
      %v1213 = vsel %vm704, %v1210, -inf
      %1214 = vmax.xlane.f32.xlu0 %v1213
      %v1215 = vpop.xlane.xlu0 %1214
      %v1216 = vsub.f32 %v1210, %v1215
      %v1217 = vmul.f32 %v1216, 1.442695
      %v1218 = vpow.pop %v1217
      %v1219 = vsel %vm704, %v1218, 0.0
      %1220 = vadd.xlane.f32.xlu0 %v1219
      %v1221 = vpop.xlane.xlu0 %1220
      %v1222 = vrcp.pop %v1221
      %v1223 = vmul.f32 %v1218, %v1222
      %v1224 = vpack.c.bf16 %v1223, %v1223
      %1225 = vrot.lane.b32.xlu0 %v1130, 88
      %v1226 = vpop.permute.xlu0 %1225
      %v1228 = vsel %vm704, %v1224, 0
      %v1231 = vsel %vm741, %v1226, 0
      %1233 = vmatpush.bf16.msra.mxu0 0
      %1234 = vmatpush.bf16.msra.mxu0 0
      %1235 = vmatpush.bf16.msra.mxu0 0
      %1236 = vmatpush.bf16.msra.mxu0 0
      %1237 = vmatpush.bf16.msra.mxu0 0
      %1238 = vmatpush.bf16.msra.mxu0 0
      %1239 = vmatpush.bf16.msra.mxu0 0
      %1240 = vmatpush.bf16.msra.mxu0 %v1231
      %1241 = vmatmul.bf16.gmra.mxu0 %v1228
      %v1242 = vpop.f32.mrf.mxu0
      %v1243 = vadd.f32 0.0, %v1242
      %v1244 = vpop.f32.mrf.mxu0
      %1245 = vdwg.mxu0
      %v1246 = vpack.c.bf16 %v1243, %v1243
      %s1247 = scalar_lea.vmem %s10, 4
      %v1248 = vld [vmem:[%s1247] sm:$0xf]
      %v1250 = vsel %vm704, %v1246, 0
      %v1253 = vsel %vm741, %v1248, 0
      %1255 = vmatpush.bf16.msra.mxu0 0
      %1256 = vmatpush.bf16.msra.mxu0 0
      %1257 = vmatpush.bf16.msra.mxu0 0
      %1258 = vmatpush.bf16.msra.mxu0 0
      %1259 = vmatpush.bf16.msra.mxu0 0
      %1260 = vmatpush.bf16.msra.mxu0 0
      %1261 = vmatpush.bf16.msra.mxu0 0
      %1262 = vmatpush.bf16.msra.mxu0 %v1253
      %1263 = vmatmul.bf16.gmra.mxu0 %v1250
      %v1264 = vpop.f32.mrf.mxu0
      %v1265 = vadd.f32 0.0, %v1264
      %v1266 = vpop.f32.mrf.mxu0
      %1267 = vdwg.mxu0
      %v1269 = vsel %vm704, %v1187, 0
      %v1272 = vsel %vm741, %v1188, 0
      %1274 = vmatpush.bf16.msra.mxu0 0
      %1275 = vmatpush.bf16.msra.mxu0 0
      %1276 = vmatpush.bf16.msra.mxu0 0
      %1277 = vmatpush.bf16.msra.mxu0 0
      %1278 = vmatpush.bf16.msra.mxu0 0
      %1279 = vmatpush.bf16.msra.mxu0 0
      %1280 = vmatpush.bf16.msra.mxu0 0
      %1281 = vmatpush.bf16.msra.mxu0 %v1272
      %1282 = vmatmul.bf16.gmra.mxu0 %v1269
      %v1283 = vpop.f32.mrf.mxu0
      %v1284 = vadd.f32 %v1265, %v1283
      %v1285 = vpop.f32.mrf.mxu0
      %1286 = vdwg.mxu0
      %1287 = vrot.lane.b32.xlu0 %v1129, 112
      %v1288 = vpop.permute.xlu0 %1287
      %1289 = vrot.lane.b32.xlu0 %v1130, 112
      %v1290 = vpop.permute.xlu0 %1289
      %v1292 = vsel %vm704, %v1288, 0
      %v1295 = vsel %vm704, %v1290, 0
      %1297 = vmatpush.bf16.xpose.msra.mxu0 0
      %1298 = vmatpush.bf16.xpose.msra.mxu0 0
      %1299 = vmatpush.bf16.xpose.msra.mxu0 0
      %1300 = vmatpush.bf16.xpose.msra.mxu0 0
      %1301 = vmatpush.bf16.xpose.msra.mxu0 0
      %1302 = vmatpush.bf16.xpose.msra.mxu0 0
      %1303 = vmatpush.bf16.xpose.msra.mxu0 0
      %1304 = vmatpush.bf16.xpose.msra.mxu0 %v1295
      %1305 = vmatmul.bf16.gmra.mxu0 %v1292
      %v1306 = vpop.f32.mrf.mxu0
      %v1307 = vadd.f32 %v1132, %v1306
      %v1308 = vpop.f32.mrf.mxu0
      %1309 = vdwg.mxu0
      %v1310 = vsel %vm704, %v1307, -inf
      %1311 = vmax.xlane.f32.xlu0 %v1310
      %v1312 = vpop.xlane.xlu0 %1311
      %v1313 = vsub.f32 %v1307, %v1312
      %v1314 = vmul.f32 %v1313, 1.442695
      %v1315 = vpow.pop %v1314
      %v1316 = vsel %vm704, %v1315, 0.0
      %1317 = vadd.xlane.f32.xlu0 %v1316
      %v1318 = vpop.xlane.xlu0 %1317
      %v1319 = vrcp.pop %v1318
      %v1320 = vmul.f32 %v1315, %v1319
      %v1321 = vpack.c.bf16 %v1320, %v1320
      %1322 = vrot.lane.b32.xlu0 %v1130, 80
      %v1323 = vpop.permute.xlu0 %1322
      %v1325 = vsel %vm704, %v1321, 0
      %v1328 = vsel %vm741, %v1323, 0
      %1330 = vmatpush.bf16.msra.mxu0 0
      %1331 = vmatpush.bf16.msra.mxu0 0
      %1332 = vmatpush.bf16.msra.mxu0 0
      %1333 = vmatpush.bf16.msra.mxu0 0
      %1334 = vmatpush.bf16.msra.mxu0 0
      %1335 = vmatpush.bf16.msra.mxu0 0
      %1336 = vmatpush.bf16.msra.mxu0 0
      %1337 = vmatpush.bf16.msra.mxu0 %v1328
      %1338 = vmatmul.bf16.gmra.mxu0 %v1325
      %v1339 = vpop.f32.mrf.mxu0
      %v1340 = vadd.f32 0.0, %v1339
      %v1341 = vpop.f32.mrf.mxu0
      %1342 = vdwg.mxu0
      %v1343 = vpack.c.bf16 %v1340, %v1340
      %s1344 = scalar_lea.vmem %s10, 8
      %v1345 = vld [vmem:[%s1344] sm:$0xf]
      %v1347 = vsel %vm704, %v1343, 0
      %v1350 = vsel %vm741, %v1345, 0
      %1352 = vmatpush.bf16.msra.mxu0 0
      %1353 = vmatpush.bf16.msra.mxu0 0
      %1354 = vmatpush.bf16.msra.mxu0 0
      %1355 = vmatpush.bf16.msra.mxu0 0
      %1356 = vmatpush.bf16.msra.mxu0 0
      %1357 = vmatpush.bf16.msra.mxu0 0
      %1358 = vmatpush.bf16.msra.mxu0 0
      %1359 = vmatpush.bf16.msra.mxu0 %v1350
      %1360 = vmatmul.bf16.gmra.mxu0 %v1347
      %v1361 = vpop.f32.mrf.mxu0
      %v1362 = vadd.f32 0.0, %v1361
      %v1363 = vpop.f32.mrf.mxu0
      %1364 = vdwg.mxu0
      %v1365 = vadd.f32 %v1284, %v1362
      %1366 = vrot.lane.b32.xlu0 %v1129, 104
      %v1367 = vpop.permute.xlu0 %1366
      %1368 = vrot.lane.b32.xlu0 %v1130, 104
      %v1369 = vpop.permute.xlu0 %1368
      %v1371 = vsel %vm704, %v1367, 0
      %v1374 = vsel %vm704, %v1369, 0
      %1376 = vmatpush.bf16.xpose.msra.mxu0 0
      %1377 = vmatpush.bf16.xpose.msra.mxu0 0
      %1378 = vmatpush.bf16.xpose.msra.mxu0 0
      %1379 = vmatpush.bf16.xpose.msra.mxu0 0
      %1380 = vmatpush.bf16.xpose.msra.mxu0 0
      %1381 = vmatpush.bf16.xpose.msra.mxu0 0
      %1382 = vmatpush.bf16.xpose.msra.mxu0 0
      %1383 = vmatpush.bf16.xpose.msra.mxu0 %v1374
      %1384 = vmatmul.bf16.gmra.mxu0 %v1371
      %v1385 = vpop.f32.mrf.mxu0
      %v1386 = vadd.f32 %v1132, %v1385
      %v1387 = vpop.f32.mrf.mxu0
      %1388 = vdwg.mxu0
      %v1389 = vsel %vm704, %v1386, -inf
      %1390 = vmax.xlane.f32.xlu0 %v1389
      %v1391 = vpop.xlane.xlu0 %1390
      %v1392 = vsub.f32 %v1386, %v1391
      %v1393 = vmul.f32 %v1392, 1.442695
      %v1394 = vpow.pop %v1393
      %v1395 = vsel %vm704, %v1394, 0.0
      %1396 = vadd.xlane.f32.xlu0 %v1395
      %v1397 = vpop.xlane.xlu0 %1396
      %v1398 = vrcp.pop %v1397
      %v1399 = vmul.f32 %v1394, %v1398
      %v1400 = vpack.c.bf16 %v1399, %v1399
      %1401 = vrot.lane.b32.xlu0 %v1130, 72
      %v1402 = vpop.permute.xlu0 %1401
      %v1404 = vsel %vm704, %v1400, 0
      %v1407 = vsel %vm741, %v1402, 0
      %1409 = vmatpush.bf16.msra.mxu0 0
      %1410 = vmatpush.bf16.msra.mxu0 0
      %1411 = vmatpush.bf16.msra.mxu0 0
      %1412 = vmatpush.bf16.msra.mxu0 0
      %1413 = vmatpush.bf16.msra.mxu0 0
      %1414 = vmatpush.bf16.msra.mxu0 0
      %1415 = vmatpush.bf16.msra.mxu0 0
      %1416 = vmatpush.bf16.msra.mxu0 %v1407
      %1417 = vmatmul.bf16.gmra.mxu0 %v1404
      %v1418 = vpop.f32.mrf.mxu0
      %v1419 = vadd.f32 0.0, %v1418
      %v1420 = vpop.f32.mrf.mxu0
      %1421 = vdwg.mxu0
      %v1422 = vpack.c.bf16 %v1419, %v1419
      %s1423 = scalar_lea.vmem %s10, 12
      %v1424 = vld [vmem:[%s1423] sm:$0xf]
      %v1426 = vsel %vm704, %v1422, 0
      %v1429 = vsel %vm741, %v1424, 0
      %1431 = vmatpush.bf16.msra.mxu0 0
      %1432 = vmatpush.bf16.msra.mxu0 0
      %1433 = vmatpush.bf16.msra.mxu0 0
      %1434 = vmatpush.bf16.msra.mxu0 0
      %1435 = vmatpush.bf16.msra.mxu0 0
      %1436 = vmatpush.bf16.msra.mxu0 0
      %1437 = vmatpush.bf16.msra.mxu0 0
      %1438 = vmatpush.bf16.msra.mxu0 %v1429
      %1439 = vmatmul.bf16.gmra.mxu0 %v1426
      %v1440 = vpop.f32.mrf.mxu0
      %v1441 = vadd.f32 0.0, %v1440
      %v1442 = vpop.f32.mrf.mxu0
      %1443 = vdwg.mxu0
      %v1444 = vadd.f32 %v1365, %v1441
      %v1446 = vperm.slane %v1128, 0
      %v1448 = vadd.f32 %v1444, %v1446
      %v1449 = vadd.f32 %v1448, %v1058
      %v1450 = vld [vmem:[%s12] sm:$0x1]
      %v1451 = vld [vmem:[%s13] sm:$0x1]
      %v1452 = vsel %vm676, %v1449, 0.0
      %1453 = vadd.xlane.f32.xlu0 %v1452
      %v1454 = vpop.xlane.xlu0 %1453
      %v1455 = vmul.f32 %v1454, %v1031
      %v1456 = vsub.f32 %v1449, %v1455
      %v1457 = vmul.f32 %v1456, %v1456
      %v1458 = vsel %vm676, %v1457, 0.0
      %1459 = vadd.xlane.f32.xlu0 %v1458
      %v1460 = vpop.xlane.xlu0 %1459
      %v1461 = vmul.f32 %v1460, %v1031
      %v1462 = vadd.f32 %v1461, 1e-05
      %v1463 = vrsqrt.pop %v1462
      %v1464 = vmul.f32 %v1463, %v1462
      %v1465 = vmul.f32 %v1464, %v1463
      %v1466 = vmul.f32 0.5, %v1465
      %v1467 = vsub.f32 1.5, %v1466
      %v1468 = vmul.f32 %v1463, %v1467
      %vm1469 = vweird.f32 %v1462
      %vm1470 = vweird.f32 %v1463
      %vm1471 = vmor %vm1469, %vm1470
      %v1472 = vsel %vm1471, %v1463, %v1468
      %v1473 = vmul.f32 %v1456, %v1472
      %v1475 = vperm.slane %v1450, 0
      %v1477 = vmul.f32 %v1473, %v1475
      %v1479 = vperm.slane %v1451, 0
      %v1481 = vadd.f32 %v1477, %v1479
      %v1482 = vld [vmem:[%s15] sm:$0x1]
      %v1483 = vld [vmem:[%s17] sm:$0x1]
      %v1484 = vpack.c.bf16 %v1481, %v1481
      %v1485 = vld [vmem:[%s14] sm:$0xf]
      %v1486 = vld [vmem:[%s14 + $0x4] sm:$0xf]
      %v1487 = vld [vmem:[%s14 + $0x8] sm:$0xf]
      %v1488 = vld [vmem:[%s14 + $0xc] sm:$0xf]
      %v1490 = vperm.slane %v1482, 0
      %v1496 = vunpack.c.l.b16 %v1485
      %v1497 = vunpack.c.l.b16 %v1486
      %v1498 = vunpack.c.l.b16 %v1487
      %v1499 = vunpack.c.l.b16 %v1488
      %v1500 = vpack.c.b16 %v1497, %v1496
      %v1501 = vpack.c.b16 %v1499, %v1498
      %v1505 = vsel %vm676, %v1484, 0
      %1507 = vmatpush.bf16.msra.mxu0 0
      %1508 = vmatpush.bf16.msra.mxu0 0
      %1509 = vmatpush.bf16.msra.mxu0 0
      %1510 = vmatpush.bf16.msra.mxu0 0
      %1511 = vmatpush.bf16.msra.mxu0 0
      %1512 = vmatpush.bf16.msra.mxu0 0
      %1513 = vmatpush.bf16.msra.mxu0 %v1501
      %1514 = vmatpush.bf16.msra.mxu0 %v1500
      %1515 = vmatmul.bf16.gmra.mxu0 %v1505
      %v1516 = vpop.f32.mrf.mxu0
      %v1517 = vadd.f32 %v1490, %v1516
      %v1518 = vpop.f32.mrf.mxu0
      %1519 = vdwg.mxu0
      %v1520 = vmax.f32 %v1517, 0.0
      %v1521 = vpack.c.bf16 %v1520, %v1520
      %v1522 = vld [vmem:[%s16] sm:$0xf]
      %v1523 = vld [vmem:[%s16 + $0x4] sm:$0xf]
      %v1524 = vld [vmem:[%s16 + $0x8] sm:$0xf]
      %v1525 = vld [vmem:[%s16 + $0xc] sm:$0xf]
      %v1526 = vld [vmem:[%s16 + $0x10] sm:$0xf]
      %v1527 = vld [vmem:[%s16 + $0x14] sm:$0xf]
      %v1528 = vld [vmem:[%s16 + $0x18] sm:$0xf]
      %v1529 = vld [vmem:[%s16 + $0x1c] sm:$0xf]
      %v1530 = vld [vmem:[%s16 + $0x20] sm:$0xf]
      %v1531 = vld [vmem:[%s16 + $0x24] sm:$0xf]
      %v1532 = vld [vmem:[%s16 + $0x28] sm:$0xf]
      %v1533 = vld [vmem:[%s16 + $0x2c] sm:$0xf]
      %v1534 = vld [vmem:[%s16 + $0x30] sm:$0xf]
      %v1535 = vld [vmem:[%s16 + $0x34] sm:$0xf]
      %v1536 = vld [vmem:[%s16 + $0x38] sm:$0xf]
      %v1537 = vld [vmem:[%s16 + $0x3c] sm:$0xf]
      %v1539 = vperm.slane %v1483, 0
      %v1557 = vunpack.c.l.b16 %v1522
      %v1558 = vunpack.c.l.b16 %v1523
      %v1559 = vunpack.c.l.b16 %v1524
      %v1560 = vunpack.c.l.b16 %v1525
      %v1561 = vunpack.c.l.b16 %v1526
      %v1562 = vunpack.c.l.b16 %v1527
      %v1563 = vunpack.c.l.b16 %v1528
      %v1564 = vunpack.c.l.b16 %v1529
      %v1565 = vunpack.c.l.b16 %v1530
      %v1566 = vunpack.c.l.b16 %v1531
      %v1567 = vunpack.c.l.b16 %v1532
      %v1568 = vunpack.c.l.b16 %v1533
      %v1569 = vunpack.c.l.b16 %v1534
      %v1570 = vunpack.c.l.b16 %v1535
      %v1571 = vunpack.c.l.b16 %v1536
      %v1572 = vunpack.c.l.b16 %v1537
      %v1573 = vpack.c.b16 %v1558, %v1557
      %v1574 = vpack.c.b16 %v1560, %v1559
      %v1575 = vpack.c.b16 %v1562, %v1561
      %v1576 = vpack.c.b16 %v1564, %v1563
      %v1577 = vpack.c.b16 %v1566, %v1565
      %v1578 = vpack.c.b16 %v1568, %v1567
      %v1579 = vpack.c.b16 %v1570, %v1569
      %v1580 = vpack.c.b16 %v1572, %v1571
      %1589 = vmatpush.bf16.msra.mxu0 %v1580
      %1590 = vmatpush.bf16.msra.mxu0 %v1579
      %1591 = vmatpush.bf16.msra.mxu0 %v1578
      %1592 = vmatpush.bf16.msra.mxu0 %v1577
      %1593 = vmatpush.bf16.msra.mxu0 %v1576
      %1594 = vmatpush.bf16.msra.mxu0 %v1575
      %1595 = vmatpush.bf16.msra.mxu0 %v1574
      %1596 = vmatpush.bf16.msra.mxu0 %v1573
      %1597 = vmatmul.bf16.gmra.mxu0 %v1521
      %v1598 = vpop.f32.mrf.mxu0
      %v1599 = vadd.f32 %v1539, %v1598
      %v1600 = vpop.f32.mrf.mxu0
      %1601 = vdwg.mxu0
      %v1602 = vadd.f32 %v1599, %v1481
      %v1603 = vld [vmem:[%s18] sm:$0x1]
      %v1604 = vld [vmem:[%s19] sm:$0x1]
      %v1605 = vsel %vm676, %v1602, 0.0
      %1606 = vadd.xlane.f32.xlu0 %v1605
      %v1607 = vpop.xlane.xlu0 %1606
      %v1608 = vmul.f32 %v1607, %v1031
      %v1609 = vsub.f32 %v1602, %v1608
      %v1610 = vmul.f32 %v1609, %v1609
      %v1611 = vsel %vm676, %v1610, 0.0
      %1612 = vadd.xlane.f32.xlu0 %v1611
      %v1613 = vpop.xlane.xlu0 %1612
      %v1614 = vmul.f32 %v1613, %v1031
      %v1615 = vadd.f32 %v1614, 1e-05
      %v1616 = vrsqrt.pop %v1615
      %v1617 = vmul.f32 %v1616, %v1615
      %v1618 = vmul.f32 %v1617, %v1616
      %v1619 = vmul.f32 0.5, %v1618
      %v1620 = vsub.f32 1.5, %v1619
      %v1621 = vmul.f32 %v1616, %v1620
      %vm1622 = vweird.f32 %v1615
      %vm1623 = vweird.f32 %v1616
      %vm1624 = vmor %vm1622, %vm1623
      %v1625 = vsel %vm1624, %v1616, %v1621
      %v1626 = vmul.f32 %v1609, %v1625
      %v1628 = vperm.slane %v1603, 0
      %v1630 = vmul.f32 %v1626, %v1628
      %v1632 = vperm.slane %v1604, 0
      %v1634 = vadd.f32 %v1630, %v1632
      %1635 = vst.msk [vmem:[%s655] sm:$0xff] %vm676, %v1634
      %p1636 = scmp.lt.s32.totalorder %s31, 1
      %s1637 = scalar_select %p1636, %s31, 1
      %s1638 = smul.addr %s1637, 8
      %s1639 = scalar_lea.vmem %s20, %s1638
      // Predicated region
      $region101: #{_lambda_.7} parent=99 // pred_check
        %p1640 = pneg %p484
      $region102: #{_lambda_.7} parent=99 // pred_check_branch
        %1642 = sbr.rel (%p1640) target = $region104
      $region103: #{_lambda_.7} parent=99 // pred_region
        _
      $region104: #{_lambda_.7} parent=99 // pred_fallthru
        _
    $region100: #{_lambda_.7} parent=5 // pred_fallthru
      _
    %p1643 = scmp.le.s32.totalorder 2, %s26
    // Predicated region
    $region105: #{_lambda_.7} parent=5 // pred_check
      %p1644 = pneg %p1643
    $region106: #{_lambda_.7} parent=5 // pred_check_branch
      %1646 = sbr.rel (%p1644) target = $region108
    $region107: #{_lambda_.7} parent=5 // pred_region
      %s1647 = ssub.s32 %s26, 2
      // Predicated region
      $region109: #{_lambda_.7} parent=107 // pred_check
        %p1648 = pneg %p490
      $region110: #{_lambda_.7} parent=107 // pred_check_branch
        %1650 = sbr.rel (%p1648) target = $region112
      $region111: #{_lambda_.7} parent=107 // pred_region
        %p1651 = scmp.lt.s32.totalorder %s32, 1
        %s1652 = scalar_select %p1651, %s32, 1
        %s1653 = smul.addr %s1652, 8
        %s1654 = scalar_lea.vmem %s20, %s1653
      $region112: #{_lambda_.7} parent=107 // pred_fallthru
        _
    $region108: #{_lambda_.7} parent=5 // pred_fallthru
      _
  $region6: #{_lambda_.7} parent=0 // loop_footer
    %s30 = sadd.s32 1, %s26
  $region7: #{_lambda_.7} parent=0 // loop_footer_branch
    %25 = sbr.rel target = $region3
  $region8: #{_lambda_.7} parent=0 // loop_exit
    _

</llo_original>
